<compile_context>
chip_gen: v6e
topology: v6e:2x2x1
jax: 0.10.0
libtpu: 0.0.40
codegen_flags: <defaults>
</compile_context>

<pallas_src>
import math
import functools

import jax
import jax.numpy as jnp
from jax import lax
from jax.experimental import pallas as pl
from jax.experimental.pallas import tpu as pltpu

NEG_INF = -1000000.0  # matches masked_softmax's -1e6 fill
LN_EPS = 1e-5         # nn.LayerNorm default


def _layer_norm(z, gamma, beta):
    mu = jnp.mean(z, axis=-1, keepdims=True)
    var = jnp.mean((z - mu) ** 2, axis=-1, keepdims=True)
    return (z - mu) * lax.rsqrt(var + LN_EPS) * gamma + beta


def _softmax_lastdim(s):
    m = jnp.max(s, axis=-1, keepdims=True)
    p = jnp.exp(s - m)
    denom = jnp.sum(p, axis=-1, keepdims=True)
    return p * pl.reciprocal(denom, approx=True)


def decoder_block_kernel(
    num_heads, causal,
    enc_valid_ref,                       # SMEM [B] int32 (scalar prefetch)
    x_ref, kv_ref, enc_ref,              # (S,H) f32, (Sk,H) bf16, (Se,H) bf16
    wq1_ref, wkv1_ref, wo1_ref,          # (H,H), (H,2H), (H,H) bf16 (wq pre-scaled)
    wq2_ref, wkv2_ref, wo2_ref,          # (H,H), (H,2H), (H,H) bf16 (wq pre-scaled)
    ln_g_ref, ln_b_ref,                  # (3,H) f32 : layernorm 1/2/3
    w1_ref, b1_ref, w2_ref, b2_ref,      # (H,FH) bf16, (1,FH) f32, (FH,H) bf16, (1,H) f32
    out_ref,                             # (S,H) f32
):
    b = pl.program_id(0)
    NH = num_heads
    x = x_ref[...]                       # [S, H] f32 (residual path)
    kv_bf = kv_ref[...]                  # [Sk, H] bf16
    enc_bf = enc_ref[...]                # [Se, H] bf16
    S, H = x.shape
    Sk = kv_bf.shape[0]
    Se = enc_bf.shape[0]
    d = H // NH

    def to_heads(z2d):                   # [L, H] bf16 -> [NH, L, d] bf16
        return jnp.stack([z2d[:, h * d:(h + 1) * d] for h in range(NH)], axis=0)

    def mha(q_in_bf, kv_in_bf, wq_ref, wkv_ref, wo_ref, mask):
        # Full-width projections: N = H (Q) / 2H (fused K,V) -> full MXU lanes.
        q = jnp.dot(q_in_bf, wq_ref[...], preferred_element_type=jnp.float32)
        kvp = jnp.dot(kv_in_bf, wkv_ref[...], preferred_element_type=jnp.float32)
        qh = to_heads(q.astype(jnp.bfloat16))             # [NH, Lq, d]
        kh = to_heads(kvp[:, :H].astype(jnp.bfloat16))    # [NH, Lk, d]
        vh = to_heads(kvp[:, H:].astype(jnp.bfloat16))    # [NH, Lk, d]
        # 1/sqrt(d) already folded into wq.
        s = jnp.einsum('hqd,hkd->hqk', qh, kh,
                       preferred_element_type=jnp.float32)  # [NH, Lq, Lk] f32
        if mask is not None:
            s = jnp.where(mask[None, :, :], s, NEG_INF)
        p = _softmax_lastdim(s).astype(jnp.bfloat16)
        # TODO(synk): attention dropout treated as identity (p=0).
        o = jnp.einsum('hqk,hkd->hqd', p, vh,
                       preferred_element_type=jnp.float32)  # [NH, Lq, d]
        # Re-assemble heads on the lane dim and let the MXU do the head
        # reduction (K = H) in the output projection.
        o2d = jnp.concatenate([o[h] for h in range(NH)], axis=-1)  # [Lq, H]
        return jnp.dot(o2d.astype(jnp.bfloat16), wo_ref[...],
                       preferred_element_type=jnp.float32)

    # Masks built once per grid step.
    if causal:
        # dec_valid_lens = arange(1, S+1): key j valid iff j <= query row i.
        row = lax.broadcasted_iota(jnp.int32, (S, Sk), 0)
        col = lax.broadcasted_iota(jnp.int32, (S, Sk), 1)
        self_mask = col <= row
    else:
        self_mask = None
    enc_col = lax.broadcasted_iota(jnp.int32, (S, Se), 1)
    cross_mask = enc_col < enc_valid_ref[b]

    # ---- masked self-attention + Add&Norm ----
    y1 = mha(x.astype(jnp.bfloat16), kv_bf, wq1_ref, wkv1_ref, wo1_ref, self_mask)
    # TODO(synk): residual dropout treated as identity (p=0).
    x1 = _layer_norm(x + y1, ln_g_ref[0, :], ln_b_ref[0, :])

    # ---- cross-attention (masked by enc_valid_lens) + Add&Norm ----
    y2 = mha(x1.astype(jnp.bfloat16), enc_bf, wq2_ref, wkv2_ref, wo2_ref, cross_mask)
    x2 = _layer_norm(x1 + y2, ln_g_ref[1, :], ln_b_ref[1, :])

    # ---- position-wise FFN + Add&Norm ----
    # TODO(synk): for large FH (e.g. >=4096 on v7x 64MiB VMEM) tile w1/w2 over a
    # reduction grid axis instead of keeping them fully VMEM-resident.
    h = jnp.dot(x2.astype(jnp.bfloat16), w1_ref[...],
                preferred_element_type=jnp.float32) + b1_ref[...]
    h = jnp.maximum(h, 0.0)
    y3 = jnp.dot(h.astype(jnp.bfloat16), w2_ref[...],
                 preferred_element_type=jnp.float32) + b2_ref[...]
    out_ref[...] = _layer_norm(x2 + y3, ln_g_ref[2, :], ln_b_ref[2, :])


def _prep_params(params, num_heads):
    """Reshape/cast/fuse weights outside the kernel (free XLA ops)."""
    H = params["wq1"].shape[0]
    d = H // num_heads
    scale = 1.0 / math.sqrt(d)
    bf = lambda w: w.astype(jnp.bfloat16)

    return dict(
        wq1=bf(params["wq1"] * scale),
        wkv1=bf(jnp.concatenate([params["wk1"], params["wv1"]], axis=1)),
        wo1=bf(params["wo1"]),
        wq2=bf(params["wq2"] * scale),
        wkv2=bf(jnp.concatenate([params["wk2"], params["wv2"]], axis=1)),
        wo2=bf(params["wo2"]),
        ln_gamma=params["ln_gamma"].astype(jnp.float32),
        ln_beta=params["ln_beta"].astype(jnp.float32),
        ffn_w1=bf(params["ffn_w1"]), ffn_b1=params["ffn_b1"].astype(jnp.float32),
        ffn_w2=bf(params["ffn_w2"]), ffn_b2=params["ffn_b2"].astype(jnp.float32),
    )


def decoder_block_forward(X, state, params, num_heads, index=0, training=True):
    """Mirrors DecoderBlock.forward. Returns (output, new_state)."""
    enc_outputs, enc_valid_lens, dec_cache = state
    if dec_cache[index] is None:
        key_values = X
    else:
        key_values = jnp.concatenate([dec_cache[index], X], axis=1)
    new_cache = list(dec_cache)
    new_cache[index] = key_values

    B, S, H = X.shape
    Sk = key_values.shape[1]
    Se = enc_outputs.shape[1]
    FH = params["ffn_w1"].shape[1]
    p = _prep_params(params, num_heads)

    # Fold batch into rows (free row-major reshape); block out one batch per
    # grid step.  kv/enc only feed K/V projections -> ship them as bf16.
    x2d = X.reshape(B * S, H).astype(jnp.float32)
    kv2d = key_values.reshape(B * Sk, H).astype(jnp.bfloat16)
    enc2d = enc_outputs.reshape(B * Se, H).astype(jnp.bfloat16)

    def full(shape):
        return pl.BlockSpec(shape, lambda b, vl, _s=shape: (0,) * len(_s))

    grid_spec = pltpu.PrefetchScalarGridSpec(
        num_scalar_prefetch=1,
        grid=(B,),
        in_specs=[
            pl.BlockSpec((S, H), lambda b, vl: (b, 0)),
            pl.BlockSpec((Sk, H), lambda b, vl: (b, 0)),
            pl.BlockSpec((Se, H), lambda b, vl: (b, 0)),
            full((H, H)), full((H, 2 * H)), full((H, H)),
            full((H, H)), full((H, 2 * H)), full((H, H)),
            full((3, H)), full((3, H)),
            full((H, FH)), full((1, FH)), full((FH, H)), full((1, H)),
        ],
        out_specs=pl.BlockSpec((S, H), lambda b, vl: (b, 0)),
    )

    kernel = functools.partial(decoder_block_kernel, num_heads, bool(training))
    out2d = pl.pallas_call(
        kernel,
        out_shape=jax.ShapeDtypeStruct((B * S, H), jnp.float32),
        grid_spec=grid_spec,
        compiler_params=pltpu.CompilerParams(
            dimension_semantics=("parallel",)),
    )(
        enc_valid_lens.astype(jnp.int32),
        x2d, kv2d, enc2d,
        p["wq1"], p["wkv1"], p["wo1"],
        p["wq2"], p["wkv2"], p["wo2"],
        p["ln_gamma"], p["ln_beta"],
        p["ffn_w1"], p["ffn_b1"], p["ffn_w2"], p["ffn_b2"],
    )
    return out2d.reshape(B, S, H), (enc_outputs, enc_valid_lens, new_cache)


def reference_forward(X, state, params, num_heads, index=0, training=True):
    """Pure-JAX f32 reference replicating the PyTorch semantics (dropout p=0)."""
    enc_outputs, enc_valid_lens, dec_cache = state
    key_values = X if dec_cache[index] is None else jnp.concatenate(
        [dec_cache[index], X], axis=1)
    B, S, H = X.shape
    d = H // num_heads

    def mha(qin, kvin, wq, wk, wv, wo, mask):
        split = lambda z: z.reshape(B, -1, num_heads, d).transpose(0, 2, 1, 3)
        q, k, v = split(qin @ wq), split(kvin @ wk), split(kvin @ wv)
        s = jnp.einsum("bhqd,bhkd->bhqk", q, k) / math.sqrt(d)
        if mask is not None:
            s = jnp.where(mask[:, None], s, NEG_INF)
        p = jax.nn.softmax(s, axis=-1)
        o = jnp.einsum("bhqk,bhkd->bhqd", p, v)
        return o.transpose(0, 2, 1, 3).reshape(B, S, H) @ wo

    Sk = key_values.shape[1]
    if training:
        m1 = jnp.broadcast_to(
            jnp.arange(Sk)[None, :] <= jnp.arange(S)[:, None], (B, S, Sk))
    else:
        m1 = None
    y = mha(X, key_values, params["wq1"], params["wk1"], params["wv1"],
            params["wo1"], m1)
    x1 = _layer_norm(X + y, params["ln_gamma"][0], params["ln_beta"][0])

    Se = enc_outputs.shape[1]
    m2 = jnp.broadcast_to(
        jnp.arange(Se)[None, None, :] < enc_valid_lens[:, None, None], (B, S, Se))
    y = mha(x1, enc_outputs, params["wq2"], params["wk2"], params["wv2"],
            params["wo2"], m2)
    x2 = _layer_norm(x1 + y, params["ln_gamma"][1], params["ln_beta"][1])

    h = jax.nn.relu(x2 @ params["ffn_w1"] + params["ffn_b1"][0])
    y = h @ params["ffn_w2"] + params["ffn_b2"][0]
    return _layer_norm(x2 + y, params["ln_gamma"][2], params["ln_beta"][2])


if __name__ == "__main__":
    # Small but lane-dense shapes: H = 128 (multiple of 128 lanes), 4 heads.
    B, S, Se, H, NH, FH = 2, 8, 8, 128, 4, 256

    key = jax.random.PRNGKey(0)
    keys = jax.random.split(key, 16)
    w = lambda k, shape, scale=0.1: (scale * jax.random.normal(k, shape)).astype(jnp.float32)

    params = {
        "wq1": w(keys[0], (H, H)), "wk1": w(keys[1], (H, H)),
        "wv1": w(keys[2], (H, H)), "wo1": w(keys[3], (H, H)),
        "wq2": w(keys[4], (H, H)), "wk2": w(keys[5], (H, H)),
        "wv2": w(keys[6], (H, H)), "wo2": w(keys[7], (H, H)),
        "ln_gamma": jnp.ones((3, H), jnp.float32),
        "ln_beta": jnp.zeros((3, H), jnp.float32),
        "ffn_w1": w(keys[8], (H, FH)), "ffn_b1": w(keys[9], (1, FH)),
        "ffn_w2": w(keys[10], (FH, H)), "ffn_b2": w(keys[11], (1, H)),
    }

    X = w(keys[12], (B, S, H), 1.0)
    enc_outputs = w(keys[13], (B, Se, H), 1.0)
    enc_valid_lens = jnp.array([5, 8], dtype=jnp.int32)

    # Matmuls run in bf16 (f32 accumulation); compare to pure-f32 reference
    # with a bf16-appropriate bound.
    TOL = 5e-2

    # ---- training mode (causal mask, empty KV cache) ----
    state = (enc_outputs, enc_valid_lens, [None])
    out, new_state = decoder_block_forward(X, state, params, NH, index=0,
                                           training=True)
    out = jax.block_until_ready(out)
    ref = reference_forward(X, state, params, NH, index=0, training=True)
    assert out.shape == (B, S, H)
    assert new_state[2][0].shape == (B, S, H)  # KV cache updated
    assert jnp.allclose(out, ref, atol=TOL, rtol=TOL), \
        float(jnp.max(jnp.abs(out - ref)))

    # ---- eval mode (no causal mask, non-empty KV cache => Sk != S) ----
    state2 = (enc_outputs, enc_valid_lens, [new_state[2][0]])
    out2, new_state2 = decoder_block_forward(X, state2, params, NH, index=0,
                                             training=False)
    out2 = jax.block_until_ready(out2)
    ref2 = reference_forward(X, state2, params, NH, index=0, training=False)
    assert new_state2[2][0].shape == (B, 2 * S, H)
    assert jnp.allclose(out2, ref2, atol=TOL, rtol=TOL), \
        float(jnp.max(jnp.abs(out2 - ref2)))

    print("KERNEL_OK")
</pallas_src>

<mosaic_0001>
module attributes {stable_mosaic.version = 11 : i64} {
  func.func @decoder_block_kernel(%arg0: i32, %arg1: memref<2xi32, #tpu.memory_space<smem>>, %arg2: memref<8x128xf32, #tpu.memory_space<vmem>>, %arg3: memref<8x128xbf16, #tpu.memory_space<vmem>>, %arg4: memref<8x128xbf16, #tpu.memory_space<vmem>>, %arg5: memref<128x128xbf16, #tpu.memory_space<vmem>>, %arg6: memref<128x256xbf16, #tpu.memory_space<vmem>>, %arg7: memref<128x128xbf16, #tpu.memory_space<vmem>>, %arg8: memref<128x128xbf16, #tpu.memory_space<vmem>>, %arg9: memref<128x256xbf16, #tpu.memory_space<vmem>>, %arg10: memref<128x128xbf16, #tpu.memory_space<vmem>>, %arg11: memref<3x128xf32, #tpu.memory_space<vmem>>, %arg12: memref<3x128xf32, #tpu.memory_space<vmem>>, %arg13: memref<128x256xbf16, #tpu.memory_space<vmem>>, %arg14: memref<1x256xf32, #tpu.memory_space<vmem>>, %arg15: memref<256x128xbf16, #tpu.memory_space<vmem>>, %arg16: memref<1x128xf32, #tpu.memory_space<vmem>>, %arg17: memref<8x128xf32, #tpu.memory_space<vmem>>) attributes {dimension_semantics = [#tpu.dimension_semantics<parallel>], iteration_bounds = array<i64: 2>, scalar_prefetch = 1 : i64, scratch_operands = 0 : i64, tpu.core_type = #tpu.core_type<tc>, window_params = [{transform_indices = @transform_0, window_bounds = array<i64: 8, 128>}, {transform_indices = @transform_1, window_bounds = array<i64: 8, 128>}, {transform_indices = @transform_2, window_bounds = array<i64: 8, 128>}, {pipeline_mode = #tpu.pipeline_mode<synchronous>, transform_indices = @transform_3, window_bounds = array<i64: 128, 128>}, {pipeline_mode = #tpu.pipeline_mode<synchronous>, transform_indices = @transform_4, window_bounds = array<i64: 128, 256>}, {pipeline_mode = #tpu.pipeline_mode<synchronous>, transform_indices = @transform_5, window_bounds = array<i64: 128, 128>}, {pipeline_mode = #tpu.pipeline_mode<synchronous>, transform_indices = @transform_6, window_bounds = array<i64: 128, 128>}, {pipeline_mode = #tpu.pipeline_mode<synchronous>, transform_indices = @transform_7, window_bounds = array<i64: 128, 256>}, {pipeline_mode = #tpu.pipeline_mode<synchronous>, transform_indices = @transform_8, window_bounds = array<i64: 128, 128>}, {pipeline_mode = #tpu.pipeline_mode<synchronous>, transform_indices = @transform_9, window_bounds = array<i64: 3, 128>}, {pipeline_mode = #tpu.pipeline_mode<synchronous>, transform_indices = @transform_10, window_bounds = array<i64: 3, 128>}, {pipeline_mode = #tpu.pipeline_mode<synchronous>, transform_indices = @transform_11, window_bounds = array<i64: 128, 256>}, {pipeline_mode = #tpu.pipeline_mode<synchronous>, transform_indices = @transform_12, window_bounds = array<i64: 1, 256>}, {pipeline_mode = #tpu.pipeline_mode<synchronous>, transform_indices = @transform_13, window_bounds = array<i64: 256, 128>}, {pipeline_mode = #tpu.pipeline_mode<synchronous>, transform_indices = @transform_14, window_bounds = array<i64: 1, 128>}, {transform_indices = @transform_15, window_bounds = array<i64: 8, 128>}]} {
    %c0 = arith.constant 0 : index
    %c0_0 = arith.constant 0 : index
    %0 = vector.load %arg2[%c0, %c0_0] : memref<8x128xf32, #tpu.memory_space<vmem>>, vector<8x128xf32>
    %c0_1 = arith.constant 0 : index
    %c0_2 = arith.constant 0 : index
    %1 = vector.load %arg3[%c0_1, %c0_2] : memref<8x128xbf16, #tpu.memory_space<vmem>>, vector<8x128xbf16>
    %c0_3 = arith.constant 0 : index
    %c0_4 = arith.constant 0 : index
    %2 = vector.load %arg4[%c0_3, %c0_4] : memref<8x128xbf16, #tpu.memory_space<vmem>>, vector<8x128xbf16>
    %3 = tpu.iota {dimensions = array<i32: 0>} : vector<8x8xi32>
    %4 = tpu.iota {dimensions = array<i32: 1>} : vector<8x8xi32>
    %5 = arith.cmpi sle, %4, %3 : vector<8x8xi32>
    %6 = tpu.iota {dimensions = array<i32: 1>} : vector<8x8xi32>
    %7 = arith.index_cast %arg0 : i32 to index
    %8 = memref.load %arg1[%7] : memref<2xi32, #tpu.memory_space<smem>>
    %9 = vector.broadcast %8 : i32 to vector<8x8xi32>
    %10 = arith.cmpi slt, %6, %9 : vector<8x8xi32>
    %11 = arith.truncf %0 : vector<8x128xf32> to vector<8x128xbf16>
    %c0_5 = arith.constant 0 : index
    %c0_6 = arith.constant 0 : index
    %12 = vector.load %arg5[%c0_5, %c0_6] : memref<128x128xbf16, #tpu.memory_space<vmem>>, vector<128x128xbf16>
    %cst = arith.constant dense<0.000000e+00> : vector<8x128xf32>
    %13 = tpu.matmul %11, %12, %cst {dimension_numbers = #tpu.dot_dimension_numbers<[1], [0], [0], [1], [0, 0, 1, 1], [], []>} : vector<8x128xbf16>, vector<128x128xbf16>, vector<8x128xf32> -> vector<8x128xf32>
    %c0_7 = arith.constant 0 : index
    %c0_8 = arith.constant 0 : index
    %14 = vector.load %arg6[%c0_7, %c0_8] : memref<128x256xbf16, #tpu.memory_space<vmem>>, vector<128x256xbf16>
    %cst_9 = arith.constant dense<0.000000e+00> : vector<8x256xf32>
    %15 = tpu.matmul %1, %14, %cst_9 {dimension_numbers = #tpu.dot_dimension_numbers<[1], [0], [0], [1], [0, 0, 1, 1], [], []>} : vector<8x128xbf16>, vector<128x256xbf16>, vector<8x256xf32> -> vector<8x256xf32>
    %16 = arith.truncf %13 : vector<8x128xf32> to vector<8x128xbf16>
    %17 = vector.extract_strided_slice %16 {offsets = [0, 0], sizes = [8, 32], strides = [1, 1]} : vector<8x128xbf16> to vector<8x32xbf16>
    %18 = vector.extract_strided_slice %16 {offsets = [0, 32], sizes = [8, 32], strides = [1, 1]} : vector<8x128xbf16> to vector<8x32xbf16>
    %19 = vector.extract_strided_slice %16 {offsets = [0, 64], sizes = [8, 32], strides = [1, 1]} : vector<8x128xbf16> to vector<8x32xbf16>
    %20 = vector.extract_strided_slice %16 {offsets = [0, 96], sizes = [8, 32], strides = [1, 1]} : vector<8x128xbf16> to vector<8x32xbf16>
    %21 = vector.shape_cast %17 : vector<8x32xbf16> to vector<1x8x32xbf16>
    %22 = vector.shape_cast %18 : vector<8x32xbf16> to vector<1x8x32xbf16>
    %23 = vector.shape_cast %19 : vector<8x32xbf16> to vector<1x8x32xbf16>
    %24 = vector.shape_cast %20 : vector<8x32xbf16> to vector<1x8x32xbf16>
    %25 = tpu.concatenate %21, %22, %23, %24 in 0 : vector<1x8x32xbf16>, vector<1x8x32xbf16>, vector<1x8x32xbf16>, vector<1x8x32xbf16> -> vector<4x8x32xbf16>
    %26 = vector.extract_strided_slice %15 {offsets = [0, 0], sizes = [8, 128], strides = [1, 1]} : vector<8x256xf32> to vector<8x128xf32>
    %27 = arith.truncf %26 : vector<8x128xf32> to vector<8x128xbf16>
    %28 = vector.extract_strided_slice %27 {offsets = [0, 0], sizes = [8, 32], strides = [1, 1]} : vector<8x128xbf16> to vector<8x32xbf16>
    %29 = vector.extract_strided_slice %27 {offsets = [0, 32], sizes = [8, 32], strides = [1, 1]} : vector<8x128xbf16> to vector<8x32xbf16>
    %30 = vector.extract_strided_slice %27 {offsets = [0, 64], sizes = [8, 32], strides = [1, 1]} : vector<8x128xbf16> to vector<8x32xbf16>
    %31 = vector.extract_strided_slice %27 {offsets = [0, 96], sizes = [8, 32], strides = [1, 1]} : vector<8x128xbf16> to vector<8x32xbf16>
    %32 = vector.shape_cast %28 : vector<8x32xbf16> to vector<1x8x32xbf16>
    %33 = vector.shape_cast %29 : vector<8x32xbf16> to vector<1x8x32xbf16>
    %34 = vector.shape_cast %30 : vector<8x32xbf16> to vector<1x8x32xbf16>
    %35 = vector.shape_cast %31 : vector<8x32xbf16> to vector<1x8x32xbf16>
    %36 = tpu.concatenate %32, %33, %34, %35 in 0 : vector<1x8x32xbf16>, vector<1x8x32xbf16>, vector<1x8x32xbf16>, vector<1x8x32xbf16> -> vector<4x8x32xbf16>
    %37 = vector.extract_strided_slice %15 {offsets = [0, 128], sizes = [8, 128], strides = [1, 1]} : vector<8x256xf32> to vector<8x128xf32>
    %38 = arith.truncf %37 : vector<8x128xf32> to vector<8x128xbf16>
    %39 = vector.extract_strided_slice %38 {offsets = [0, 0], sizes = [8, 32], strides = [1, 1]} : vector<8x128xbf16> to vector<8x32xbf16>
    %40 = vector.extract_strided_slice %38 {offsets = [0, 32], sizes = [8, 32], strides = [1, 1]} : vector<8x128xbf16> to vector<8x32xbf16>
    %41 = vector.extract_strided_slice %38 {offsets = [0, 64], sizes = [8, 32], strides = [1, 1]} : vector<8x128xbf16> to vector<8x32xbf16>
    %42 = vector.extract_strided_slice %38 {offsets = [0, 96], sizes = [8, 32], strides = [1, 1]} : vector<8x128xbf16> to vector<8x32xbf16>
    %43 = vector.shape_cast %39 : vector<8x32xbf16> to vector<1x8x32xbf16>
    %44 = vector.shape_cast %40 : vector<8x32xbf16> to vector<1x8x32xbf16>
    %45 = vector.shape_cast %41 : vector<8x32xbf16> to vector<1x8x32xbf16>
    %46 = vector.shape_cast %42 : vector<8x32xbf16> to vector<1x8x32xbf16>
    %47 = tpu.concatenate %43, %44, %45, %46 in 0 : vector<1x8x32xbf16>, vector<1x8x32xbf16>, vector<1x8x32xbf16>, vector<1x8x32xbf16> -> vector<4x8x32xbf16>
    "tpu.trace_start"() <{level = 10 : i32, message = "hqd,hkd->hqk"}> : () -> ()
    %cst_10 = arith.constant dense<0.000000e+00> : vector<4x8x8xf32>
    %48 = tpu.matmul %25, %36, %cst_10 {dimension_numbers = #tpu.dot_dimension_numbers<[2], [2], [1], [1], [0, 0, 0, 1, 1, 1], [0], [0]>} : vector<4x8x32xbf16>, vector<4x8x32xbf16>, vector<4x8x8xf32> -> vector<4x8x8xf32>
    "tpu.trace_stop"() : () -> ()
    %49 = vector.shape_cast %5 : vector<8x8xi1> to vector<1x8x8xi1>
    %cst_11 = arith.constant -1.000000e+06 : f32
    %50 = vector.shape_cast %49 : vector<1x8x8xi1> to vector<1x8x8xi1>
    %51 = vector.broadcast %50 : vector<1x8x8xi1> to vector<4x8x8xi1>
    %52 = vector.broadcast %cst_11 : f32 to vector<4x8x8xf32>
    %53 = arith.select %51, %48, %52 : vector<4x8x8xi1>, vector<4x8x8xf32>
    %cst_12 = arith.constant dense<0xFF800000> : vector<4x8xf32>
    %54 = vector.multi_reduction <maximumf>, %53, %cst_12 [2] : vector<4x8x8xf32> to vector<4x8xf32>
    %55 = vector.shape_cast %54 : vector<4x8xf32> to vector<4x8x1xf32>
    %56 = vector.broadcast %55 : vector<4x8x1xf32> to vector<4x8x8xf32>
    %57 = arith.subf %53, %56 : vector<4x8x8xf32>
    %58 = math.exp %57 : vector<4x8x8xf32>
    %cst_13 = arith.constant dense<0.000000e+00> : vector<4x8xf32>
    %59 = vector.multi_reduction <add>, %58, %cst_13 [2] : vector<4x8x8xf32> to vector<4x8xf32>
    %60 = vector.shape_cast %59 : vector<4x8xf32> to vector<4x8x1xf32>
    %61 = tpu.reciprocal %60 {approx = true} : vector<4x8x1xf32> -> vector<4x8x1xf32>
    %62 = vector.broadcast %61 : vector<4x8x1xf32> to vector<4x8x8xf32>
    %63 = arith.mulf %58, %62 : vector<4x8x8xf32>
    %64 = arith.truncf %63 : vector<4x8x8xf32> to vector<4x8x8xbf16>
    "tpu.trace_start"() <{level = 10 : i32, message = "hqk,hkd->hqd"}> : () -> ()
    %cst_14 = arith.constant dense<0.000000e+00> : vector<4x8x32xf32>
    %65 = tpu.matmul %64, %47, %cst_14 {dimension_numbers = #tpu.dot_dimension_numbers<[2], [1], [1], [2], [0, 0, 0, 1, 1, 2], [0], [0]>} : vector<4x8x8xbf16>, vector<4x8x32xbf16>, vector<4x8x32xf32> -> vector<4x8x32xf32>
    "tpu.trace_stop"() : () -> ()
    %66 = vector.extract_strided_slice %65 {offsets = [0, 0, 0], sizes = [1, 8, 32], strides = [1, 1, 1]} : vector<4x8x32xf32> to vector<1x8x32xf32>
    %67 = vector.shape_cast %66 : vector<1x8x32xf32> to vector<8x32xf32>
    %68 = vector.extract_strided_slice %65 {offsets = [1, 0, 0], sizes = [1, 8, 32], strides = [1, 1, 1]} : vector<4x8x32xf32> to vector<1x8x32xf32>
    %69 = vector.shape_cast %68 : vector<1x8x32xf32> to vector<8x32xf32>
    %70 = vector.extract_strided_slice %65 {offsets = [2, 0, 0], sizes = [1, 8, 32], strides = [1, 1, 1]} : vector<4x8x32xf32> to vector<1x8x32xf32>
    %71 = vector.shape_cast %70 : vector<1x8x32xf32> to vector<8x32xf32>
    %72 = vector.extract_strided_slice %65 {offsets = [3, 0, 0], sizes = [1, 8, 32], strides = [1, 1, 1]} : vector<4x8x32xf32> to vector<1x8x32xf32>
    %73 = vector.shape_cast %72 : vector<1x8x32xf32> to vector<8x32xf32>
    %74 = tpu.concatenate %67, %69, %71, %73 in 1 : vector<8x32xf32>, vector<8x32xf32>, vector<8x32xf32>, vector<8x32xf32> -> vector<8x128xf32>
    %75 = arith.truncf %74 : vector<8x128xf32> to vector<8x128xbf16>
    %c0_15 = arith.constant 0 : index
    %c0_16 = arith.constant 0 : index
    %76 = vector.load %arg7[%c0_15, %c0_16] : memref<128x128xbf16, #tpu.memory_space<vmem>>, vector<128x128xbf16>
    %cst_17 = arith.constant dense<0.000000e+00> : vector<8x128xf32>
    %77 = tpu.matmul %75, %76, %cst_17 {dimension_numbers = #tpu.dot_dimension_numbers<[1], [0], [0], [1], [0, 0, 1, 1], [], []>} : vector<8x128xbf16>, vector<128x128xbf16>, vector<8x128xf32> -> vector<8x128xf32>
    %78 = arith.addf %0, %77 : vector<8x128xf32>
    %c0_18 = arith.constant 0 : index
    %c0_19 = arith.constant 0 : index
    %79 = vector.load %arg11[%c0_18, %c0_19] : memref<3x128xf32, #tpu.memory_space<vmem>>, vector<1x128xf32>
    %80 = vector.shape_cast %79 : vector<1x128xf32> to vector<128xf32>
    %c0_20 = arith.constant 0 : index
    %c0_21 = arith.constant 0 : index
    %81 = vector.load %arg12[%c0_20, %c0_21] : memref<3x128xf32, #tpu.memory_space<vmem>>, vector<1x128xf32>
    %82 = vector.shape_cast %81 : vector<1x128xf32> to vector<128xf32>
    %cst_22 = arith.constant dense<0.000000e+00> : vector<8xf32>
    %83 = vector.multi_reduction <add>, %78, %cst_22 [1] : vector<8x128xf32> to vector<8xf32>
    %84 = vector.shape_cast %83 : vector<8xf32> to vector<8x1xf32>
    %cst_23 = arith.constant 1.280000e+02 : f32
    %85 = vector.broadcast %cst_23 : f32 to vector<8x1xf32>
    %86 = arith.divf %84, %85 : vector<8x1xf32>
    %87 = vector.broadcast %86 : vector<8x1xf32> to vector<8x128xf32>
    %88 = arith.subf %78, %87 : vector<8x128xf32>
    %89 = arith.mulf %88, %88 : vector<8x128xf32>
    %cst_24 = arith.constant dense<0.000000e+00> : vector<8xf32>
    %90 = vector.multi_reduction <add>, %89, %cst_24 [1] : vector<8x128xf32> to vector<8xf32>
    %91 = vector.shape_cast %90 : vector<8xf32> to vector<8x1xf32>
    %cst_25 = arith.constant 1.280000e+02 : f32
    %92 = vector.broadcast %cst_25 : f32 to vector<8x1xf32>
    %93 = arith.divf %91, %92 : vector<8x1xf32>
    %94 = vector.broadcast %86 : vector<8x1xf32> to vector<8x128xf32>
    %95 = arith.subf %78, %94 : vector<8x128xf32>
    %cst_26 = arith.constant 9.99999974E-6 : f32
    %96 = vector.broadcast %cst_26 : f32 to vector<8x1xf32>
    %97 = arith.addf %93, %96 : vector<8x1xf32>
    %98 = math.rsqrt %97 : vector<8x1xf32>
    %99 = vector.broadcast %98 : vector<8x1xf32> to vector<8x128xf32>
    %100 = arith.mulf %95, %99 : vector<8x128xf32>
    %101 = vector.shape_cast %80 : vector<128xf32> to vector<1x128xf32>
    %102 = vector.broadcast %101 : vector<1x128xf32> to vector<8x128xf32>
    %103 = arith.mulf %100, %102 : vector<8x128xf32>
    %104 = vector.shape_cast %82 : vector<128xf32> to vector<1x128xf32>
    %105 = vector.broadcast %104 : vector<1x128xf32> to vector<8x128xf32>
    %106 = arith.addf %103, %105 : vector<8x128xf32>
    %107 = arith.truncf %106 : vector<8x128xf32> to vector<8x128xbf16>
    %c0_27 = arith.constant 0 : index
    %c0_28 = arith.constant 0 : index
    %108 = vector.load %arg8[%c0_27, %c0_28] : memref<128x128xbf16, #tpu.memory_space<vmem>>, vector<128x128xbf16>
    %cst_29 = arith.constant dense<0.000000e+00> : vector<8x128xf32>
    %109 = tpu.matmul %107, %108, %cst_29 {dimension_numbers = #tpu.dot_dimension_numbers<[1], [0], [0], [1], [0, 0, 1, 1], [], []>} : vector<8x128xbf16>, vector<128x128xbf16>, vector<8x128xf32> -> vector<8x128xf32>
    %c0_30 = arith.constant 0 : index
    %c0_31 = arith.constant 0 : index
    %110 = vector.load %arg9[%c0_30, %c0_31] : memref<128x256xbf16, #tpu.memory_space<vmem>>, vector<128x256xbf16>
    %cst_32 = arith.constant dense<0.000000e+00> : vector<8x256xf32>
    %111 = tpu.matmul %2, %110, %cst_32 {dimension_numbers = #tpu.dot_dimension_numbers<[1], [0], [0], [1], [0, 0, 1, 1], [], []>} : vector<8x128xbf16>, vector<128x256xbf16>, vector<8x256xf32> -> vector<8x256xf32>
    %112 = arith.truncf %109 : vector<8x128xf32> to vector<8x128xbf16>
    %113 = vector.extract_strided_slice %112 {offsets = [0, 0], sizes = [8, 32], strides = [1, 1]} : vector<8x128xbf16> to vector<8x32xbf16>
    %114 = vector.extract_strided_slice %112 {offsets = [0, 32], sizes = [8, 32], strides = [1, 1]} : vector<8x128xbf16> to vector<8x32xbf16>
    %115 = vector.extract_strided_slice %112 {offsets = [0, 64], sizes = [8, 32], strides = [1, 1]} : vector<8x128xbf16> to vector<8x32xbf16>
    %116 = vector.extract_strided_slice %112 {offsets = [0, 96], sizes = [8, 32], strides = [1, 1]} : vector<8x128xbf16> to vector<8x32xbf16>
    %117 = vector.shape_cast %113 : vector<8x32xbf16> to vector<1x8x32xbf16>
    %118 = vector.shape_cast %114 : vector<8x32xbf16> to vector<1x8x32xbf16>
    %119 = vector.shape_cast %115 : vector<8x32xbf16> to vector<1x8x32xbf16>
    %120 = vector.shape_cast %116 : vector<8x32xbf16> to vector<1x8x32xbf16>
    %121 = tpu.concatenate %117, %118, %119, %120 in 0 : vector<1x8x32xbf16>, vector<1x8x32xbf16>, vector<1x8x32xbf16>, vector<1x8x32xbf16> -> vector<4x8x32xbf16>
    %122 = vector.extract_strided_slice %111 {offsets = [0, 0], sizes = [8, 128], strides = [1, 1]} : vector<8x256xf32> to vector<8x128xf32>
    %123 = arith.truncf %122 : vector<8x128xf32> to vector<8x128xbf16>
    %124 = vector.extract_strided_slice %123 {offsets = [0, 0], sizes = [8, 32], strides = [1, 1]} : vector<8x128xbf16> to vector<8x32xbf16>
    %125 = vector.extract_strided_slice %123 {offsets = [0, 32], sizes = [8, 32], strides = [1, 1]} : vector<8x128xbf16> to vector<8x32xbf16>
    %126 = vector.extract_strided_slice %123 {offsets = [0, 64], sizes = [8, 32], strides = [1, 1]} : vector<8x128xbf16> to vector<8x32xbf16>
    %127 = vector.extract_strided_slice %123 {offsets = [0, 96], sizes = [8, 32], strides = [1, 1]} : vector<8x128xbf16> to vector<8x32xbf16>
    %128 = vector.shape_cast %124 : vector<8x32xbf16> to vector<1x8x32xbf16>
    %129 = vector.shape_cast %125 : vector<8x32xbf16> to vector<1x8x32xbf16>
    %130 = vector.shape_cast %126 : vector<8x32xbf16> to vector<1x8x32xbf16>
    %131 = vector.shape_cast %127 : vector<8x32xbf16> to vector<1x8x32xbf16>
    %132 = tpu.concatenate %128, %129, %130, %131 in 0 : vector<1x8x32xbf16>, vector<1x8x32xbf16>, vector<1x8x32xbf16>, vector<1x8x32xbf16> -> vector<4x8x32xbf16>
    %133 = vector.extract_strided_slice %111 {offsets = [0, 128], sizes = [8, 128], strides = [1, 1]} : vector<8x256xf32> to vector<8x128xf32>
    %134 = arith.truncf %133 : vector<8x128xf32> to vector<8x128xbf16>
    %135 = vector.extract_strided_slice %134 {offsets = [0, 0], sizes = [8, 32], strides = [1, 1]} : vector<8x128xbf16> to vector<8x32xbf16>
    %136 = vector.extract_strided_slice %134 {offsets = [0, 32], sizes = [8, 32], strides = [1, 1]} : vector<8x128xbf16> to vector<8x32xbf16>
    %137 = vector.extract_strided_slice %134 {offsets = [0, 64], sizes = [8, 32], strides = [1, 1]} : vector<8x128xbf16> to vector<8x32xbf16>
    %138 = vector.extract_strided_slice %134 {offsets = [0, 96], sizes = [8, 32], strides = [1, 1]} : vector<8x128xbf16> to vector<8x32xbf16>
    %139 = vector.shape_cast %135 : vector<8x32xbf16> to vector<1x8x32xbf16>
    %140 = vector.shape_cast %136 : vector<8x32xbf16> to vector<1x8x32xbf16>
    %141 = vector.shape_cast %137 : vector<8x32xbf16> to vector<1x8x32xbf16>
    %142 = vector.shape_cast %138 : vector<8x32xbf16> to vector<1x8x32xbf16>
    %143 = tpu.concatenate %139, %140, %141, %142 in 0 : vector<1x8x32xbf16>, vector<1x8x32xbf16>, vector<1x8x32xbf16>, vector<1x8x32xbf16> -> vector<4x8x32xbf16>
    "tpu.trace_start"() <{level = 10 : i32, message = "hqd,hkd->hqk"}> : () -> ()
    %cst_33 = arith.constant dense<0.000000e+00> : vector<4x8x8xf32>
    %144 = tpu.matmul %121, %132, %cst_33 {dimension_numbers = #tpu.dot_dimension_numbers<[2], [2], [1], [1], [0, 0, 0, 1, 1, 1], [0], [0]>} : vector<4x8x32xbf16>, vector<4x8x32xbf16>, vector<4x8x8xf32> -> vector<4x8x8xf32>
    "tpu.trace_stop"() : () -> ()
    %145 = vector.shape_cast %10 : vector<8x8xi1> to vector<1x8x8xi1>
    %cst_34 = arith.constant -1.000000e+06 : f32
    %146 = vector.shape_cast %145 : vector<1x8x8xi1> to vector<1x8x8xi1>
    %147 = vector.broadcast %146 : vector<1x8x8xi1> to vector<4x8x8xi1>
    %148 = vector.broadcast %cst_34 : f32 to vector<4x8x8xf32>
    %149 = arith.select %147, %144, %148 : vector<4x8x8xi1>, vector<4x8x8xf32>
    %cst_35 = arith.constant dense<0xFF800000> : vector<4x8xf32>
    %150 = vector.multi_reduction <maximumf>, %149, %cst_35 [2] : vector<4x8x8xf32> to vector<4x8xf32>
    %151 = vector.shape_cast %150 : vector<4x8xf32> to vector<4x8x1xf32>
    %152 = vector.broadcast %151 : vector<4x8x1xf32> to vector<4x8x8xf32>
    %153 = arith.subf %149, %152 : vector<4x8x8xf32>
    %154 = math.exp %153 : vector<4x8x8xf32>
    %cst_36 = arith.constant dense<0.000000e+00> : vector<4x8xf32>
    %155 = vector.multi_reduction <add>, %154, %cst_36 [2] : vector<4x8x8xf32> to vector<4x8xf32>
    %156 = vector.shape_cast %155 : vector<4x8xf32> to vector<4x8x1xf32>
    %157 = tpu.reciprocal %156 {approx = true} : vector<4x8x1xf32> -> vector<4x8x1xf32>
    %158 = vector.broadcast %157 : vector<4x8x1xf32> to vector<4x8x8xf32>
    %159 = arith.mulf %154, %158 : vector<4x8x8xf32>
    %160 = arith.truncf %159 : vector<4x8x8xf32> to vector<4x8x8xbf16>
    "tpu.trace_start"() <{level = 10 : i32, message = "hqk,hkd->hqd"}> : () -> ()
    %cst_37 = arith.constant dense<0.000000e+00> : vector<4x8x32xf32>
    %161 = tpu.matmul %160, %143, %cst_37 {dimension_numbers = #tpu.dot_dimension_numbers<[2], [1], [1], [2], [0, 0, 0, 1, 1, 2], [0], [0]>} : vector<4x8x8xbf16>, vector<4x8x32xbf16>, vector<4x8x32xf32> -> vector<4x8x32xf32>
    "tpu.trace_stop"() : () -> ()
    %162 = vector.extract_strided_slice %161 {offsets = [0, 0, 0], sizes = [1, 8, 32], strides = [1, 1, 1]} : vector<4x8x32xf32> to vector<1x8x32xf32>
    %163 = vector.shape_cast %162 : vector<1x8x32xf32> to vector<8x32xf32>
    %164 = vector.extract_strided_slice %161 {offsets = [1, 0, 0], sizes = [1, 8, 32], strides = [1, 1, 1]} : vector<4x8x32xf32> to vector<1x8x32xf32>
    %165 = vector.shape_cast %164 : vector<1x8x32xf32> to vector<8x32xf32>
    %166 = vector.extract_strided_slice %161 {offsets = [2, 0, 0], sizes = [1, 8, 32], strides = [1, 1, 1]} : vector<4x8x32xf32> to vector<1x8x32xf32>
    %167 = vector.shape_cast %166 : vector<1x8x32xf32> to vector<8x32xf32>
    %168 = vector.extract_strided_slice %161 {offsets = [3, 0, 0], sizes = [1, 8, 32], strides = [1, 1, 1]} : vector<4x8x32xf32> to vector<1x8x32xf32>
    %169 = vector.shape_cast %168 : vector<1x8x32xf32> to vector<8x32xf32>
    %170 = tpu.concatenate %163, %165, %167, %169 in 1 : vector<8x32xf32>, vector<8x32xf32>, vector<8x32xf32>, vector<8x32xf32> -> vector<8x128xf32>
    %171 = arith.truncf %170 : vector<8x128xf32> to vector<8x128xbf16>
    %c0_38 = arith.constant 0 : index
    %c0_39 = arith.constant 0 : index
    %172 = vector.load %arg10[%c0_38, %c0_39] : memref<128x128xbf16, #tpu.memory_space<vmem>>, vector<128x128xbf16>
    %cst_40 = arith.constant dense<0.000000e+00> : vector<8x128xf32>
    %173 = tpu.matmul %171, %172, %cst_40 {dimension_numbers = #tpu.dot_dimension_numbers<[1], [0], [0], [1], [0, 0, 1, 1], [], []>} : vector<8x128xbf16>, vector<128x128xbf16>, vector<8x128xf32> -> vector<8x128xf32>
    %174 = arith.addf %106, %173 : vector<8x128xf32>
    %c1 = arith.constant 1 : index
    %c0_41 = arith.constant 0 : index
    %175 = vector.load %arg11[%c1, %c0_41] : memref<3x128xf32, #tpu.memory_space<vmem>>, vector<1x128xf32>
    %176 = vector.shape_cast %175 : vector<1x128xf32> to vector<128xf32>
    %c1_42 = arith.constant 1 : index
    %c0_43 = arith.constant 0 : index
    %177 = vector.load %arg12[%c1_42, %c0_43] : memref<3x128xf32, #tpu.memory_space<vmem>>, vector<1x128xf32>
    %178 = vector.shape_cast %177 : vector<1x128xf32> to vector<128xf32>
    %cst_44 = arith.constant dense<0.000000e+00> : vector<8xf32>
    %179 = vector.multi_reduction <add>, %174, %cst_44 [1] : vector<8x128xf32> to vector<8xf32>
    %180 = vector.shape_cast %179 : vector<8xf32> to vector<8x1xf32>
    %cst_45 = arith.constant 1.280000e+02 : f32
    %181 = vector.broadcast %cst_45 : f32 to vector<8x1xf32>
    %182 = arith.divf %180, %181 : vector<8x1xf32>
    %183 = vector.broadcast %182 : vector<8x1xf32> to vector<8x128xf32>
    %184 = arith.subf %174, %183 : vector<8x128xf32>
    %185 = arith.mulf %184, %184 : vector<8x128xf32>
    %cst_46 = arith.constant dense<0.000000e+00> : vector<8xf32>
    %186 = vector.multi_reduction <add>, %185, %cst_46 [1] : vector<8x128xf32> to vector<8xf32>
    %187 = vector.shape_cast %186 : vector<8xf32> to vector<8x1xf32>
    %cst_47 = arith.constant 1.280000e+02 : f32
    %188 = vector.broadcast %cst_47 : f32 to vector<8x1xf32>
    %189 = arith.divf %187, %188 : vector<8x1xf32>
    %190 = vector.broadcast %182 : vector<8x1xf32> to vector<8x128xf32>
    %191 = arith.subf %174, %190 : vector<8x128xf32>
    %cst_48 = arith.constant 9.99999974E-6 : f32
    %192 = vector.broadcast %cst_48 : f32 to vector<8x1xf32>
    %193 = arith.addf %189, %192 : vector<8x1xf32>
    %194 = math.rsqrt %193 : vector<8x1xf32>
    %195 = vector.broadcast %194 : vector<8x1xf32> to vector<8x128xf32>
    %196 = arith.mulf %191, %195 : vector<8x128xf32>
    %197 = vector.shape_cast %176 : vector<128xf32> to vector<1x128xf32>
    %198 = vector.broadcast %197 : vector<1x128xf32> to vector<8x128xf32>
    %199 = arith.mulf %196, %198 : vector<8x128xf32>
    %200 = vector.shape_cast %178 : vector<128xf32> to vector<1x128xf32>
    %201 = vector.broadcast %200 : vector<1x128xf32> to vector<8x128xf32>
    %202 = arith.addf %199, %201 : vector<8x128xf32>
    %203 = arith.truncf %202 : vector<8x128xf32> to vector<8x128xbf16>
    %c0_49 = arith.constant 0 : index
    %c0_50 = arith.constant 0 : index
    %204 = vector.load %arg13[%c0_49, %c0_50] : memref<128x256xbf16, #tpu.memory_space<vmem>>, vector<128x256xbf16>
    %cst_51 = arith.constant dense<0.000000e+00> : vector<8x256xf32>
    %205 = tpu.matmul %203, %204, %cst_51 {dimension_numbers = #tpu.dot_dimension_numbers<[1], [0], [0], [1], [0, 0, 1, 1], [], []>} : vector<8x128xbf16>, vector<128x256xbf16>, vector<8x256xf32> -> vector<8x256xf32>
    %c0_52 = arith.constant 0 : index
    %c0_53 = arith.constant 0 : index
    %206 = vector.load %arg14[%c0_52, %c0_53] : memref<1x256xf32, #tpu.memory_space<vmem>>, vector<1x256xf32>
    %207 = vector.broadcast %206 : vector<1x256xf32> to vector<8x256xf32>
    %208 = arith.addf %205, %207 : vector<8x256xf32>
    %cst_54 = arith.constant 0.000000e+00 : f32
    %209 = vector.broadcast %cst_54 : f32 to vector<8x256xf32>
    %210 = arith.maximumf %208, %209 : vector<8x256xf32>
    %211 = arith.truncf %210 : vector<8x256xf32> to vector<8x256xbf16>
    %c0_55 = arith.constant 0 : index
    %c0_56 = arith.constant 0 : index
    %212 = vector.load %arg15[%c0_55, %c0_56] : memref<256x128xbf16, #tpu.memory_space<vmem>>, vector<256x128xbf16>
    %cst_57 = arith.constant dense<0.000000e+00> : vector<8x128xf32>
    %213 = tpu.matmul %211, %212, %cst_57 {dimension_numbers = #tpu.dot_dimension_numbers<[1], [0], [0], [1], [0, 0, 1, 1], [], []>} : vector<8x256xbf16>, vector<256x128xbf16>, vector<8x128xf32> -> vector<8x128xf32>
    %c0_58 = arith.constant 0 : index
    %c0_59 = arith.constant 0 : index
    %214 = vector.load %arg16[%c0_58, %c0_59] : memref<1x128xf32, #tpu.memory_space<vmem>>, vector<1x128xf32>
    %215 = vector.broadcast %214 : vector<1x128xf32> to vector<8x128xf32>
    %216 = arith.addf %213, %215 : vector<8x128xf32>
    %217 = arith.addf %202, %216 : vector<8x128xf32>
    %c2 = arith.constant 2 : index
    %c0_60 = arith.constant 0 : index
    %218 = vector.load %arg11[%c2, %c0_60] : memref<3x128xf32, #tpu.memory_space<vmem>>, vector<1x128xf32>
    %219 = vector.shape_cast %218 : vector<1x128xf32> to vector<128xf32>
    %c2_61 = arith.constant 2 : index
    %c0_62 = arith.constant 0 : index
    %220 = vector.load %arg12[%c2_61, %c0_62] : memref<3x128xf32, #tpu.memory_space<vmem>>, vector<1x128xf32>
    %221 = vector.shape_cast %220 : vector<1x128xf32> to vector<128xf32>
    %cst_63 = arith.constant dense<0.000000e+00> : vector<8xf32>
    %222 = vector.multi_reduction <add>, %217, %cst_63 [1] : vector<8x128xf32> to vector<8xf32>
    %223 = vector.shape_cast %222 : vector<8xf32> to vector<8x1xf32>
    %cst_64 = arith.constant 1.280000e+02 : f32
    %224 = vector.broadcast %cst_64 : f32 to vector<8x1xf32>
    %225 = arith.divf %223, %224 : vector<8x1xf32>
    %226 = vector.broadcast %225 : vector<8x1xf32> to vector<8x128xf32>
    %227 = arith.subf %217, %226 : vector<8x128xf32>
    %228 = arith.mulf %227, %227 : vector<8x128xf32>
    %cst_65 = arith.constant dense<0.000000e+00> : vector<8xf32>
    %229 = vector.multi_reduction <add>, %228, %cst_65 [1] : vector<8x128xf32> to vector<8xf32>
    %230 = vector.shape_cast %229 : vector<8xf32> to vector<8x1xf32>
    %cst_66 = arith.constant 1.280000e+02 : f32
    %231 = vector.broadcast %cst_66 : f32 to vector<8x1xf32>
    %232 = arith.divf %230, %231 : vector<8x1xf32>
    %233 = vector.broadcast %225 : vector<8x1xf32> to vector<8x128xf32>
    %234 = arith.subf %217, %233 : vector<8x128xf32>
    %cst_67 = arith.constant 9.99999974E-6 : f32
    %235 = vector.broadcast %cst_67 : f32 to vector<8x1xf32>
    %236 = arith.addf %232, %235 : vector<8x1xf32>
    %237 = math.rsqrt %236 : vector<8x1xf32>
    %238 = vector.broadcast %237 : vector<8x1xf32> to vector<8x128xf32>
    %239 = arith.mulf %234, %238 : vector<8x128xf32>
    %240 = vector.shape_cast %219 : vector<128xf32> to vector<1x128xf32>
    %241 = vector.broadcast %240 : vector<1x128xf32> to vector<8x128xf32>
    %242 = arith.mulf %239, %241 : vector<8x128xf32>
    %243 = vector.shape_cast %221 : vector<128xf32> to vector<1x128xf32>
    %244 = vector.broadcast %243 : vector<1x128xf32> to vector<8x128xf32>
    %245 = arith.addf %242, %244 : vector<8x128xf32>
    %c0_68 = arith.constant 0 : index
    %c0_69 = arith.constant 0 : index
    %246 = vector.load %arg17[%c0_68, %c0_69] : memref<8x128xf32, #tpu.memory_space<vmem>>, vector<8x128xf32>
    tpu.vector_store %arg17[%c0_68, %c0_69], %245 {strides = array<i32>} : memref<8x128xf32, #tpu.memory_space<vmem>>, vector<8x128xf32>,
    return
  }
  func.func @transform_0(%arg0: i32, %arg1: memref<2xi32, #tpu.memory_space<smem>>) -> (i32, i32) {
    %c0_i32 = arith.constant 0 : i32
    %c0_i32_0 = arith.constant 0 : i32
    return %arg0, %c0_i32 : i32, i32
  }
  func.func @transform_1(%arg0: i32, %arg1: memref<2xi32, #tpu.memory_space<smem>>) -> (i32, i32) {
    %c0_i32 = arith.constant 0 : i32
    %c0_i32_0 = arith.constant 0 : i32
    return %arg0, %c0_i32 : i32, i32
  }
  func.func @transform_2(%arg0: i32, %arg1: memref<2xi32, #tpu.memory_space<smem>>) -> (i32, i32) {
    %c0_i32 = arith.constant 0 : i32
    %c0_i32_0 = arith.constant 0 : i32
    return %arg0, %c0_i32 : i32, i32
  }
  func.func @transform_3(%arg0: i32, %arg1: memref<2xi32, #tpu.memory_space<smem>>) -> (i32, i32) {
    %c0_i32 = arith.constant 0 : i32
    %c0_i32_0 = arith.constant 0 : i32
    %c0_i32_1 = arith.constant 0 : i32
    return %c0_i32, %c0_i32_0 : i32, i32
  }
  func.func @transform_4(%arg0: i32, %arg1: memref<2xi32, #tpu.memory_space<smem>>) -> (i32, i32) {
    %c0_i32 = arith.constant 0 : i32
    %c0_i32_0 = arith.constant 0 : i32
    %c0_i32_1 = arith.constant 0 : i32
    return %c0_i32, %c0_i32_0 : i32, i32
  }
  func.func @transform_5(%arg0: i32, %arg1: memref<2xi32, #tpu.memory_space<smem>>) -> (i32, i32) {
    %c0_i32 = arith.constant 0 : i32
    %c0_i32_0 = arith.constant 0 : i32
    %c0_i32_1 = arith.constant 0 : i32
    return %c0_i32, %c0_i32_0 : i32, i32
  }
  func.func @transform_6(%arg0: i32, %arg1: memref<2xi32, #tpu.memory_space<smem>>) -> (i32, i32) {
    %c0_i32 = arith.constant 0 : i32
    %c0_i32_0 = arith.constant 0 : i32
    %c0_i32_1 = arith.constant 0 : i32
    return %c0_i32, %c0_i32_0 : i32, i32
  }
  func.func @transform_7(%arg0: i32, %arg1: memref<2xi32, #tpu.memory_space<smem>>) -> (i32, i32) {
    %c0_i32 = arith.constant 0 : i32
    %c0_i32_0 = arith.constant 0 : i32
    %c0_i32_1 = arith.constant 0 : i32
    return %c0_i32, %c0_i32_0 : i32, i32
  }
  func.func @transform_8(%arg0: i32, %arg1: memref<2xi32, #tpu.memory_space<smem>>) -> (i32, i32) {
    %c0_i32 = arith.constant 0 : i32
    %c0_i32_0 = arith.constant 0 : i32
    %c0_i32_1 = arith.constant 0 : i32
    return %c0_i32, %c0_i32_0 : i32, i32
  }
  func.func @transform_9(%arg0: i32, %arg1: memref<2xi32, #tpu.memory_space<smem>>) -> (i32, i32) {
    %c0_i32 = arith.constant 0 : i32
    %c0_i32_0 = arith.constant 0 : i32
    %c0_i32_1 = arith.constant 0 : i32
    return %c0_i32, %c0_i32_0 : i32, i32
  }
  func.func @transform_10(%arg0: i32, %arg1: memref<2xi32, #tpu.memory_space<smem>>) -> (i32, i32) {
    %c0_i32 = arith.constant 0 : i32
    %c0_i32_0 = arith.constant 0 : i32
    %c0_i32_1 = arith.constant 0 : i32
    return %c0_i32, %c0_i32_0 : i32, i32
  }
  func.func @transform_11(%arg0: i32, %arg1: memref<2xi32, #tpu.memory_space<smem>>) -> (i32, i32) {
    %c0_i32 = arith.constant 0 : i32
    %c0_i32_0 = arith.constant 0 : i32
    %c0_i32_1 = arith.constant 0 : i32
    return %c0_i32, %c0_i32_0 : i32, i32
  }
  func.func @transform_12(%arg0: i32, %arg1: memref<2xi32, #tpu.memory_space<smem>>) -> (i32, i32) {
    %c0_i32 = arith.constant 0 : i32
    %c0_i32_0 = arith.constant 0 : i32
    %c0_i32_1 = arith.constant 0 : i32
    return %c0_i32, %c0_i32_0 : i32, i32
  }
  func.func @transform_13(%arg0: i32, %arg1: memref<2xi32, #tpu.memory_space<smem>>) -> (i32, i32) {
    %c0_i32 = arith.constant 0 : i32
    %c0_i32_0 = arith.constant 0 : i32
    %c0_i32_1 = arith.constant 0 : i32
    return %c0_i32, %c0_i32_0 : i32, i32
  }
  func.func @transform_14(%arg0: i32, %arg1: memref<2xi32, #tpu.memory_space<smem>>) -> (i32, i32) {
    %c0_i32 = arith.constant 0 : i32
    %c0_i32_0 = arith.constant 0 : i32
    %c0_i32_1 = arith.constant 0 : i32
    return %c0_i32, %c0_i32_0 : i32, i32
  }
  func.func @transform_15(%arg0: i32, %arg1: memref<2xi32, #tpu.memory_space<smem>>) -> (i32, i32) {
    %c0_i32 = arith.constant 0 : i32
    %c0_i32_0 = arith.constant 0 : i32
    return %arg0, %c0_i32 : i32, i32
  }
}

</mosaic_0001>

<llo_original>
// kernel: tpu_custom_call.1
$region0: #{tpu_custom_call.1}
  #allocation0 [shape = 'u32[]', space=smem, size = 0x4, offset = 0x4, fixed_abs, tag = 'smem constant byte address 0x4 - core index']
  #allocation1 [shape = 'u32[144,128]{1,0:T(1,128)}', space=vmem, size = 0x12000, scoped, tag = 'internal scratch']
  #allocation2 [shape = 's32[1]{0}', space=sflag, size = 0x4, scoped, tag = 'scoped memory for tpu_custom_call.1']
  #allocation3 [shape = 'u8[512]{0}', space=smem, size = 0x200, scoped, tag = 'prefetched SMEM operand 0']
  %s0 = inlined_call_operand.hbm [shape: s32[2], index: 0, kind: input, shape index: {}]
  %s1 = inlined_call_operand.hbm [shape: f32[16,128], index: 1, kind: input, shape index: {}]
  %s2 = inlined_call_operand.hbm [shape: bf16[16,128], index: 2, kind: input, shape index: {}]
  %s3 = inlined_call_operand.hbm [shape: bf16[16,128], index: 3, kind: input, shape index: {}]
  %s4 = inlined_call_operand.hbm [shape: bf16[128,128], index: 4, kind: input, shape index: {}]
  %s5 = inlined_call_operand.hbm [shape: bf16[128,256], index: 5, kind: input, shape index: {}]
  %s6 = inlined_call_operand.hbm [shape: bf16[128,128], index: 6, kind: input, shape index: {}]
  %s7 = inlined_call_operand.hbm [shape: bf16[128,128], index: 7, kind: input, shape index: {}]
  %s8 = inlined_call_operand.hbm [shape: bf16[128,256], index: 8, kind: input, shape index: {}]
  %s9 = inlined_call_operand.hbm [shape: bf16[128,128], index: 9, kind: input, shape index: {}]
  %s10 = inlined_call_operand.vmem [shape: f32[3,128], index: 10, kind: input, shape index: {}]
  %s11 = inlined_call_operand.vmem [shape: f32[3,128], index: 11, kind: input, shape index: {}]
  %s12 = inlined_call_operand.hbm [shape: bf16[128,256], index: 12, kind: input, shape index: {}]
  %s13 = inlined_call_operand.vmem [shape: f32[1,256], index: 13, kind: input, shape index: {}]
  %s14 = inlined_call_operand.hbm [shape: bf16[256,128], index: 14, kind: input, shape index: {}]
  %s15 = inlined_call_operand.vmem [shape: f32[1,128], index: 15, kind: input, shape index: {}]
  %s16 = inlined_call_operand.hbm [shape: f32[16,128], index: 16, kind: output, shape index: {}]
  %s17 = sld [smem:[#allocation0]]
  $region137: #{tpu_custom_call.1} parent=0
    _
  %s19 = ssub.s32 1, %s17
  %s20 = scalar_select 0, %s19, %s17
  %22 = dma.hbm_to_smem %s0, 16, [#allocation3], [#allocation2]
  %23 = dma.done [#allocation2], 16
  %24 = sfence
  $region1: #{tpu_custom_call.1} parent=0
    #allocation4 [shape = 'u8[8192]{0}', space=vmem, size = 0x2000, scoped, tag = 'input window, operand 1']
    #allocation5 [shape = 's32[2]{0}', space=sflag, size = 0x8, scoped, tag = 'scoped memory for tpu_custom_call.1']
    #allocation6 [shape = 's32[2]{0}', space=sflag, size = 0x8, scoped, tag = 'scoped memory for tpu_custom_call.1']
    #allocation7 [shape = 'u8[4096]{0}', space=vmem, size = 0x1000, scoped, tag = 'input window, operand 2']
    #allocation8 [shape = 's32[2]{0}', space=sflag, size = 0x8, scoped, tag = 'scoped memory for tpu_custom_call.1']
    #allocation9 [shape = 'u8[4096]{0}', space=vmem, size = 0x1000, scoped, tag = 'input window, operand 3']
    #allocation10 [shape = 'u8[32768]{0}', space=vmem, size = 0x8000, scoped, tag = 'input window, operand 4, single buffered']
    #allocation11 [shape = 's32[1]{0}', space=sflag, size = 0x4, scoped, tag = 'scoped memory for tpu_custom_call.1']
    #allocation12 [shape = 'u8[65536]{0}', space=vmem, size = 0x10000, scoped, tag = 'input window, operand 5, single buffered']
    #allocation13 [shape = 'u8[32768]{0}', space=vmem, size = 0x8000, scoped, tag = 'input window, operand 6, single buffered']
    #allocation14 [shape = 's32[1]{0}', space=sflag, size = 0x4, scoped, tag = 'scoped memory for tpu_custom_call.1']
    #allocation15 [shape = 'u8[32768]{0}', space=vmem, size = 0x8000, scoped, tag = 'input window, operand 7, single buffered']
    #allocation16 [shape = 'u8[65536]{0}', space=vmem, size = 0x10000, scoped, tag = 'input window, operand 8, single buffered']
    #allocation17 [shape = 's32[1]{0}', space=sflag, size = 0x4, scoped, tag = 'scoped memory for tpu_custom_call.1']
    #allocation18 [shape = 'u8[32768]{0}', space=vmem, size = 0x8000, scoped, tag = 'input window, operand 9, single buffered']
    #allocation19 [shape = 'u8[65536]{0}', space=vmem, size = 0x10000, scoped, tag = 'input window, operand 12, single buffered']
    #allocation20 [shape = 's32[1]{0}', space=sflag, size = 0x4, scoped, tag = 'scoped memory for tpu_custom_call.1']
    #allocation21 [shape = 'u8[65536]{0}', space=vmem, size = 0x10000, scoped, tag = 'input window, operand 14, single buffered']
    #allocation22 [shape = 'u8[8192]{0}', space=vmem, size = 0x2000, scoped, tag = 'output window, operand 0']
    %25 = vsyncpa [#allocation5], 0
    %s26 = scalar_lea.sflag [#allocation5], 1
    %27 = vsyncpa %s26, 0
    %28 = vsyncpa [#allocation8], 0
    %s29 = scalar_lea.sflag [#allocation8], 1
    %30 = vsyncpa %s29, 0
    %31 = vsyncpa [#allocation11], 0
    %32 = vsyncpa [#allocation14], 0
    %33 = vsyncpa [#allocation17], 0
    %34 = vsyncpa [#allocation20], 0
    %35 = vsyncpa [#allocation6], 0
    %s36 = scalar_lea.sflag [#allocation6], 1
    %37 = vsyncpa %s36, 0
    loop: start=0, step=1, limit=4
    $region2: #{tpu_custom_call.1} parent=1 // loop_pre_header
      _
    $region3: #{tpu_custom_call.1} parent=1 // loop_header
      %s39 = sphi 0, %s43
      %p40 = scmp.ge.s32.totalorder %s39, 4
      %s49 = sphi 0, %s51
      %s52 = sphi 0, %s49
      %s53 = sphi 0, %s52
      %s69 = sphi 0, %s53
      %s75 = sphi 0, %s77
      %s78 = sphi 0, %s75
      %s79 = sphi 0, %s78
      %s95 = sphi 0, %s79
      %s101 = sphi 0, %s103
      %s104 = sphi 0, %s101
      %s105 = sphi 0, %s104
      %s121 = sphi 0, %s105
      %s125 = sphi 0, %s125
      %s127 = sphi 0, %s125
      %s128 = sphi 0, %s127
      %s142 = sphi 0, %s128
      %s146 = sphi 0, %s146
      %s148 = sphi 0, %s146
      %s149 = sphi 0, %s148
      %s163 = sphi 0, %s149
      %s167 = sphi 0, %s167
      %s169 = sphi 0, %s167
      %s170 = sphi 0, %s169
      %s184 = sphi 0, %s170
      %s188 = sphi 0, %s188
      %s190 = sphi 0, %s188
      %s191 = sphi 0, %s190
      %s205 = sphi 0, %s191
      %s209 = sphi 0, %s209
      %s211 = sphi 0, %s209
      %s212 = sphi 0, %s211
      %s226 = sphi 0, %s212
      %s230 = sphi 0, %s230
      %s232 = sphi 0, %s230
      %s233 = sphi 0, %s232
      %s247 = sphi 0, %s233
      %s251 = sphi 0, %s251
      %s253 = sphi 0, %s251
      %s254 = sphi 0, %s253
      %s268 = sphi 0, %s254
      %s272 = sphi 0, %s272
      %s274 = sphi 0, %s272
      %s275 = sphi 0, %s274
      %s289 = sphi 0, %s275
      %s293 = sphi 0, %s293
      %s295 = sphi 0, %s293
      %s296 = sphi 0, %s295
      %s310 = sphi 0, %s296
      %s314 = sphi 0, %s314
      %s316 = sphi 0, %s314
      %s317 = sphi 0, %s316
      %s331 = sphi 0, %s317
      %s335 = sphi 0, %s335
      %s337 = sphi 0, %s335
      %s338 = sphi 0, %s337
      %s352 = sphi 0, %s338
      %s356 = sphi 0, %s356
      %s358 = sphi 0, %s356
      %s359 = sphi 0, %s358
      %s373 = sphi 0, %s359
      %s379 = sphi 0, %s381
      %s382 = sphi 0, %s379
      %s383 = sphi 0, %s382
      %s399 = sphi 0, %s383
    $region4: #{tpu_custom_call.1} parent=1 // loop_header_branch
      %42 = sbr.rel (%p40) target = $region8
    $region5: #{tpu_custom_call.1} parent=1 // loop_body
      %s44 = ssub.s32 %s39, 1
      %s45 = ssub.s32 %s39, 2
      %s46 = sadd.s32 %s39, 1
      %s47 = ssub.s32 %s39, %s46
      %p48 = scmp.eq.s32.totalorder %s47, 0
      %s50 = sadd.s32 %s49, 1
      %s51 = scalar_select %p48, %s49, %s50
      %p54 = pneg %p48
      %p55 = scmp.eq.s32.totalorder %s39, 1
      %p56 = por %p54, %p55
      %p57 = scmp.ne.s32.totalorder %s49, %s52
      %p58 = scmp.eq.s32.totalorder %s39, 0
      %p59 = por %p57, %p58
      %p60 = scmp.ne.s32.totalorder %s49, %s52
      %p61 = scmp.eq.s32.totalorder %s44, 1
      %p62 = por %p60, %p61
      %p63 = scmp.ne.s32.totalorder %s52, %s53
      %p64 = scmp.eq.s32.totalorder %s44, 0
      %p65 = por %p63, %p64
      %p66 = scmp.ne.s32.totalorder %s52, %s53
      %p67 = scmp.eq.s32.totalorder %s45, 1
      %p68 = por %p66, %p67
      %p70 = scmp.ne.s32.totalorder %s53, %s69
      %p71 = scmp.eq.s32.totalorder %s45, 0
      %p72 = por %p70, %p71
      %s73 = ssub.s32 %s39, %s46
      %p74 = scmp.eq.s32.totalorder %s73, 0
      %s76 = sadd.s32 %s75, 1
      %s77 = scalar_select %p74, %s75, %s76
      %p80 = pneg %p74
      %p81 = scmp.eq.s32.totalorder %s39, 1
      %p82 = por %p80, %p81
      %p83 = scmp.ne.s32.totalorder %s75, %s78
      %p84 = scmp.eq.s32.totalorder %s39, 0
      %p85 = por %p83, %p84
      %p86 = scmp.ne.s32.totalorder %s75, %s78
      %p87 = scmp.eq.s32.totalorder %s44, 1
      %p88 = por %p86, %p87
      %p89 = scmp.ne.s32.totalorder %s78, %s79
      %p90 = scmp.eq.s32.totalorder %s44, 0
      %p91 = por %p89, %p90
      %p92 = scmp.ne.s32.totalorder %s78, %s79
      %p93 = scmp.eq.s32.totalorder %s45, 1
      %p94 = por %p92, %p93
      %p96 = scmp.ne.s32.totalorder %s79, %s95
      %p97 = scmp.eq.s32.totalorder %s45, 0
      %p98 = por %p96, %p97
      %s99 = ssub.s32 %s39, %s46
      %p100 = scmp.eq.s32.totalorder %s99, 0
      %s102 = sadd.s32 %s101, 1
      %s103 = scalar_select %p100, %s101, %s102
      %p106 = pneg %p100
      %p107 = scmp.eq.s32.totalorder %s39, 1
      %p108 = por %p106, %p107
      %p109 = scmp.ne.s32.totalorder %s101, %s104
      %p110 = scmp.eq.s32.totalorder %s39, 0
      %p111 = por %p109, %p110
      %p112 = scmp.ne.s32.totalorder %s101, %s104
      %p113 = scmp.eq.s32.totalorder %s44, 1
      %p114 = por %p112, %p113
      %p115 = scmp.ne.s32.totalorder %s104, %s105
      %p116 = scmp.eq.s32.totalorder %s44, 0
      %p117 = por %p115, %p116
      %p118 = scmp.ne.s32.totalorder %s104, %s105
      %p119 = scmp.eq.s32.totalorder %s45, 1
      %p120 = por %p118, %p119
      %p122 = scmp.ne.s32.totalorder %s105, %s121
      %p123 = scmp.eq.s32.totalorder %s45, 0
      %p124 = por %p122, %p123
      %s126 = sadd.s32 %s125, 1
      %p129 = scmp.eq.s32.totalorder %s39, 1
      %p130 = scmp.ne.s32.totalorder %s125, %s127
      %p131 = scmp.eq.s32.totalorder %s39, 0
      %p132 = por %p130, %p131
      %p133 = scmp.ne.s32.totalorder %s125, %s127
      %p134 = scmp.eq.s32.totalorder %s44, 1
      %p135 = por %p133, %p134
      %p136 = scmp.ne.s32.totalorder %s127, %s128
      %p137 = scmp.eq.s32.totalorder %s44, 0
      %p138 = por %p136, %p137
      %p139 = scmp.ne.s32.totalorder %s127, %s128
      %p140 = scmp.eq.s32.totalorder %s45, 1
      %p141 = por %p139, %p140
      %p143 = scmp.ne.s32.totalorder %s128, %s142
      %p144 = scmp.eq.s32.totalorder %s45, 0
      %p145 = por %p143, %p144
      %s147 = sadd.s32 %s146, 1
      %p150 = scmp.eq.s32.totalorder %s39, 1
      %p151 = scmp.ne.s32.totalorder %s146, %s148
      %p152 = scmp.eq.s32.totalorder %s39, 0
      %p153 = por %p151, %p152
      %p154 = scmp.ne.s32.totalorder %s146, %s148
      %p155 = scmp.eq.s32.totalorder %s44, 1
      %p156 = por %p154, %p155
      %p157 = scmp.ne.s32.totalorder %s148, %s149
      %p158 = scmp.eq.s32.totalorder %s44, 0
      %p159 = por %p157, %p158
      %p160 = scmp.ne.s32.totalorder %s148, %s149
      %p161 = scmp.eq.s32.totalorder %s45, 1
      %p162 = por %p160, %p161
      %p164 = scmp.ne.s32.totalorder %s149, %s163
      %p165 = scmp.eq.s32.totalorder %s45, 0
      %p166 = por %p164, %p165
      %s168 = sadd.s32 %s167, 1
      %p171 = scmp.eq.s32.totalorder %s39, 1
      %p172 = scmp.ne.s32.totalorder %s167, %s169
      %p173 = scmp.eq.s32.totalorder %s39, 0
      %p174 = por %p172, %p173
      %p175 = scmp.ne.s32.totalorder %s167, %s169
      %p176 = scmp.eq.s32.totalorder %s44, 1
      %p177 = por %p175, %p176
      %p178 = scmp.ne.s32.totalorder %s169, %s170
      %p179 = scmp.eq.s32.totalorder %s44, 0
      %p180 = por %p178, %p179
      %p181 = scmp.ne.s32.totalorder %s169, %s170
      %p182 = scmp.eq.s32.totalorder %s45, 1
      %p183 = por %p181, %p182
      %p185 = scmp.ne.s32.totalorder %s170, %s184
      %p186 = scmp.eq.s32.totalorder %s45, 0
      %p187 = por %p185, %p186
      %s189 = sadd.s32 %s188, 1
      %p192 = scmp.eq.s32.totalorder %s39, 1
      %p193 = scmp.ne.s32.totalorder %s188, %s190
      %p194 = scmp.eq.s32.totalorder %s39, 0
      %p195 = por %p193, %p194
      %p196 = scmp.ne.s32.totalorder %s188, %s190
      %p197 = scmp.eq.s32.totalorder %s44, 1
      %p198 = por %p196, %p197
      %p199 = scmp.ne.s32.totalorder %s190, %s191
      %p200 = scmp.eq.s32.totalorder %s44, 0
      %p201 = por %p199, %p200
      %p202 = scmp.ne.s32.totalorder %s190, %s191
      %p203 = scmp.eq.s32.totalorder %s45, 1
      %p204 = por %p202, %p203
      %p206 = scmp.ne.s32.totalorder %s191, %s205
      %p207 = scmp.eq.s32.totalorder %s45, 0
      %p208 = por %p206, %p207
      %s210 = sadd.s32 %s209, 1
      %p213 = scmp.eq.s32.totalorder %s39, 1
      %p214 = scmp.ne.s32.totalorder %s209, %s211
      %p215 = scmp.eq.s32.totalorder %s39, 0
      %p216 = por %p214, %p215
      %p217 = scmp.ne.s32.totalorder %s209, %s211
      %p218 = scmp.eq.s32.totalorder %s44, 1
      %p219 = por %p217, %p218
      %p220 = scmp.ne.s32.totalorder %s211, %s212
      %p221 = scmp.eq.s32.totalorder %s44, 0
      %p222 = por %p220, %p221
      %p223 = scmp.ne.s32.totalorder %s211, %s212
      %p224 = scmp.eq.s32.totalorder %s45, 1
      %p225 = por %p223, %p224
      %p227 = scmp.ne.s32.totalorder %s212, %s226
      %p228 = scmp.eq.s32.totalorder %s45, 0
      %p229 = por %p227, %p228
      %s231 = sadd.s32 %s230, 1
      %p234 = scmp.eq.s32.totalorder %s39, 1
      %p235 = scmp.ne.s32.totalorder %s230, %s232
      %p236 = scmp.eq.s32.totalorder %s39, 0
      %p237 = por %p235, %p236
      %p238 = scmp.ne.s32.totalorder %s230, %s232
      %p239 = scmp.eq.s32.totalorder %s44, 1
      %p240 = por %p238, %p239
      %p241 = scmp.ne.s32.totalorder %s232, %s233
      %p242 = scmp.eq.s32.totalorder %s44, 0
      %p243 = por %p241, %p242
      %p244 = scmp.ne.s32.totalorder %s232, %s233
      %p245 = scmp.eq.s32.totalorder %s45, 1
      %p246 = por %p244, %p245
      %p248 = scmp.ne.s32.totalorder %s233, %s247
      %p249 = scmp.eq.s32.totalorder %s45, 0
      %p250 = por %p248, %p249
      %s252 = sadd.s32 %s251, 1
      %p255 = scmp.eq.s32.totalorder %s39, 1
      %p256 = scmp.ne.s32.totalorder %s251, %s253
      %p257 = scmp.eq.s32.totalorder %s39, 0
      %p258 = por %p256, %p257
      %p259 = scmp.ne.s32.totalorder %s251, %s253
      %p260 = scmp.eq.s32.totalorder %s44, 1
      %p261 = por %p259, %p260
      %p262 = scmp.ne.s32.totalorder %s253, %s254
      %p263 = scmp.eq.s32.totalorder %s44, 0
      %p264 = por %p262, %p263
      %p265 = scmp.ne.s32.totalorder %s253, %s254
      %p266 = scmp.eq.s32.totalorder %s45, 1
      %p267 = por %p265, %p266
      %p269 = scmp.ne.s32.totalorder %s254, %s268
      %p270 = scmp.eq.s32.totalorder %s45, 0
      %p271 = por %p269, %p270
      %s273 = sadd.s32 %s272, 1
      %p276 = scmp.eq.s32.totalorder %s39, 1
      %p277 = scmp.ne.s32.totalorder %s272, %s274
      %p278 = scmp.eq.s32.totalorder %s39, 0
      %p279 = por %p277, %p278
      %p280 = scmp.ne.s32.totalorder %s272, %s274
      %p281 = scmp.eq.s32.totalorder %s44, 1
      %p282 = por %p280, %p281
      %p283 = scmp.ne.s32.totalorder %s274, %s275
      %p284 = scmp.eq.s32.totalorder %s44, 0
      %p285 = por %p283, %p284
      %p286 = scmp.ne.s32.totalorder %s274, %s275
      %p287 = scmp.eq.s32.totalorder %s45, 1
      %p288 = por %p286, %p287
      %p290 = scmp.ne.s32.totalorder %s275, %s289
      %p291 = scmp.eq.s32.totalorder %s45, 0
      %p292 = por %p290, %p291
      %s294 = sadd.s32 %s293, 1
      %p297 = scmp.eq.s32.totalorder %s39, 1
      %p298 = scmp.ne.s32.totalorder %s293, %s295
      %p299 = scmp.eq.s32.totalorder %s39, 0
      %p300 = por %p298, %p299
      %p301 = scmp.ne.s32.totalorder %s293, %s295
      %p302 = scmp.eq.s32.totalorder %s44, 1
      %p303 = por %p301, %p302
      %p304 = scmp.ne.s32.totalorder %s295, %s296
      %p305 = scmp.eq.s32.totalorder %s44, 0
      %p306 = por %p304, %p305
      %p307 = scmp.ne.s32.totalorder %s295, %s296
      %p308 = scmp.eq.s32.totalorder %s45, 1
      %p309 = por %p307, %p308
      %p311 = scmp.ne.s32.totalorder %s296, %s310
      %p312 = scmp.eq.s32.totalorder %s45, 0
      %p313 = por %p311, %p312
      %s315 = sadd.s32 %s314, 1
      %p318 = scmp.eq.s32.totalorder %s39, 1
      %p319 = scmp.ne.s32.totalorder %s314, %s316
      %p320 = scmp.eq.s32.totalorder %s39, 0
      %p321 = por %p319, %p320
      %p322 = scmp.ne.s32.totalorder %s314, %s316
      %p323 = scmp.eq.s32.totalorder %s44, 1
      %p324 = por %p322, %p323
      %p325 = scmp.ne.s32.totalorder %s316, %s317
      %p326 = scmp.eq.s32.totalorder %s44, 0
      %p327 = por %p325, %p326
      %p328 = scmp.ne.s32.totalorder %s316, %s317
      %p329 = scmp.eq.s32.totalorder %s45, 1
      %p330 = por %p328, %p329
      %p332 = scmp.ne.s32.totalorder %s317, %s331
      %p333 = scmp.eq.s32.totalorder %s45, 0
      %p334 = por %p332, %p333
      %s336 = sadd.s32 %s335, 1
      %p339 = scmp.eq.s32.totalorder %s39, 1
      %p340 = scmp.ne.s32.totalorder %s335, %s337
      %p341 = scmp.eq.s32.totalorder %s39, 0
      %p342 = por %p340, %p341
      %p343 = scmp.ne.s32.totalorder %s335, %s337
      %p344 = scmp.eq.s32.totalorder %s44, 1
      %p345 = por %p343, %p344
      %p346 = scmp.ne.s32.totalorder %s337, %s338
      %p347 = scmp.eq.s32.totalorder %s44, 0
      %p348 = por %p346, %p347
      %p349 = scmp.ne.s32.totalorder %s337, %s338
      %p350 = scmp.eq.s32.totalorder %s45, 1
      %p351 = por %p349, %p350
      %p353 = scmp.ne.s32.totalorder %s338, %s352
      %p354 = scmp.eq.s32.totalorder %s45, 0
      %p355 = por %p353, %p354
      %s357 = sadd.s32 %s356, 1
      %p360 = scmp.eq.s32.totalorder %s39, 1
      %p361 = scmp.ne.s32.totalorder %s356, %s358
      %p362 = scmp.eq.s32.totalorder %s39, 0
      %p363 = por %p361, %p362
      %p364 = scmp.ne.s32.totalorder %s356, %s358
      %p365 = scmp.eq.s32.totalorder %s44, 1
      %p366 = por %p364, %p365
      %p367 = scmp.ne.s32.totalorder %s358, %s359
      %p368 = scmp.eq.s32.totalorder %s44, 0
      %p369 = por %p367, %p368
      %p370 = scmp.ne.s32.totalorder %s358, %s359
      %p371 = scmp.eq.s32.totalorder %s45, 1
      %p372 = por %p370, %p371
      %p374 = scmp.ne.s32.totalorder %s359, %s373
      %p375 = scmp.eq.s32.totalorder %s45, 0
      %p376 = por %p374, %p375
      %s377 = ssub.s32 %s39, %s46
      %p378 = scmp.eq.s32.totalorder %s377, 0
      %s380 = sadd.s32 %s379, 1
      %s381 = scalar_select %p378, %s379, %s380
      %p384 = pneg %p378
      %p385 = scmp.eq.s32.totalorder %s39, 1
      %p386 = por %p384, %p385
      %p387 = scmp.ne.s32.totalorder %s379, %s382
      %p388 = scmp.eq.s32.totalorder %s39, 0
      %p389 = por %p387, %p388
      %p390 = scmp.ne.s32.totalorder %s379, %s382
      %p391 = scmp.eq.s32.totalorder %s44, 1
      %p392 = por %p390, %p391
      %p393 = scmp.ne.s32.totalorder %s382, %s383
      %p394 = scmp.eq.s32.totalorder %s44, 0
      %p395 = por %p393, %p394
      %p396 = scmp.ne.s32.totalorder %s382, %s383
      %p397 = scmp.eq.s32.totalorder %s45, 1
      %p398 = por %p396, %p397
      %p400 = scmp.ne.s32.totalorder %s383, %s399
      %p401 = scmp.eq.s32.totalorder %s45, 0
      %p402 = por %p400, %p401
      %p403 = scmp.le.s32.totalorder 1, %s39
      %p404 = scmp.lt.s32.totalorder %s39, 3
      %p405 = pnand %p403, %p404
      %p406 = pneg %p405
      // Predicated region
      $region9: #{tpu_custom_call.1} parent=5 // pred_check
        _
      $region10: #{tpu_custom_call.1} parent=5 // pred_check_branch
        %408 = sbr.rel (%p405) target = $region12
      $region11: #{tpu_custom_call.1} parent=5 // pred_region
        %s409 = ssub.s32 %s39, 1
        // Predicated region
        $region13: #{tpu_custom_call.1} parent=11 // pred_check
          %p410 = pneg %p138
        $region14: #{tpu_custom_call.1} parent=11 // pred_check_branch
          %412 = sbr.rel (%p410) target = $region16
        $region15: #{tpu_custom_call.1} parent=11 // pred_region
          %s414 = ssub.s32 1024, 1024
          %415 = vsyncadd [#allocation11], %s414
          %s416 = sshll.u32 [#allocation10], 4
          %s417 = int_to_ptr.vmem [resolvable:$true] %s416
          %422 = dma.hbm_to_vmem [thread:$0]  %s4, 1024, %s417, [#allocation11], 64, 64, 4
        $region16: #{tpu_custom_call.1} parent=11 // pred_fallthru
          _
        // Predicated region
        $region17: #{tpu_custom_call.1} parent=11 // pred_check
          %p423 = pneg %p159
        $region18: #{tpu_custom_call.1} parent=11 // pred_check_branch
          %425 = sbr.rel (%p423) target = $region20
        $region19: #{tpu_custom_call.1} parent=11 // pred_region
          %s427 = ssub.s32 2048, 2048
          %428 = vsyncadd [#allocation11], %s427
          %s429 = sshll.u32 [#allocation12], 4
          %s430 = int_to_ptr.vmem [resolvable:$true] %s429
          %435 = dma.hbm_to_vmem [thread:$0]  %s5, 2048, %s430, [#allocation11], 128, 128, 8
        $region20: #{tpu_custom_call.1} parent=11 // pred_fallthru
          _
        // Predicated region
        $region21: #{tpu_custom_call.1} parent=11 // pred_check
          %p436 = pneg %p180
        $region22: #{tpu_custom_call.1} parent=11 // pred_check_branch
          %438 = sbr.rel (%p436) target = $region24
        $region23: #{tpu_custom_call.1} parent=11 // pred_region
          %s440 = ssub.s32 1024, 1024
          %441 = vsyncadd [#allocation14], %s440
          %s442 = sshll.u32 [#allocation13], 4
          %s443 = int_to_ptr.vmem [resolvable:$true] %s442
          %448 = dma.hbm_to_vmem [thread:$0]  %s6, 1024, %s443, [#allocation14], 64, 64, 4
        $region24: #{tpu_custom_call.1} parent=11 // pred_fallthru
          _
        // Predicated region
        $region25: #{tpu_custom_call.1} parent=11 // pred_check
          %p449 = pneg %p201
        $region26: #{tpu_custom_call.1} parent=11 // pred_check_branch
          %451 = sbr.rel (%p449) target = $region28
        $region27: #{tpu_custom_call.1} parent=11 // pred_region
          %s453 = ssub.s32 1024, 1024
          %454 = vsyncadd [#allocation14], %s453
          %s455 = sshll.u32 [#allocation15], 4
          %s456 = int_to_ptr.vmem [resolvable:$true] %s455
          %461 = dma.hbm_to_vmem [thread:$0]  %s7, 1024, %s456, [#allocation14], 64, 64, 4
        $region28: #{tpu_custom_call.1} parent=11 // pred_fallthru
          _
        // Predicated region
        $region29: #{tpu_custom_call.1} parent=11 // pred_check
          %p462 = pneg %p222
        $region30: #{tpu_custom_call.1} parent=11 // pred_check_branch
          %464 = sbr.rel (%p462) target = $region32
        $region31: #{tpu_custom_call.1} parent=11 // pred_region
          %s466 = ssub.s32 2048, 2048
          %467 = vsyncadd [#allocation17], %s466
          %s468 = sshll.u32 [#allocation16], 4
          %s469 = int_to_ptr.vmem [resolvable:$true] %s468
          %474 = dma.hbm_to_vmem [thread:$0]  %s8, 2048, %s469, [#allocation17], 128, 128, 8
        $region32: #{tpu_custom_call.1} parent=11 // pred_fallthru
          _
        // Predicated region
        $region33: #{tpu_custom_call.1} parent=11 // pred_check
          %p475 = pneg %p243
        $region34: #{tpu_custom_call.1} parent=11 // pred_check_branch
          %477 = sbr.rel (%p475) target = $region36
        $region35: #{tpu_custom_call.1} parent=11 // pred_region
          %s479 = ssub.s32 1024, 1024
          %480 = vsyncadd [#allocation17], %s479
          %s481 = sshll.u32 [#allocation18], 4
          %s482 = int_to_ptr.vmem [resolvable:$true] %s481
          %487 = dma.hbm_to_vmem [thread:$0]  %s9, 1024, %s482, [#allocation17], 64, 64, 4
        $region36: #{tpu_custom_call.1} parent=11 // pred_fallthru
          _
        // Predicated region
        $region37: #{tpu_custom_call.1} parent=11 // pred_check
          %p488 = pneg %p264
        $region38: #{tpu_custom_call.1} parent=11 // pred_check_branch
          %490 = sbr.rel (%p488) target = $region40
        $region39: #{tpu_custom_call.1} parent=11 // pred_region
          _
        $region40: #{tpu_custom_call.1} parent=11 // pred_fallthru
          _
        // Predicated region
        $region41: #{tpu_custom_call.1} parent=11 // pred_check
          %p491 = pneg %p285
        $region42: #{tpu_custom_call.1} parent=11 // pred_check_branch
          %493 = sbr.rel (%p491) target = $region44
        $region43: #{tpu_custom_call.1} parent=11 // pred_region
          _
        $region44: #{tpu_custom_call.1} parent=11 // pred_fallthru
          _
        // Predicated region
        $region45: #{tpu_custom_call.1} parent=11 // pred_check
          %p494 = pneg %p306
        $region46: #{tpu_custom_call.1} parent=11 // pred_check_branch
          %496 = sbr.rel (%p494) target = $region48
        $region47: #{tpu_custom_call.1} parent=11 // pred_region
          %s498 = ssub.s32 2048, 2048
          %499 = vsyncadd [#allocation20], %s498
          %s500 = sshll.u32 [#allocation19], 4
          %s501 = int_to_ptr.vmem [resolvable:$true] %s500
          %506 = dma.hbm_to_vmem [thread:$0]  %s12, 2048, %s501, [#allocation20], 128, 128, 8
        $region48: #{tpu_custom_call.1} parent=11 // pred_fallthru
          _
        // Predicated region
        $region49: #{tpu_custom_call.1} parent=11 // pred_check
          %p507 = pneg %p327
        $region50: #{tpu_custom_call.1} parent=11 // pred_check_branch
          %509 = sbr.rel (%p507) target = $region52
        $region51: #{tpu_custom_call.1} parent=11 // pred_region
          _
        $region52: #{tpu_custom_call.1} parent=11 // pred_fallthru
          _
        // Predicated region
        $region53: #{tpu_custom_call.1} parent=11 // pred_check
          %p510 = pneg %p348
        $region54: #{tpu_custom_call.1} parent=11 // pred_check_branch
          %512 = sbr.rel (%p510) target = $region56
        $region55: #{tpu_custom_call.1} parent=11 // pred_region
          %s514 = ssub.s32 2048, 2048
          %515 = vsyncadd [#allocation20], %s514
          %s516 = sshll.u32 [#allocation21], 4
          %s517 = int_to_ptr.vmem [resolvable:$true] %s516
          %522 = dma.hbm_to_vmem [thread:$0]  %s14, 2048, %s517, [#allocation20], 64, 64, 4
        $region56: #{tpu_custom_call.1} parent=11 // pred_fallthru
          _
        // Predicated region
        $region57: #{tpu_custom_call.1} parent=11 // pred_check
          %p523 = pneg %p369
        $region58: #{tpu_custom_call.1} parent=11 // pred_check_branch
          %525 = sbr.rel (%p523) target = $region60
        $region59: #{tpu_custom_call.1} parent=11 // pred_region
          _
        $region60: #{tpu_custom_call.1} parent=11 // pred_fallthru
          _
      $region12: #{tpu_custom_call.1} parent=5 // pred_fallthru
        _
      %p526 = scmp.lt.s32.totalorder %s39, 2
      // Predicated region
      $region61: #{tpu_custom_call.1} parent=5 // pred_check
        %p527 = pneg %p526
      $region62: #{tpu_custom_call.1} parent=5 // pred_check_branch
        %529 = sbr.rel (%p527) target = $region64
      $region63: #{tpu_custom_call.1} parent=5 // pred_region
        // Predicated region
        $region65: #{tpu_custom_call.1} parent=63 // pred_check
          %p530 = pneg %p59
        $region66: #{tpu_custom_call.1} parent=63 // pred_check_branch
          %532 = sbr.rel (%p530) target = $region68
        $region67: #{tpu_custom_call.1} parent=63 // pred_region
          %s533 = sand.u32 %s49, 1
          %s534 = scalar_lea.sflag [#allocation5], %s533
          %s535 = sand.u32 %s49, 1
          %s536 = smul.addr %s535, 8
          %s537 = scalar_lea.vmem [#allocation4], %s536
          %s539 = ssub.s32 128, 128
          %540 = vsyncadd %s534, %s539
          %s541 = smul.addr %s39, 128
          %s542 = scalar_lea.hbm %s1, %s541
          %s544 = sshll.u32 %s537, 4
          %s545 = int_to_ptr.vmem [resolvable:$true] %s544
          %547 = dma.hbm_to_vmem [thread:$0]  %s542, 128, %s545, %s534
        $region68: #{tpu_custom_call.1} parent=63 // pred_fallthru
          _
        // Predicated region
        $region69: #{tpu_custom_call.1} parent=63 // pred_check
          %p548 = pneg %p85
        $region70: #{tpu_custom_call.1} parent=63 // pred_check_branch
          %550 = sbr.rel (%p548) target = $region72
        $region71: #{tpu_custom_call.1} parent=63 // pred_region
          %s551 = sand.u32 %s39, 1
          %s552 = scalar_lea.sflag [#allocation8], %s551
          %s553 = sand.u32 %s75, 1
          %s554 = smul.addr %s553, 4
          %s555 = scalar_lea.vmem [#allocation7], %s554
          %s557 = ssub.s32 64, 64
          %558 = vsyncadd %s552, %s557
          %s559 = smul.addr %s39, 64
          %s560 = scalar_lea.hbm %s2, %s559
          %s562 = sshll.u32 %s555, 4
          %s563 = int_to_ptr.vmem [resolvable:$true] %s562
          %565 = dma.hbm_to_vmem [thread:$0]  %s560, 64, %s563, %s552
        $region72: #{tpu_custom_call.1} parent=63 // pred_fallthru
          _
        // Predicated region
        $region73: #{tpu_custom_call.1} parent=63 // pred_check
          %p566 = pneg %p111
        $region74: #{tpu_custom_call.1} parent=63 // pred_check_branch
          %568 = sbr.rel (%p566) target = $region76
        $region75: #{tpu_custom_call.1} parent=63 // pred_region
          %s569 = sand.u32 %s39, 1
          %s570 = scalar_lea.sflag [#allocation8], %s569
          %s571 = sand.u32 %s101, 1
          %s572 = smul.addr %s571, 4
          %s573 = scalar_lea.vmem [#allocation9], %s572
          %s575 = ssub.s32 64, 64
          %576 = vsyncadd %s570, %s575
          %s577 = smul.addr %s39, 64
          %s578 = scalar_lea.hbm %s3, %s577
          %s580 = sshll.u32 %s573, 4
          %s581 = int_to_ptr.vmem [resolvable:$true] %s580
          %583 = dma.hbm_to_vmem [thread:$0]  %s578, 64, %s581, %s570
        $region76: #{tpu_custom_call.1} parent=63 // pred_fallthru
          _
      $region64: #{tpu_custom_call.1} parent=5 // pred_fallthru
        _
      %p584 = scmp.le.s32.totalorder 1, %s39
      %p585 = scmp.lt.s32.totalorder %s39, 3
      %p586 = pnand %p584, %p585
      %p587 = pneg %p586
      // Predicated region
      $region77: #{tpu_custom_call.1} parent=5 // pred_check
        _
      $region78: #{tpu_custom_call.1} parent=5 // pred_check_branch
        %589 = sbr.rel (%p586) target = $region80
      $region79: #{tpu_custom_call.1} parent=5 // pred_region
        %s590 = ssub.s32 %s39, 1
        %s591 = sand.u32 %s52, 1
        %s592 = scalar_lea.sflag [#allocation5], %s591
        %s593 = sand.u32 %s52, 1
        %s594 = smul.addr %s593, 8
        %s595 = scalar_lea.vmem [#allocation4], %s594
        // Predicated region
        $region81: #{tpu_custom_call.1} parent=79 // pred_check
          %p596 = pneg %p65
        $region82: #{tpu_custom_call.1} parent=79 // pred_check_branch
          %598 = sbr.rel (%p596) target = $region84
        $region83: #{tpu_custom_call.1} parent=79 // pred_region
          %599 = dma.done %s592, 128
        $region84: #{tpu_custom_call.1} parent=79 // pred_fallthru
          _
        %s600 = sand.u32 %s44, 1
        %s601 = scalar_lea.sflag [#allocation8], %s600
        %s602 = sand.u32 %s78, 1
        %s603 = smul.addr %s602, 4
        %s604 = scalar_lea.vmem [#allocation7], %s603
        // Predicated region
        $region85: #{tpu_custom_call.1} parent=79 // pred_check
          %p605 = pneg %p91
        $region86: #{tpu_custom_call.1} parent=79 // pred_check_branch
          %607 = sbr.rel (%p605) target = $region88
        $region87: #{tpu_custom_call.1} parent=79 // pred_region
          %608 = dma.done %s601, 64
        $region88: #{tpu_custom_call.1} parent=79 // pred_fallthru
          _
        %s609 = sand.u32 %s44, 1
        %s610 = scalar_lea.sflag [#allocation8], %s609
        %s611 = sand.u32 %s104, 1
        %s612 = smul.addr %s611, 4
        %s613 = scalar_lea.vmem [#allocation9], %s612
        // Predicated region
        $region89: #{tpu_custom_call.1} parent=79 // pred_check
          %p614 = pneg %p117
        $region90: #{tpu_custom_call.1} parent=79 // pred_check_branch
          %616 = sbr.rel (%p614) target = $region92
        $region91: #{tpu_custom_call.1} parent=79 // pred_region
          %617 = dma.done %s610, 64
        $region92: #{tpu_custom_call.1} parent=79 // pred_fallthru
          _
        // Predicated region
        $region93: #{tpu_custom_call.1} parent=79 // pred_check
          %p618 = pneg %p138
        $region94: #{tpu_custom_call.1} parent=79 // pred_check_branch
          %620 = sbr.rel (%p618) target = $region96
        $region95: #{tpu_custom_call.1} parent=79 // pred_region
          %621 = dma.done [#allocation11], 1024
        $region96: #{tpu_custom_call.1} parent=79 // pred_fallthru
          _
        // Predicated region
        $region97: #{tpu_custom_call.1} parent=79 // pred_check
          %p622 = pneg %p159
        $region98: #{tpu_custom_call.1} parent=79 // pred_check_branch
          %624 = sbr.rel (%p622) target = $region100
        $region99: #{tpu_custom_call.1} parent=79 // pred_region
          %625 = dma.done [#allocation11], 2048
        $region100: #{tpu_custom_call.1} parent=79 // pred_fallthru
          _
        // Predicated region
        $region101: #{tpu_custom_call.1} parent=79 // pred_check
          %p626 = pneg %p180
        $region102: #{tpu_custom_call.1} parent=79 // pred_check_branch
          %628 = sbr.rel (%p626) target = $region104
        $region103: #{tpu_custom_call.1} parent=79 // pred_region
          %629 = dma.done [#allocation14], 1024
        $region104: #{tpu_custom_call.1} parent=79 // pred_fallthru
          _
        // Predicated region
        $region105: #{tpu_custom_call.1} parent=79 // pred_check
          %p630 = pneg %p201
        $region106: #{tpu_custom_call.1} parent=79 // pred_check_branch
          %632 = sbr.rel (%p630) target = $region108
        $region107: #{tpu_custom_call.1} parent=79 // pred_region
          %633 = dma.done [#allocation14], 1024
        $region108: #{tpu_custom_call.1} parent=79 // pred_fallthru
          _
        // Predicated region
        $region109: #{tpu_custom_call.1} parent=79 // pred_check
          %p634 = pneg %p222
        $region110: #{tpu_custom_call.1} parent=79 // pred_check_branch
          %636 = sbr.rel (%p634) target = $region112
        $region111: #{tpu_custom_call.1} parent=79 // pred_region
          %637 = dma.done [#allocation17], 2048
        $region112: #{tpu_custom_call.1} parent=79 // pred_fallthru
          _
        // Predicated region
        $region113: #{tpu_custom_call.1} parent=79 // pred_check
          %p638 = pneg %p243
        $region114: #{tpu_custom_call.1} parent=79 // pred_check_branch
          %640 = sbr.rel (%p638) target = $region116
        $region115: #{tpu_custom_call.1} parent=79 // pred_region
          %641 = dma.done [#allocation17], 1024
        $region116: #{tpu_custom_call.1} parent=79 // pred_fallthru
          _
        // Predicated region
        $region117: #{tpu_custom_call.1} parent=79 // pred_check
          %p642 = pneg %p306
        $region118: #{tpu_custom_call.1} parent=79 // pred_check_branch
          %644 = sbr.rel (%p642) target = $region120
        $region119: #{tpu_custom_call.1} parent=79 // pred_region
          %645 = dma.done [#allocation20], 2048
        $region120: #{tpu_custom_call.1} parent=79 // pred_fallthru
          _
        // Predicated region
        $region121: #{tpu_custom_call.1} parent=79 // pred_check
          %p646 = pneg %p348
        $region122: #{tpu_custom_call.1} parent=79 // pred_check_branch
          %648 = sbr.rel (%p646) target = $region124
        $region123: #{tpu_custom_call.1} parent=79 // pred_region
          %649 = dma.done [#allocation20], 2048
        $region124: #{tpu_custom_call.1} parent=79 // pred_fallthru
          _
        %s650 = sand.u32 %s52, 1
        %s651 = scalar_lea.sflag [#allocation5], %s650
        %s652 = sand.u32 %s52, 1
        %s653 = smul.addr %s652, 8
        %s654 = scalar_lea.vmem [#allocation4], %s653
        %p655 = pneg %p65
        %p656 = pneg %p62
        %s657 = sand.u32 %s44, 1
        %s658 = scalar_lea.sflag [#allocation8], %s657
        %s659 = sand.u32 %s78, 1
        %s660 = smul.addr %s659, 4
        %s661 = scalar_lea.vmem [#allocation7], %s660
        %p662 = pneg %p91
        %p663 = pneg %p88
        %s664 = sand.u32 %s44, 1
        %s665 = scalar_lea.sflag [#allocation8], %s664
        %s666 = sand.u32 %s104, 1
        %s667 = smul.addr %s666, 4
        %s668 = scalar_lea.vmem [#allocation9], %s667
        %p669 = pneg %p117
        %p670 = pneg %p114
        %p671 = pneg %p138
        %p672 = pneg %p135
        %p673 = pneg %p159
        %p674 = pneg %p156
        %p675 = pneg %p180
        %p676 = pneg %p177
        %p677 = pneg %p201
        %p678 = pneg %p198
        %p679 = pneg %p222
        %p680 = pneg %p219
        %p681 = pneg %p243
        %p682 = pneg %p240
        %p683 = pneg %p264
        %p684 = pneg %p261
        %p685 = pneg %p285
        %p686 = pneg %p282
        %p687 = pneg %p306
        %p688 = pneg %p303
        %p689 = pneg %p327
        %p690 = pneg %p324
        %p691 = pneg %p348
        %p692 = pneg %p345
        %p693 = pneg %p369
        %p694 = pneg %p366
        %p695 = pneg %p395
        %p696 = pneg %p392
        %s697 = sand.u32 %s382, 1
        %s698 = scalar_lea.sflag [#allocation6], %s697
        %s699 = sand.u32 %s382, 1
        %s700 = smul.addr %s699, 8
        %s701 = scalar_lea.vmem [#allocation22], %s700
        %v703 = vld [vmem:[%s595] sm:$0xff]
        %v704 = vld [vmem:[%s604] sm:$0xf]
        %v705 = vld [vmem:[%s613] sm:$0xf]
        %v706 = vlaneseq
        %v707 = vshrl.u32 %v706, 7
        %v708 = vlaneseq
        %v709 = vand.u32 %v708, 127
        %vm710 = vcmp.le.s32.totalorder %v709, %v707
        %s711 = sld [smem:[#allocation3 + %s44]]
        %v712 = vstv %s711
        %vm713 = vcmp.lt.s32.totalorder %v709, %v712
        %v714 = vpack.c.bf16 %v703, %v703
        %v715 = vld [vmem:[#allocation10] sm:$0xf]
        %v716 = vld [vmem:[#allocation10 + $0x4] sm:$0xf]
        %v717 = vld [vmem:[#allocation10 + $0x8] sm:$0xf]
        %v718 = vld [vmem:[#allocation10 + $0xc] sm:$0xf]
        %v719 = vld [vmem:[#allocation10 + $0x10] sm:$0xf]
        %v720 = vld [vmem:[#allocation10 + $0x14] sm:$0xf]
        %v721 = vld [vmem:[#allocation10 + $0x18] sm:$0xf]
        %v722 = vld [vmem:[#allocation10 + $0x1c] sm:$0xf]
        %v723 = vld [vmem:[#allocation10 + $0x20] sm:$0xf]
        %v724 = vld [vmem:[#allocation10 + $0x24] sm:$0xf]
        %v725 = vld [vmem:[#allocation10 + $0x28] sm:$0xf]
        %v726 = vld [vmem:[#allocation10 + $0x2c] sm:$0xf]
        %v727 = vld [vmem:[#allocation10 + $0x30] sm:$0xf]
        %v728 = vld [vmem:[#allocation10 + $0x34] sm:$0xf]
        %v729 = vld [vmem:[#allocation10 + $0x38] sm:$0xf]
        %v730 = vld [vmem:[#allocation10 + $0x3c] sm:$0xf]
        %v747 = vunpack.c.l.b16 %v715
        %v748 = vunpack.c.l.b16 %v716
        %v749 = vunpack.c.l.b16 %v717
        %v750 = vunpack.c.l.b16 %v718
        %v751 = vunpack.c.l.b16 %v719
        %v752 = vunpack.c.l.b16 %v720
        %v753 = vunpack.c.l.b16 %v721
        %v754 = vunpack.c.l.b16 %v722
        %v755 = vunpack.c.l.b16 %v723
        %v756 = vunpack.c.l.b16 %v724
        %v757 = vunpack.c.l.b16 %v725
        %v758 = vunpack.c.l.b16 %v726
        %v759 = vunpack.c.l.b16 %v727
        %v760 = vunpack.c.l.b16 %v728
        %v761 = vunpack.c.l.b16 %v729
        %v762 = vunpack.c.l.b16 %v730
        %v763 = vpack.c.b16 %v748, %v747
        %v764 = vpack.c.b16 %v750, %v749
        %v765 = vpack.c.b16 %v752, %v751
        %v766 = vpack.c.b16 %v754, %v753
        %v767 = vpack.c.b16 %v756, %v755
        %v768 = vpack.c.b16 %v758, %v757
        %v769 = vpack.c.b16 %v760, %v759
        %v770 = vpack.c.b16 %v762, %v761
        %779 = vmatprep.subr.bf16.mxu0 0
        %780 = vmatpush1.bf16.msra.mxu0 %v770
        %781 = vmatprep.subr.bf16.mxu0 0
        %782 = vmatpush1.bf16.msra.mxu0 %v769
        %783 = vmatprep.subr.bf16.mxu0 0
        %784 = vmatpush1.bf16.msra.mxu0 %v768
        %785 = vmatprep.subr.bf16.mxu0 0
        %786 = vmatpush1.bf16.msra.mxu0 %v767
        %787 = vmatprep.subr.bf16.mxu0 0
        %788 = vmatpush1.bf16.msra.mxu0 %v766
        %789 = vmatprep.subr.bf16.mxu0 0
        %790 = vmatpush1.bf16.msra.mxu0 %v765
        %791 = vmatprep.subr.bf16.mxu0 0
        %792 = vmatpush1.bf16.msra.mxu0 %v764
        %793 = vmatprep.subr.bf16.mxu0 0
        %794 = vmatpush1.bf16.msra.mxu0 %v763
        %795 = vmatprep.subr.bf16.mxu0 0
        %796 = vmatpush2.bf16.msra.mxu0 0
        %797 = vmatprep.subr.bf16.mxu0 0
        %798 = vmatpush2.bf16.msra.mxu0 0
        %799 = vmatprep.subr.bf16.mxu0 0
        %800 = vmatpush2.bf16.msra.mxu0 0
        %801 = vmatprep.subr.bf16.mxu0 0
        %802 = vmatpush2.bf16.msra.mxu0 0
        %803 = vmatprep.subr.bf16.mxu0 0
        %804 = vmatpush2.bf16.msra.mxu0 0
        %805 = vmatprep.subr.bf16.mxu0 0
        %806 = vmatpush2.bf16.msra.mxu0 0
        %807 = vmatprep.subr.bf16.mxu0 0
        %808 = vmatpush2.bf16.msra.mxu0 0
        %809 = vmatprep.subr.bf16.mxu0 0
        %810 = vmatpush2.bf16.msra.mxu0 0
        %811 = vmatprep.mubr.bf16.mxu0 0
        %812 = vmatmul.mubr.bf16.gmra.mxu0 %v714
        %v813 = vpop.f32.mrf.mxu0
        %v814 = vadd.f32 0.0, %v813
        %v815 = vpop.f32.mrf.mxu0
        %v816 = vpop.f32.mrf.mxu0
        %v817 = vpop.f32.mrf.mxu0
        %818 = vdwg.mxu0
        %v819 = vld [vmem:[#allocation12] sm:$0xff]
        %v820 = vld [vmem:[#allocation12 + $0x8] sm:$0xff]
        %v821 = vld [vmem:[#allocation12 + $0x10] sm:$0xff]
        %v822 = vld [vmem:[#allocation12 + $0x18] sm:$0xff]
        %v823 = vld [vmem:[#allocation12 + $0x20] sm:$0xff]
        %v824 = vld [vmem:[#allocation12 + $0x28] sm:$0xff]
        %v825 = vld [vmem:[#allocation12 + $0x30] sm:$0xff]
        %v826 = vld [vmem:[#allocation12 + $0x38] sm:$0xff]
        %v827 = vld [vmem:[#allocation12 + $0x40] sm:$0xff]
        %v828 = vld [vmem:[#allocation12 + $0x48] sm:$0xff]
        %v829 = vld [vmem:[#allocation12 + $0x50] sm:$0xff]
        %v830 = vld [vmem:[#allocation12 + $0x58] sm:$0xff]
        %v831 = vld [vmem:[#allocation12 + $0x60] sm:$0xff]
        %v832 = vld [vmem:[#allocation12 + $0x68] sm:$0xff]
        %v833 = vld [vmem:[#allocation12 + $0x70] sm:$0xff]
        %v834 = vld [vmem:[#allocation12 + $0x78] sm:$0xff]
        %v851 = vunpack.c.l.b16 %v819
        %v852 = vunpack.c.h.b16 %v819
        %v853 = vunpack.c.l.b16 %v820
        %v854 = vunpack.c.h.b16 %v820
        %v855 = vunpack.c.l.b16 %v821
        %v856 = vunpack.c.h.b16 %v821
        %v857 = vunpack.c.l.b16 %v822
        %v858 = vunpack.c.h.b16 %v822
        %v859 = vunpack.c.l.b16 %v823
        %v860 = vunpack.c.h.b16 %v823
        %v861 = vunpack.c.l.b16 %v824
        %v862 = vunpack.c.h.b16 %v824
        %v863 = vunpack.c.l.b16 %v825
        %v864 = vunpack.c.h.b16 %v825
        %v865 = vunpack.c.l.b16 %v826
        %v866 = vunpack.c.h.b16 %v826
        %v867 = vunpack.c.l.b16 %v827
        %v868 = vunpack.c.h.b16 %v827
        %v869 = vunpack.c.l.b16 %v828
        %v870 = vunpack.c.h.b16 %v828
        %v871 = vunpack.c.l.b16 %v829
        %v872 = vunpack.c.h.b16 %v829
        %v873 = vunpack.c.l.b16 %v830
        %v874 = vunpack.c.h.b16 %v830
        %v875 = vunpack.c.l.b16 %v831
        %v876 = vunpack.c.h.b16 %v831
        %v877 = vunpack.c.l.b16 %v832
        %v878 = vunpack.c.h.b16 %v832
        %v879 = vunpack.c.l.b16 %v833
        %v880 = vunpack.c.h.b16 %v833
        %v881 = vunpack.c.l.b16 %v834
        %v882 = vunpack.c.h.b16 %v834
        %v883 = vpack.c.b16 %v853, %v851
        %v884 = vpack.c.b16 %v854, %v852
        %v885 = vpack.c.b16 %v857, %v855
        %v886 = vpack.c.b16 %v858, %v856
        %v887 = vpack.c.b16 %v861, %v859
        %v888 = vpack.c.b16 %v862, %v860
        %v889 = vpack.c.b16 %v865, %v863
        %v890 = vpack.c.b16 %v866, %v864
        %v891 = vpack.c.b16 %v869, %v867
        %v892 = vpack.c.b16 %v870, %v868
        %v893 = vpack.c.b16 %v873, %v871
        %v894 = vpack.c.b16 %v874, %v872
        %v895 = vpack.c.b16 %v877, %v875
        %v896 = vpack.c.b16 %v878, %v876
        %v897 = vpack.c.b16 %v881, %v879
        %v898 = vpack.c.b16 %v882, %v880
        %915 = vmatprep.subr.bf16.mxu0 %v898
        %916 = vmatpush1.bf16.msra.mxu0 %v897
        %917 = vmatprep.subr.bf16.mxu0 %v896
        %918 = vmatpush1.bf16.msra.mxu0 %v895
        %919 = vmatprep.subr.bf16.mxu0 %v894
        %920 = vmatpush1.bf16.msra.mxu0 %v893
        %921 = vmatprep.subr.bf16.mxu0 %v892
        %922 = vmatpush1.bf16.msra.mxu0 %v891
        %923 = vmatprep.subr.bf16.mxu0 %v890
        %924 = vmatpush1.bf16.msra.mxu0 %v889
        %925 = vmatprep.subr.bf16.mxu0 %v888
        %926 = vmatpush1.bf16.msra.mxu0 %v887
        %927 = vmatprep.subr.bf16.mxu0 %v886
        %928 = vmatpush1.bf16.msra.mxu0 %v885
        %929 = vmatprep.subr.bf16.mxu0 %v884
        %930 = vmatpush1.bf16.msra.mxu0 %v883
        %931 = vmatprep.subr.bf16.mxu0 0
        %932 = vmatpush2.bf16.msra.mxu0 0
        %933 = vmatprep.subr.bf16.mxu0 0
        %934 = vmatpush2.bf16.msra.mxu0 0
        %935 = vmatprep.subr.bf16.mxu0 0
        %936 = vmatpush2.bf16.msra.mxu0 0
        %937 = vmatprep.subr.bf16.mxu0 0
        %938 = vmatpush2.bf16.msra.mxu0 0
        %939 = vmatprep.subr.bf16.mxu0 0
        %940 = vmatpush2.bf16.msra.mxu0 0
        %941 = vmatprep.subr.bf16.mxu0 0
        %942 = vmatpush2.bf16.msra.mxu0 0
        %943 = vmatprep.subr.bf16.mxu0 0
        %944 = vmatpush2.bf16.msra.mxu0 0
        %945 = vmatprep.subr.bf16.mxu0 0
        %946 = vmatpush2.bf16.msra.mxu0 0
        %947 = vmatprep.mubr.bf16.mxu0 0
        %948 = vmatmul.mubr.bf16.gmra.mxu0 %v704
        %v949 = vpop.f32.mrf.mxu0
        %v950 = vadd.f32 0.0, %v949
        %v951 = vpop.f32.mrf.mxu0
        %v952 = vadd.f32 0.0, %v951
        %v953 = vpop.f32.mrf.mxu0
        %v954 = vpop.f32.mrf.mxu0
        %955 = vdwg.mxu0
        %v956 = vpack.c.bf16 %v814, %v814
        %958 = vrot.lane.b32.xlu0 %v956, 96
        %v959 = vpop.permute.xlu0 %958
        %960 = vrot.lane.b32.xlu0 %v956, 64
        %v961 = vpop.permute.xlu0 %960
        %962 = vrot.lane.b32.xlu0 %v956, 32
        %v963 = vpop.permute.xlu0 %962
        %v964 = vpack.c.bf16 %v950, %v950
        %966 = vrot.lane.b32.xlu0 %v964, 96
        %v967 = vpop.permute.xlu0 %966
        %968 = vrot.lane.b32.xlu0 %v964, 64
        %v969 = vpop.permute.xlu0 %968
        %970 = vrot.lane.b32.xlu0 %v964, 32
        %v971 = vpop.permute.xlu0 %970
        %v972 = vpack.c.bf16 %v952, %v952
        %974 = vrot.lane.b32.xlu0 %v972, 96
        %v975 = vpop.permute.xlu0 %974
        %976 = vrot.lane.b32.xlu0 %v972, 64
        %v977 = vpop.permute.xlu0 %976
        %978 = vrot.lane.b32.xlu0 %v972, 32
        %v979 = vpop.permute.xlu0 %978
        %vm980 = vcmask 261120
        %v982 = vsel %vm980, %v956, 0
        %v985 = vsel %vm980, %v964, 0
        %987 = vmatprep.subr.bf16.mxu0 0
        %988 = vmatpush1.bf16.xpose.msra.mxu0 0
        %989 = vmatprep.subr.bf16.mxu0 0
        %990 = vmatpush1.bf16.xpose.msra.mxu0 0
        %991 = vmatprep.subr.bf16.mxu0 0
        %992 = vmatpush1.bf16.xpose.msra.mxu0 0
        %993 = vmatprep.subr.bf16.mxu0 0
        %994 = vmatpush1.bf16.xpose.msra.mxu0 0
        %995 = vmatprep.subr.bf16.mxu0 0
        %996 = vmatpush1.bf16.xpose.msra.mxu0 0
        %997 = vmatprep.subr.bf16.mxu0 0
        %998 = vmatpush1.bf16.xpose.msra.mxu0 0
        %999 = vmatprep.subr.bf16.mxu0 0
        %1000 = vmatpush1.bf16.xpose.msra.mxu0 0
        %1001 = vmatprep.subr.bf16.mxu0 0
        %1002 = vmatpush1.bf16.xpose.msra.mxu0 %v985
        %1003 = vmatprep.subr.bf16.mxu0 0
        %1004 = vmatpush2.bf16.xpose.msra.mxu0 0
        %1005 = vmatprep.subr.bf16.mxu0 0
        %1006 = vmatpush2.bf16.xpose.msra.mxu0 0
        %1007 = vmatprep.subr.bf16.mxu0 0
        %1008 = vmatpush2.bf16.xpose.msra.mxu0 0
        %1009 = vmatprep.subr.bf16.mxu0 0
        %1010 = vmatpush2.bf16.xpose.msra.mxu0 0
        %1011 = vmatprep.subr.bf16.mxu0 0
        %1012 = vmatpush2.bf16.xpose.msra.mxu0 0
        %1013 = vmatprep.subr.bf16.mxu0 0
        %1014 = vmatpush2.bf16.xpose.msra.mxu0 0
        %1015 = vmatprep.subr.bf16.mxu0 0
        %1016 = vmatpush2.bf16.xpose.msra.mxu0 0
        %1017 = vmatprep.subr.bf16.mxu0 0
        %1018 = vmatpush2.bf16.xpose.msra.mxu0 0
        %1019 = vmatprep.mubr.bf16.mxu0 0
        %1020 = vmatmul.mubr.bf16.gmra.mxu0 %v982
        %v1021 = vpop.f32.mrf.mxu0
        %v1022 = vadd.f32 0.0, %v1021
        %v1023 = vpop.f32.mrf.mxu0
        %v1024 = vpop.f32.mrf.mxu0
        %v1025 = vpop.f32.mrf.mxu0
        %1026 = vdwg.mxu0
        %v1028 = vsel %vm980, %v959, 0
        %v1031 = vsel %vm980, %v967, 0
        %1033 = vmatprep.subr.bf16.mxu0 0
        %1034 = vmatpush1.bf16.xpose.msra.mxu0 0
        %1035 = vmatprep.subr.bf16.mxu0 0
        %1036 = vmatpush1.bf16.xpose.msra.mxu0 0
        %1037 = vmatprep.subr.bf16.mxu0 0
        %1038 = vmatpush1.bf16.xpose.msra.mxu0 0
        %1039 = vmatprep.subr.bf16.mxu0 0
        %1040 = vmatpush1.bf16.xpose.msra.mxu0 0
        %1041 = vmatprep.subr.bf16.mxu0 0
        %1042 = vmatpush1.bf16.xpose.msra.mxu0 0
        %1043 = vmatprep.subr.bf16.mxu0 0
        %1044 = vmatpush1.bf16.xpose.msra.mxu0 0
        %1045 = vmatprep.subr.bf16.mxu0 0
        %1046 = vmatpush1.bf16.xpose.msra.mxu0 0
        %1047 = vmatprep.subr.bf16.mxu0 0
        %1048 = vmatpush1.bf16.xpose.msra.mxu0 %v1031
        %1049 = vmatprep.subr.bf16.mxu0 0
        %1050 = vmatpush2.bf16.xpose.msra.mxu0 0
        %1051 = vmatprep.subr.bf16.mxu0 0
        %1052 = vmatpush2.bf16.xpose.msra.mxu0 0
        %1053 = vmatprep.subr.bf16.mxu0 0
        %1054 = vmatpush2.bf16.xpose.msra.mxu0 0
        %1055 = vmatprep.subr.bf16.mxu0 0
        %1056 = vmatpush2.bf16.xpose.msra.mxu0 0
        %1057 = vmatprep.subr.bf16.mxu0 0
        %1058 = vmatpush2.bf16.xpose.msra.mxu0 0
        %1059 = vmatprep.subr.bf16.mxu0 0
        %1060 = vmatpush2.bf16.xpose.msra.mxu0 0
        %1061 = vmatprep.subr.bf16.mxu0 0
        %1062 = vmatpush2.bf16.xpose.msra.mxu0 0
        %1063 = vmatprep.subr.bf16.mxu0 0
        %1064 = vmatpush2.bf16.xpose.msra.mxu0 0
        %1065 = vmatprep.mubr.bf16.mxu0 0
        %1066 = vmatmul.mubr.bf16.gmra.mxu0 %v1028
        %v1067 = vpop.f32.mrf.mxu0
        %v1068 = vadd.f32 0.0, %v1067
        %v1069 = vpop.f32.mrf.mxu0
        %v1070 = vpop.f32.mrf.mxu0
        %v1071 = vpop.f32.mrf.mxu0
        %1072 = vdwg.mxu0
        %v1074 = vsel %vm980, %v961, 0
        %v1077 = vsel %vm980, %v969, 0
        %1079 = vmatprep.subr.bf16.mxu0 0
        %1080 = vmatpush1.bf16.xpose.msra.mxu0 0
        %1081 = vmatprep.subr.bf16.mxu0 0
        %1082 = vmatpush1.bf16.xpose.msra.mxu0 0
        %1083 = vmatprep.subr.bf16.mxu0 0
        %1084 = vmatpush1.bf16.xpose.msra.mxu0 0
        %1085 = vmatprep.subr.bf16.mxu0 0
        %1086 = vmatpush1.bf16.xpose.msra.mxu0 0
        %1087 = vmatprep.subr.bf16.mxu0 0
        %1088 = vmatpush1.bf16.xpose.msra.mxu0 0
        %1089 = vmatprep.subr.bf16.mxu0 0
        %1090 = vmatpush1.bf16.xpose.msra.mxu0 0
        %1091 = vmatprep.subr.bf16.mxu0 0
        %1092 = vmatpush1.bf16.xpose.msra.mxu0 0
        %1093 = vmatprep.subr.bf16.mxu0 0
        %1094 = vmatpush1.bf16.xpose.msra.mxu0 %v1077
        %1095 = vmatprep.subr.bf16.mxu0 0
        %1096 = vmatpush2.bf16.xpose.msra.mxu0 0
        %1097 = vmatprep.subr.bf16.mxu0 0
        %1098 = vmatpush2.bf16.xpose.msra.mxu0 0
        %1099 = vmatprep.subr.bf16.mxu0 0
        %1100 = vmatpush2.bf16.xpose.msra.mxu0 0
        %1101 = vmatprep.subr.bf16.mxu0 0
        %1102 = vmatpush2.bf16.xpose.msra.mxu0 0
        %1103 = vmatprep.subr.bf16.mxu0 0
        %1104 = vmatpush2.bf16.xpose.msra.mxu0 0
        %1105 = vmatprep.subr.bf16.mxu0 0
        %1106 = vmatpush2.bf16.xpose.msra.mxu0 0
        %1107 = vmatprep.subr.bf16.mxu0 0
        %1108 = vmatpush2.bf16.xpose.msra.mxu0 0
        %1109 = vmatprep.subr.bf16.mxu0 0
        %1110 = vmatpush2.bf16.xpose.msra.mxu0 0
        %1111 = vmatprep.mubr.bf16.mxu0 0
        %1112 = vmatmul.mubr.bf16.gmra.mxu0 %v1074
        %v1113 = vpop.f32.mrf.mxu0
        %v1114 = vadd.f32 0.0, %v1113
        %v1115 = vpop.f32.mrf.mxu0
        %v1116 = vpop.f32.mrf.mxu0
        %v1117 = vpop.f32.mrf.mxu0
        %1118 = vdwg.mxu0
        %v1120 = vsel %vm980, %v963, 0
        %v1123 = vsel %vm980, %v971, 0
        %1125 = vmatprep.subr.bf16.mxu0 0
        %1126 = vmatpush1.bf16.xpose.msra.mxu0 0
        %1127 = vmatprep.subr.bf16.mxu0 0
        %1128 = vmatpush1.bf16.xpose.msra.mxu0 0
        %1129 = vmatprep.subr.bf16.mxu0 0
        %1130 = vmatpush1.bf16.xpose.msra.mxu0 0
        %1131 = vmatprep.subr.bf16.mxu0 0
        %1132 = vmatpush1.bf16.xpose.msra.mxu0 0
        %1133 = vmatprep.subr.bf16.mxu0 0
        %1134 = vmatpush1.bf16.xpose.msra.mxu0 0
        %1135 = vmatprep.subr.bf16.mxu0 0
        %1136 = vmatpush1.bf16.xpose.msra.mxu0 0
        %1137 = vmatprep.subr.bf16.mxu0 0
        %1138 = vmatpush1.bf16.xpose.msra.mxu0 0
        %1139 = vmatprep.subr.bf16.mxu0 0
        %1140 = vmatpush1.bf16.xpose.msra.mxu0 %v1123
        %1141 = vmatprep.subr.bf16.mxu0 0
        %1142 = vmatpush2.bf16.xpose.msra.mxu0 0
        %1143 = vmatprep.subr.bf16.mxu0 0
        %1144 = vmatpush2.bf16.xpose.msra.mxu0 0
        %1145 = vmatprep.subr.bf16.mxu0 0
        %1146 = vmatpush2.bf16.xpose.msra.mxu0 0
        %1147 = vmatprep.subr.bf16.mxu0 0
        %1148 = vmatpush2.bf16.xpose.msra.mxu0 0
        %1149 = vmatprep.subr.bf16.mxu0 0
        %1150 = vmatpush2.bf16.xpose.msra.mxu0 0
        %1151 = vmatprep.subr.bf16.mxu0 0
        %1152 = vmatpush2.bf16.xpose.msra.mxu0 0
        %1153 = vmatprep.subr.bf16.mxu0 0
        %1154 = vmatpush2.bf16.xpose.msra.mxu0 0
        %1155 = vmatprep.subr.bf16.mxu0 0
        %1156 = vmatpush2.bf16.xpose.msra.mxu0 0
        %1157 = vmatprep.mubr.bf16.mxu0 0
        %1158 = vmatmul.mubr.bf16.gmra.mxu0 %v1120
        %v1159 = vpop.f32.mrf.mxu0
        %v1160 = vadd.f32 0.0, %v1159
        %v1161 = vpop.f32.mrf.mxu0
        %v1162 = vpop.f32.mrf.mxu0
        %v1163 = vpop.f32.mrf.mxu0
        %1164 = vdwg.mxu0
        %v1165 = vsel %vm710, 1, 0
        %vm1166 = vcmp.eq.s32.totalorder %v1165, 1
        %v1167 = vsel %vm1166, %v1022, -1000000.0
        %v1168 = vsel %vm1166, %v1068, -1000000.0
        %v1169 = vsel %vm1166, %v1114, -1000000.0
        %v1170 = vsel %vm1166, %v1160, -1000000.0
        %vm1171 = vcmask 64512
        %v1172 = vsel %vm1171, %v1167, -inf
        %1173 = vmax.xlane.f32.xlu0 %v1172
        %v1174 = vpop.xlane.xlu0 %1173
        %v1175 = vsel %vm1171, %v1168, -inf
        %1176 = vmax.xlane.f32.xlu0 %v1175
        %v1177 = vpop.xlane.xlu0 %1176
        %v1178 = vsel %vm1171, %v1169, -inf
        %1179 = vmax.xlane.f32.xlu0 %v1178
        %v1180 = vpop.xlane.xlu0 %1179
        %v1181 = vsel %vm1171, %v1170, -inf
        %1182 = vmax.xlane.f32.xlu0 %v1181
        %v1183 = vpop.xlane.xlu0 %1182
        %v1184 = vsub.f32 %v1167, %v1174
        %v1185 = vsub.f32 %v1168, %v1177
        %v1186 = vsub.f32 %v1169, %v1180
        %v1187 = vsub.f32 %v1170, %v1183
        %v1188 = vmul.f32 %v1184, 1.442695
        %v1189 = vpow.pop %v1188
        %v1190 = vmul.f32 %v1185, 1.442695
        %v1191 = vpow.pop %v1190
        %v1192 = vmul.f32 %v1186, 1.442695
        %v1193 = vpow.pop %v1192
        %v1194 = vmul.f32 %v1187, 1.442695
        %v1195 = vpow.pop %v1194
        %v1196 = vsel %vm1171, %v1189, 0.0
        %1197 = vadd.xlane.f32.xlu0 %v1196
        %v1198 = vpop.xlane.xlu0 %1197
        %v1199 = vsel %vm1171, %v1191, 0.0
        %1200 = vadd.xlane.f32.xlu0 %v1199
        %v1201 = vpop.xlane.xlu0 %1200
        %v1202 = vsel %vm1171, %v1193, 0.0
        %1203 = vadd.xlane.f32.xlu0 %v1202
        %v1204 = vpop.xlane.xlu0 %1203
        %v1205 = vsel %vm1171, %v1195, 0.0
        %1206 = vadd.xlane.f32.xlu0 %v1205
        %v1207 = vpop.xlane.xlu0 %1206
        %v1208 = vrcp.pop %v1198
        %v1209 = vrcp.pop %v1201
        %v1210 = vrcp.pop %v1204
        %v1211 = vrcp.pop %v1207
        %v1212 = vmul.f32 %v1189, %v1208
        %v1213 = vmul.f32 %v1191, %v1209
        %v1214 = vmul.f32 %v1193, %v1210
        %v1215 = vmul.f32 %v1195, %v1211
        %v1216 = vpack.c.bf16 %v1212, %v1212
        %v1217 = vpack.c.bf16 %v1213, %v1213
        %v1218 = vpack.c.bf16 %v1214, %v1214
        %v1219 = vpack.c.bf16 %v1215, %v1215
        %v1221 = vsel %vm1171, %v1216, 0
        %vm1223 = vcmask 1043456
        %v1225 = vsel %vm1223, %v972, 0
        %1227 = vmatprep.subr.bf16.mxu0 0
        %1228 = vmatpush1.bf16.msra.mxu0 0
        %1229 = vmatprep.subr.bf16.mxu0 0
        %1230 = vmatpush1.bf16.msra.mxu0 0
        %1231 = vmatprep.subr.bf16.mxu0 0
        %1232 = vmatpush1.bf16.msra.mxu0 0
        %1233 = vmatprep.subr.bf16.mxu0 0
        %1234 = vmatpush1.bf16.msra.mxu0 0
        %1235 = vmatprep.subr.bf16.mxu0 0
        %1236 = vmatpush1.bf16.msra.mxu0 0
        %1237 = vmatprep.subr.bf16.mxu0 0
        %1238 = vmatpush1.bf16.msra.mxu0 0
        %1239 = vmatprep.subr.bf16.mxu0 0
        %1240 = vmatpush1.bf16.msra.mxu0 0
        %1241 = vmatprep.subr.bf16.mxu0 0
        %1242 = vmatpush1.bf16.msra.mxu0 %v1225
        %1243 = vmatprep.subr.bf16.mxu0 0
        %1244 = vmatpush2.bf16.msra.mxu0 0
        %1245 = vmatprep.subr.bf16.mxu0 0
        %1246 = vmatpush2.bf16.msra.mxu0 0
        %1247 = vmatprep.subr.bf16.mxu0 0
        %1248 = vmatpush2.bf16.msra.mxu0 0
        %1249 = vmatprep.subr.bf16.mxu0 0
        %1250 = vmatpush2.bf16.msra.mxu0 0
        %1251 = vmatprep.subr.bf16.mxu0 0
        %1252 = vmatpush2.bf16.msra.mxu0 0
        %1253 = vmatprep.subr.bf16.mxu0 0
        %1254 = vmatpush2.bf16.msra.mxu0 0
        %1255 = vmatprep.subr.bf16.mxu0 0
        %1256 = vmatpush2.bf16.msra.mxu0 0
        %1257 = vmatprep.subr.bf16.mxu0 0
        %1258 = vmatpush2.bf16.msra.mxu0 0
        %1259 = vmatprep.mubr.bf16.mxu0 0
        %1260 = vmatmul.mubr.bf16.gmra.mxu0 %v1221
        %v1261 = vpop.f32.mrf.mxu0
        %v1262 = vadd.f32 0.0, %v1261
        %v1263 = vpop.f32.mrf.mxu0
        %v1264 = vpop.f32.mrf.mxu0
        %v1265 = vpop.f32.mrf.mxu0
        %1266 = vdwg.mxu0
        %v1268 = vsel %vm1171, %v1217, 0
        %v1271 = vsel %vm1223, %v975, 0
        %1273 = vmatprep.subr.bf16.mxu0 0
        %1274 = vmatpush1.bf16.msra.mxu0 0
        %1275 = vmatprep.subr.bf16.mxu0 0
        %1276 = vmatpush1.bf16.msra.mxu0 0
        %1277 = vmatprep.subr.bf16.mxu0 0
        %1278 = vmatpush1.bf16.msra.mxu0 0
        %1279 = vmatprep.subr.bf16.mxu0 0
        %1280 = vmatpush1.bf16.msra.mxu0 0
        %1281 = vmatprep.subr.bf16.mxu0 0
        %1282 = vmatpush1.bf16.msra.mxu0 0
        %1283 = vmatprep.subr.bf16.mxu0 0
        %1284 = vmatpush1.bf16.msra.mxu0 0
        %1285 = vmatprep.subr.bf16.mxu0 0
        %1286 = vmatpush1.bf16.msra.mxu0 0
        %1287 = vmatprep.subr.bf16.mxu0 0
        %1288 = vmatpush1.bf16.msra.mxu0 %v1271
        %1289 = vmatprep.subr.bf16.mxu0 0
        %1290 = vmatpush2.bf16.msra.mxu0 0
        %1291 = vmatprep.subr.bf16.mxu0 0
        %1292 = vmatpush2.bf16.msra.mxu0 0
        %1293 = vmatprep.subr.bf16.mxu0 0
        %1294 = vmatpush2.bf16.msra.mxu0 0
        %1295 = vmatprep.subr.bf16.mxu0 0
        %1296 = vmatpush2.bf16.msra.mxu0 0
        %1297 = vmatprep.subr.bf16.mxu0 0
        %1298 = vmatpush2.bf16.msra.mxu0 0
        %1299 = vmatprep.subr.bf16.mxu0 0
        %1300 = vmatpush2.bf16.msra.mxu0 0
        %1301 = vmatprep.subr.bf16.mxu0 0
        %1302 = vmatpush2.bf16.msra.mxu0 0
        %1303 = vmatprep.subr.bf16.mxu0 0
        %1304 = vmatpush2.bf16.msra.mxu0 0
        %1305 = vmatprep.mubr.bf16.mxu0 0
        %1306 = vmatmul.mubr.bf16.gmra.mxu0 %v1268
        %v1307 = vpop.f32.mrf.mxu0
        %v1308 = vadd.f32 0.0, %v1307
        %v1309 = vpop.f32.mrf.mxu0
        %v1310 = vpop.f32.mrf.mxu0
        %v1311 = vpop.f32.mrf.mxu0
        %1312 = vdwg.mxu0
        %v1314 = vsel %vm1171, %v1218, 0
        %v1317 = vsel %vm1223, %v977, 0
        %1319 = vmatprep.subr.bf16.mxu0 0
        %1320 = vmatpush1.bf16.msra.mxu0 0
        %1321 = vmatprep.subr.bf16.mxu0 0
        %1322 = vmatpush1.bf16.msra.mxu0 0
        %1323 = vmatprep.subr.bf16.mxu0 0
        %1324 = vmatpush1.bf16.msra.mxu0 0
        %1325 = vmatprep.subr.bf16.mxu0 0
        %1326 = vmatpush1.bf16.msra.mxu0 0
        %1327 = vmatprep.subr.bf16.mxu0 0
        %1328 = vmatpush1.bf16.msra.mxu0 0
        %1329 = vmatprep.subr.bf16.mxu0 0
        %1330 = vmatpush1.bf16.msra.mxu0 0
        %1331 = vmatprep.subr.bf16.mxu0 0
        %1332 = vmatpush1.bf16.msra.mxu0 0
        %1333 = vmatprep.subr.bf16.mxu0 0
        %1334 = vmatpush1.bf16.msra.mxu0 %v1317
        %1335 = vmatprep.subr.bf16.mxu0 0
        %1336 = vmatpush2.bf16.msra.mxu0 0
        %1337 = vmatprep.subr.bf16.mxu0 0
        %1338 = vmatpush2.bf16.msra.mxu0 0
        %1339 = vmatprep.subr.bf16.mxu0 0
        %1340 = vmatpush2.bf16.msra.mxu0 0
        %1341 = vmatprep.subr.bf16.mxu0 0
        %1342 = vmatpush2.bf16.msra.mxu0 0
        %1343 = vmatprep.subr.bf16.mxu0 0
        %1344 = vmatpush2.bf16.msra.mxu0 0
        %1345 = vmatprep.subr.bf16.mxu0 0
        %1346 = vmatpush2.bf16.msra.mxu0 0
        %1347 = vmatprep.subr.bf16.mxu0 0
        %1348 = vmatpush2.bf16.msra.mxu0 0
        %1349 = vmatprep.subr.bf16.mxu0 0
        %1350 = vmatpush2.bf16.msra.mxu0 0
        %1351 = vmatprep.mubr.bf16.mxu0 0
        %1352 = vmatmul.mubr.bf16.gmra.mxu0 %v1314
        %v1353 = vpop.f32.mrf.mxu0
        %v1354 = vadd.f32 0.0, %v1353
        %v1355 = vpop.f32.mrf.mxu0
        %v1356 = vpop.f32.mrf.mxu0
        %v1357 = vpop.f32.mrf.mxu0
        %1358 = vdwg.mxu0
        %v1360 = vsel %vm1171, %v1219, 0
        %v1363 = vsel %vm1223, %v979, 0
        %1365 = vmatprep.subr.bf16.mxu0 0
        %1366 = vmatpush1.bf16.msra.mxu0 0
        %1367 = vmatprep.subr.bf16.mxu0 0
        %1368 = vmatpush1.bf16.msra.mxu0 0
        %1369 = vmatprep.subr.bf16.mxu0 0
        %1370 = vmatpush1.bf16.msra.mxu0 0
        %1371 = vmatprep.subr.bf16.mxu0 0
        %1372 = vmatpush1.bf16.msra.mxu0 0
        %1373 = vmatprep.subr.bf16.mxu0 0
        %1374 = vmatpush1.bf16.msra.mxu0 0
        %1375 = vmatprep.subr.bf16.mxu0 0
        %1376 = vmatpush1.bf16.msra.mxu0 0
        %1377 = vmatprep.subr.bf16.mxu0 0
        %1378 = vmatpush1.bf16.msra.mxu0 0
        %1379 = vmatprep.subr.bf16.mxu0 0
        %1380 = vmatpush1.bf16.msra.mxu0 %v1363
        %1381 = vmatprep.subr.bf16.mxu0 0
        %1382 = vmatpush2.bf16.msra.mxu0 0
        %1383 = vmatprep.subr.bf16.mxu0 0
        %1384 = vmatpush2.bf16.msra.mxu0 0
        %1385 = vmatprep.subr.bf16.mxu0 0
        %1386 = vmatpush2.bf16.msra.mxu0 0
        %1387 = vmatprep.subr.bf16.mxu0 0
        %1388 = vmatpush2.bf16.msra.mxu0 0
        %1389 = vmatprep.subr.bf16.mxu0 0
        %1390 = vmatpush2.bf16.msra.mxu0 0
        %1391 = vmatprep.subr.bf16.mxu0 0
        %1392 = vmatpush2.bf16.msra.mxu0 0
        %1393 = vmatprep.subr.bf16.mxu0 0
        %1394 = vmatpush2.bf16.msra.mxu0 0
        %1395 = vmatprep.subr.bf16.mxu0 0
        %1396 = vmatpush2.bf16.msra.mxu0 0
        %1397 = vmatprep.mubr.bf16.mxu0 0
        %1398 = vmatmul.mubr.bf16.gmra.mxu0 %v1360
        %v1399 = vpop.f32.mrf.mxu0
        %v1400 = vadd.f32 0.0, %v1399
        %v1401 = vpop.f32.mrf.mxu0
        %v1402 = vpop.f32.mrf.mxu0
        %v1403 = vpop.f32.mrf.mxu0
        %1404 = vdwg.mxu0
        %1406 = vrot.lane.b32.xlu0 %v1308, 32
        %v1407 = vpop.permute.xlu0 %1406
        %1410 = vrot.lane.b32.xlu0 %v1354, 64
        %v1411 = vpop.permute.xlu0 %1410
        %1414 = vrot.lane.b32.xlu0 %v1400, 96
        %v1415 = vpop.permute.xlu0 %1414
        %v1417 = vsel %vm980, %v1262, %v1407
        %vm1418 = vcmask 523264
        %v1419 = vsel %vm1418, %v1417, %v1411
        %vm1420 = vcmask 785408
        %v1421 = vsel %vm1420, %v1419, %v1415
        %v1422 = vpack.c.bf16 %v1421, %v1421
        %v1423 = vld [vmem:[#allocation13] sm:$0xf]
        %v1424 = vld [vmem:[#allocation13 + $0x4] sm:$0xf]
        %v1425 = vld [vmem:[#allocation13 + $0x8] sm:$0xf]
        %v1426 = vld [vmem:[#allocation13 + $0xc] sm:$0xf]
        %v1427 = vld [vmem:[#allocation13 + $0x10] sm:$0xf]
        %v1428 = vld [vmem:[#allocation13 + $0x14] sm:$0xf]
        %v1429 = vld [vmem:[#allocation13 + $0x18] sm:$0xf]
        %v1430 = vld [vmem:[#allocation13 + $0x1c] sm:$0xf]
        %v1431 = vld [vmem:[#allocation13 + $0x20] sm:$0xf]
        %v1432 = vld [vmem:[#allocation13 + $0x24] sm:$0xf]
        %v1433 = vld [vmem:[#allocation13 + $0x28] sm:$0xf]
        %v1434 = vld [vmem:[#allocation13 + $0x2c] sm:$0xf]
        %v1435 = vld [vmem:[#allocation13 + $0x30] sm:$0xf]
        %v1436 = vld [vmem:[#allocation13 + $0x34] sm:$0xf]
        %v1437 = vld [vmem:[#allocation13 + $0x38] sm:$0xf]
        %v1438 = vld [vmem:[#allocation13 + $0x3c] sm:$0xf]
        %v1455 = vunpack.c.l.b16 %v1423
        %v1456 = vunpack.c.l.b16 %v1424
        %v1457 = vunpack.c.l.b16 %v1425
        %v1458 = vunpack.c.l.b16 %v1426
        %v1459 = vunpack.c.l.b16 %v1427
        %v1460 = vunpack.c.l.b16 %v1428
        %v1461 = vunpack.c.l.b16 %v1429
        %v1462 = vunpack.c.l.b16 %v1430
        %v1463 = vunpack.c.l.b16 %v1431
        %v1464 = vunpack.c.l.b16 %v1432
        %v1465 = vunpack.c.l.b16 %v1433
        %v1466 = vunpack.c.l.b16 %v1434
        %v1467 = vunpack.c.l.b16 %v1435
        %v1468 = vunpack.c.l.b16 %v1436
        %v1469 = vunpack.c.l.b16 %v1437
        %v1470 = vunpack.c.l.b16 %v1438
        %v1471 = vpack.c.b16 %v1456, %v1455
        %v1472 = vpack.c.b16 %v1458, %v1457
        %v1473 = vpack.c.b16 %v1460, %v1459
        %v1474 = vpack.c.b16 %v1462, %v1461
        %v1475 = vpack.c.b16 %v1464, %v1463
        %v1476 = vpack.c.b16 %v1466, %v1465
        %v1477 = vpack.c.b16 %v1468, %v1467
        %v1478 = vpack.c.b16 %v1470, %v1469
        %1487 = vmatprep.subr.bf16.mxu0 0
        %1488 = vmatpush1.bf16.msra.mxu0 %v1478
        %1489 = vmatprep.subr.bf16.mxu0 0
        %1490 = vmatpush1.bf16.msra.mxu0 %v1477
        %1491 = vmatprep.subr.bf16.mxu0 0
        %1492 = vmatpush1.bf16.msra.mxu0 %v1476
        %1493 = vmatprep.subr.bf16.mxu0 0
        %1494 = vmatpush1.bf16.msra.mxu0 %v1475
        %1495 = vmatprep.subr.bf16.mxu0 0
        %1496 = vmatpush1.bf16.msra.mxu0 %v1474
        %1497 = vmatprep.subr.bf16.mxu0 0
        %1498 = vmatpush1.bf16.msra.mxu0 %v1473
        %1499 = vmatprep.subr.bf16.mxu0 0
        %1500 = vmatpush1.bf16.msra.mxu0 %v1472
        %1501 = vmatprep.subr.bf16.mxu0 0
        %1502 = vmatpush1.bf16.msra.mxu0 %v1471
        %1503 = vmatprep.subr.bf16.mxu0 0
        %1504 = vmatpush2.bf16.msra.mxu0 0
        %1505 = vmatprep.subr.bf16.mxu0 0
        %1506 = vmatpush2.bf16.msra.mxu0 0
        %1507 = vmatprep.subr.bf16.mxu0 0
        %1508 = vmatpush2.bf16.msra.mxu0 0
        %1509 = vmatprep.subr.bf16.mxu0 0
        %1510 = vmatpush2.bf16.msra.mxu0 0
        %1511 = vmatprep.subr.bf16.mxu0 0
        %1512 = vmatpush2.bf16.msra.mxu0 0
        %1513 = vmatprep.subr.bf16.mxu0 0
        %1514 = vmatpush2.bf16.msra.mxu0 0
        %1515 = vmatprep.subr.bf16.mxu0 0
        %1516 = vmatpush2.bf16.msra.mxu0 0
        %1517 = vmatprep.subr.bf16.mxu0 0
        %1518 = vmatpush2.bf16.msra.mxu0 0
        %1519 = vmatprep.mubr.bf16.mxu0 0
        %1520 = vmatmul.mubr.bf16.gmra.mxu0 %v1422
        %v1521 = vpop.f32.mrf.mxu0
        %v1522 = vadd.f32 0.0, %v1521
        %v1523 = vpop.f32.mrf.mxu0
        %v1524 = vpop.f32.mrf.mxu0
        %v1525 = vpop.f32.mrf.mxu0
        %1526 = vdwg.mxu0
        %v1527 = vadd.f32 %v703, %v1522
        %v1528 = vld [vmem:[%s10] sm:$0x1]
        %v1529 = vld [vmem:[%s11] sm:$0x1]
        %1530 = vadd.xlane.f32.xlu0 %v1527
        %v1531 = vpop.xlane.xlu0 %1530
        %v1532 = vrcp.pop 128.0
        %v1533 = vmul.f32 %v1531, %v1532
        %v1534 = vsub.f32 %v1527, %v1533
        %v1535 = vmul.f32 %v1534, %v1534
        %1536 = vadd.xlane.f32.xlu0 %v1535
        %v1537 = vpop.xlane.xlu0 %1536
        %v1538 = vmul.f32 %v1537, %v1532
        %v1539 = vadd.f32 %v1538, 1e-05
        %v1540 = vrsqrt.pop %v1539
        %v1541 = vmul.f32 %v1534, %v1540
        %v1542 = vlaneseq
        %v1543 = vshrl.u32 %v1542, 7
        %v1544 = vsub.s32 0, %v1543
        %v1545 = vrot.slane %v1528, %v1544
        %v1546 = vmul.f32 %v1541, %v1545
        %v1547 = vlaneseq
        %v1548 = vshrl.u32 %v1547, 7
        %v1549 = vsub.s32 0, %v1548
        %v1550 = vrot.slane %v1529, %v1549
        %v1551 = vadd.f32 %v1546, %v1550
        %v1552 = vpack.c.bf16 %v1551, %v1551
        %v1553 = vld [vmem:[#allocation15] sm:$0xf]
        %v1554 = vld [vmem:[#allocation15 + $0x4] sm:$0xf]
        %v1555 = vld [vmem:[#allocation15 + $0x8] sm:$0xf]
        %v1556 = vld [vmem:[#allocation15 + $0xc] sm:$0xf]
        %v1557 = vld [vmem:[#allocation15 + $0x10] sm:$0xf]
        %v1558 = vld [vmem:[#allocation15 + $0x14] sm:$0xf]
        %v1559 = vld [vmem:[#allocation15 + $0x18] sm:$0xf]
        %v1560 = vld [vmem:[#allocation15 + $0x1c] sm:$0xf]
        %v1561 = vld [vmem:[#allocation15 + $0x20] sm:$0xf]
        %v1562 = vld [vmem:[#allocation15 + $0x24] sm:$0xf]
        %v1563 = vld [vmem:[#allocation15 + $0x28] sm:$0xf]
        %v1564 = vld [vmem:[#allocation15 + $0x2c] sm:$0xf]
        %v1565 = vld [vmem:[#allocation15 + $0x30] sm:$0xf]
        %v1566 = vld [vmem:[#allocation15 + $0x34] sm:$0xf]
        %v1567 = vld [vmem:[#allocation15 + $0x38] sm:$0xf]
        %v1568 = vld [vmem:[#allocation15 + $0x3c] sm:$0xf]
        %v1585 = vunpack.c.l.b16 %v1553
        %v1586 = vunpack.c.l.b16 %v1554
        %v1587 = vunpack.c.l.b16 %v1555
        %v1588 = vunpack.c.l.b16 %v1556
        %v1589 = vunpack.c.l.b16 %v1557
        %v1590 = vunpack.c.l.b16 %v1558
        %v1591 = vunpack.c.l.b16 %v1559
        %v1592 = vunpack.c.l.b16 %v1560
        %v1593 = vunpack.c.l.b16 %v1561
        %v1594 = vunpack.c.l.b16 %v1562
        %v1595 = vunpack.c.l.b16 %v1563
        %v1596 = vunpack.c.l.b16 %v1564
        %v1597 = vunpack.c.l.b16 %v1565
        %v1598 = vunpack.c.l.b16 %v1566
        %v1599 = vunpack.c.l.b16 %v1567
        %v1600 = vunpack.c.l.b16 %v1568
        %v1601 = vpack.c.b16 %v1586, %v1585
        %v1602 = vpack.c.b16 %v1588, %v1587
        %v1603 = vpack.c.b16 %v1590, %v1589
        %v1604 = vpack.c.b16 %v1592, %v1591
        %v1605 = vpack.c.b16 %v1594, %v1593
        %v1606 = vpack.c.b16 %v1596, %v1595
        %v1607 = vpack.c.b16 %v1598, %v1597
        %v1608 = vpack.c.b16 %v1600, %v1599
        %1617 = vmatprep.subr.bf16.mxu0 0
        %1618 = vmatpush1.bf16.msra.mxu0 %v1608
        %1619 = vmatprep.subr.bf16.mxu0 0
        %1620 = vmatpush1.bf16.msra.mxu0 %v1607
        %1621 = vmatprep.subr.bf16.mxu0 0
        %1622 = vmatpush1.bf16.msra.mxu0 %v1606
        %1623 = vmatprep.subr.bf16.mxu0 0
        %1624 = vmatpush1.bf16.msra.mxu0 %v1605
        %1625 = vmatprep.subr.bf16.mxu0 0
        %1626 = vmatpush1.bf16.msra.mxu0 %v1604
        %1627 = vmatprep.subr.bf16.mxu0 0
        %1628 = vmatpush1.bf16.msra.mxu0 %v1603
        %1629 = vmatprep.subr.bf16.mxu0 0
        %1630 = vmatpush1.bf16.msra.mxu0 %v1602
        %1631 = vmatprep.subr.bf16.mxu0 0
        %1632 = vmatpush1.bf16.msra.mxu0 %v1601
        %1633 = vmatprep.subr.bf16.mxu0 0
        %1634 = vmatpush2.bf16.msra.mxu0 0
        %1635 = vmatprep.subr.bf16.mxu0 0
        %1636 = vmatpush2.bf16.msra.mxu0 0
        %1637 = vmatprep.subr.bf16.mxu0 0
        %1638 = vmatpush2.bf16.msra.mxu0 0
        %1639 = vmatprep.subr.bf16.mxu0 0
        %1640 = vmatpush2.bf16.msra.mxu0 0
        %1641 = vmatprep.subr.bf16.mxu0 0
        %1642 = vmatpush2.bf16.msra.mxu0 0
        %1643 = vmatprep.subr.bf16.mxu0 0
        %1644 = vmatpush2.bf16.msra.mxu0 0
        %1645 = vmatprep.subr.bf16.mxu0 0
        %1646 = vmatpush2.bf16.msra.mxu0 0
        %1647 = vmatprep.subr.bf16.mxu0 0
        %1648 = vmatpush2.bf16.msra.mxu0 0
        %1649 = vmatprep.mubr.bf16.mxu0 0
        %1650 = vmatmul.mubr.bf16.gmra.mxu0 %v1552
        %v1651 = vpop.f32.mrf.mxu0
        %v1652 = vadd.f32 0.0, %v1651
        %v1653 = vpop.f32.mrf.mxu0
        %v1654 = vpop.f32.mrf.mxu0
        %v1655 = vpop.f32.mrf.mxu0
        %1656 = vdwg.mxu0
        %v1657 = vld [vmem:[#allocation16] sm:$0xff]
        %v1658 = vld [vmem:[#allocation16 + $0x8] sm:$0xff]
        %v1659 = vld [vmem:[#allocation16 + $0x10] sm:$0xff]
        %v1660 = vld [vmem:[#allocation16 + $0x18] sm:$0xff]
        %v1661 = vld [vmem:[#allocation16 + $0x20] sm:$0xff]
        %v1662 = vld [vmem:[#allocation16 + $0x28] sm:$0xff]
        %v1663 = vld [vmem:[#allocation16 + $0x30] sm:$0xff]
        %v1664 = vld [vmem:[#allocation16 + $0x38] sm:$0xff]
        %v1665 = vld [vmem:[#allocation16 + $0x40] sm:$0xff]
        %v1666 = vld [vmem:[#allocation16 + $0x48] sm:$0xff]
        %v1667 = vld [vmem:[#allocation16 + $0x50] sm:$0xff]
        %v1668 = vld [vmem:[#allocation16 + $0x58] sm:$0xff]
        %v1669 = vld [vmem:[#allocation16 + $0x60] sm:$0xff]
        %v1670 = vld [vmem:[#allocation16 + $0x68] sm:$0xff]
        %v1671 = vld [vmem:[#allocation16 + $0x70] sm:$0xff]
        %v1672 = vld [vmem:[#allocation16 + $0x78] sm:$0xff]
        %v1689 = vunpack.c.l.b16 %v1657
        %v1690 = vunpack.c.h.b16 %v1657
        %v1691 = vunpack.c.l.b16 %v1658
        %v1692 = vunpack.c.h.b16 %v1658
        %v1693 = vunpack.c.l.b16 %v1659
        %v1694 = vunpack.c.h.b16 %v1659
        %v1695 = vunpack.c.l.b16 %v1660
        %v1696 = vunpack.c.h.b16 %v1660
        %v1697 = vunpack.c.l.b16 %v1661
        %v1698 = vunpack.c.h.b16 %v1661
        %v1699 = vunpack.c.l.b16 %v1662
        %v1700 = vunpack.c.h.b16 %v1662
        %v1701 = vunpack.c.l.b16 %v1663
        %v1702 = vunpack.c.h.b16 %v1663
        %v1703 = vunpack.c.l.b16 %v1664
        %v1704 = vunpack.c.h.b16 %v1664
        %v1705 = vunpack.c.l.b16 %v1665
        %v1706 = vunpack.c.h.b16 %v1665
        %v1707 = vunpack.c.l.b16 %v1666
        %v1708 = vunpack.c.h.b16 %v1666
        %v1709 = vunpack.c.l.b16 %v1667
        %v1710 = vunpack.c.h.b16 %v1667
        %v1711 = vunpack.c.l.b16 %v1668
        %v1712 = vunpack.c.h.b16 %v1668
        %v1713 = vunpack.c.l.b16 %v1669
        %v1714 = vunpack.c.h.b16 %v1669
        %v1715 = vunpack.c.l.b16 %v1670
        %v1716 = vunpack.c.h.b16 %v1670
        %v1717 = vunpack.c.l.b16 %v1671
        %v1718 = vunpack.c.h.b16 %v1671
        %v1719 = vunpack.c.l.b16 %v1672
        %v1720 = vunpack.c.h.b16 %v1672
        %v1721 = vpack.c.b16 %v1691, %v1689
        %v1722 = vpack.c.b16 %v1692, %v1690
        %v1723 = vpack.c.b16 %v1695, %v1693
        %v1724 = vpack.c.b16 %v1696, %v1694
        %v1725 = vpack.c.b16 %v1699, %v1697
        %v1726 = vpack.c.b16 %v1700, %v1698
        %v1727 = vpack.c.b16 %v1703, %v1701
        %v1728 = vpack.c.b16 %v1704, %v1702
        %v1729 = vpack.c.b16 %v1707, %v1705
        %v1730 = vpack.c.b16 %v1708, %v1706
        %v1731 = vpack.c.b16 %v1711, %v1709
        %v1732 = vpack.c.b16 %v1712, %v1710
        %v1733 = vpack.c.b16 %v1715, %v1713
        %v1734 = vpack.c.b16 %v1716, %v1714
        %v1735 = vpack.c.b16 %v1719, %v1717
        %v1736 = vpack.c.b16 %v1720, %v1718
        %1753 = vmatprep.subr.bf16.mxu0 %v1736
        %1754 = vmatpush1.bf16.msra.mxu0 %v1735
        %1755 = vmatprep.subr.bf16.mxu0 %v1734
        %1756 = vmatpush1.bf16.msra.mxu0 %v1733
        %1757 = vmatprep.subr.bf16.mxu0 %v1732
        %1758 = vmatpush1.bf16.msra.mxu0 %v1731
        %1759 = vmatprep.subr.bf16.mxu0 %v1730
        %1760 = vmatpush1.bf16.msra.mxu0 %v1729
        %1761 = vmatprep.subr.bf16.mxu0 %v1728
        %1762 = vmatpush1.bf16.msra.mxu0 %v1727
        %1763 = vmatprep.subr.bf16.mxu0 %v1726
        %1764 = vmatpush1.bf16.msra.mxu0 %v1725
        %1765 = vmatprep.subr.bf16.mxu0 %v1724
        %1766 = vmatpush1.bf16.msra.mxu0 %v1723
        %1767 = vmatprep.subr.bf16.mxu0 %v1722
        %1768 = vmatpush1.bf16.msra.mxu0 %v1721
        %1769 = vmatprep.subr.bf16.mxu0 0
        %1770 = vmatpush2.bf16.msra.mxu0 0
        %1771 = vmatprep.subr.bf16.mxu0 0
        %1772 = vmatpush2.bf16.msra.mxu0 0
        %1773 = vmatprep.subr.bf16.mxu0 0
        %1774 = vmatpush2.bf16.msra.mxu0 0
        %1775 = vmatprep.subr.bf16.mxu0 0
        %1776 = vmatpush2.bf16.msra.mxu0 0
        %1777 = vmatprep.subr.bf16.mxu0 0
        %1778 = vmatpush2.bf16.msra.mxu0 0
        %1779 = vmatprep.subr.bf16.mxu0 0
        %1780 = vmatpush2.bf16.msra.mxu0 0
        %1781 = vmatprep.subr.bf16.mxu0 0
        %1782 = vmatpush2.bf16.msra.mxu0 0
        %1783 = vmatprep.subr.bf16.mxu0 0
        %1784 = vmatpush2.bf16.msra.mxu0 0
        %1785 = vmatprep.mubr.bf16.mxu0 0
        %1786 = vmatmul.mubr.bf16.gmra.mxu0 %v705
        %v1787 = vpop.f32.mrf.mxu0
        %v1788 = vadd.f32 0.0, %v1787
        %v1789 = vpop.f32.mrf.mxu0
        %v1790 = vadd.f32 0.0, %v1789
        %v1791 = vpop.f32.mrf.mxu0
        %v1792 = vpop.f32.mrf.mxu0
        %1793 = vdwg.mxu0
        %v1794 = vpack.c.bf16 %v1652, %v1652
        %1796 = vrot.lane.b32.xlu0 %v1794, 96
        %v1797 = vpop.permute.xlu0 %1796
        %1798 = vrot.lane.b32.xlu0 %v1794, 64
        %v1799 = vpop.permute.xlu0 %1798
        %1800 = vrot.lane.b32.xlu0 %v1794, 32
        %v1801 = vpop.permute.xlu0 %1800
        %v1802 = vpack.c.bf16 %v1788, %v1788
        %1804 = vrot.lane.b32.xlu0 %v1802, 96
        %v1805 = vpop.permute.xlu0 %1804
        %1806 = vrot.lane.b32.xlu0 %v1802, 64
        %v1807 = vpop.permute.xlu0 %1806
        %1808 = vrot.lane.b32.xlu0 %v1802, 32
        %v1809 = vpop.permute.xlu0 %1808
        %v1810 = vpack.c.bf16 %v1790, %v1790
        %1812 = vrot.lane.b32.xlu0 %v1810, 96
        %v1813 = vpop.permute.xlu0 %1812
        %1814 = vrot.lane.b32.xlu0 %v1810, 64
        %v1815 = vpop.permute.xlu0 %1814
        %1816 = vrot.lane.b32.xlu0 %v1810, 32
        %v1817 = vpop.permute.xlu0 %1816
        %v1819 = vsel %vm980, %v1794, 0
        %v1822 = vsel %vm980, %v1802, 0
        %1824 = vmatprep.subr.bf16.mxu0 0
        %1825 = vmatpush1.bf16.xpose.msra.mxu0 0
        %1826 = vmatprep.subr.bf16.mxu0 0
        %1827 = vmatpush1.bf16.xpose.msra.mxu0 0
        %1828 = vmatprep.subr.bf16.mxu0 0
        %1829 = vmatpush1.bf16.xpose.msra.mxu0 0
        %1830 = vmatprep.subr.bf16.mxu0 0
        %1831 = vmatpush1.bf16.xpose.msra.mxu0 0
        %1832 = vmatprep.subr.bf16.mxu0 0
        %1833 = vmatpush1.bf16.xpose.msra.mxu0 0
        %1834 = vmatprep.subr.bf16.mxu0 0
        %1835 = vmatpush1.bf16.xpose.msra.mxu0 0
        %1836 = vmatprep.subr.bf16.mxu0 0
        %1837 = vmatpush1.bf16.xpose.msra.mxu0 0
        %1838 = vmatprep.subr.bf16.mxu0 0
        %1839 = vmatpush1.bf16.xpose.msra.mxu0 %v1822
        %1840 = vmatprep.subr.bf16.mxu0 0
        %1841 = vmatpush2.bf16.xpose.msra.mxu0 0
        %1842 = vmatprep.subr.bf16.mxu0 0
        %1843 = vmatpush2.bf16.xpose.msra.mxu0 0
        %1844 = vmatprep.subr.bf16.mxu0 0
        %1845 = vmatpush2.bf16.xpose.msra.mxu0 0
        %1846 = vmatprep.subr.bf16.mxu0 0
        %1847 = vmatpush2.bf16.xpose.msra.mxu0 0
        %1848 = vmatprep.subr.bf16.mxu0 0
        %1849 = vmatpush2.bf16.xpose.msra.mxu0 0
        %1850 = vmatprep.subr.bf16.mxu0 0
        %1851 = vmatpush2.bf16.xpose.msra.mxu0 0
        %1852 = vmatprep.subr.bf16.mxu0 0
        %1853 = vmatpush2.bf16.xpose.msra.mxu0 0
        %1854 = vmatprep.subr.bf16.mxu0 0
        %1855 = vmatpush2.bf16.xpose.msra.mxu0 0
        %1856 = vmatprep.mubr.bf16.mxu0 0
        %1857 = vmatmul.mubr.bf16.gmra.mxu0 %v1819
        %v1858 = vpop.f32.mrf.mxu0
        %v1859 = vadd.f32 0.0, %v1858
        %v1860 = vpop.f32.mrf.mxu0
        %v1861 = vpop.f32.mrf.mxu0
        %v1862 = vpop.f32.mrf.mxu0
        %1863 = vdwg.mxu0
        %v1865 = vsel %vm980, %v1797, 0
        %v1868 = vsel %vm980, %v1805, 0
        %1870 = vmatprep.subr.bf16.mxu0 0
        %1871 = vmatpush1.bf16.xpose.msra.mxu0 0
        %1872 = vmatprep.subr.bf16.mxu0 0
        %1873 = vmatpush1.bf16.xpose.msra.mxu0 0
        %1874 = vmatprep.subr.bf16.mxu0 0
        %1875 = vmatpush1.bf16.xpose.msra.mxu0 0
        %1876 = vmatprep.subr.bf16.mxu0 0
        %1877 = vmatpush1.bf16.xpose.msra.mxu0 0
        %1878 = vmatprep.subr.bf16.mxu0 0
        %1879 = vmatpush1.bf16.xpose.msra.mxu0 0
        %1880 = vmatprep.subr.bf16.mxu0 0
        %1881 = vmatpush1.bf16.xpose.msra.mxu0 0
        %1882 = vmatprep.subr.bf16.mxu0 0
        %1883 = vmatpush1.bf16.xpose.msra.mxu0 0
        %1884 = vmatprep.subr.bf16.mxu0 0
        %1885 = vmatpush1.bf16.xpose.msra.mxu0 %v1868
        %1886 = vmatprep.subr.bf16.mxu0 0
        %1887 = vmatpush2.bf16.xpose.msra.mxu0 0
        %1888 = vmatprep.subr.bf16.mxu0 0
        %1889 = vmatpush2.bf16.xpose.msra.mxu0 0
        %1890 = vmatprep.subr.bf16.mxu0 0
        %1891 = vmatpush2.bf16.xpose.msra.mxu0 0
        %1892 = vmatprep.subr.bf16.mxu0 0
        %1893 = vmatpush2.bf16.xpose.msra.mxu0 0
        %1894 = vmatprep.subr.bf16.mxu0 0
        %1895 = vmatpush2.bf16.xpose.msra.mxu0 0
        %1896 = vmatprep.subr.bf16.mxu0 0
        %1897 = vmatpush2.bf16.xpose.msra.mxu0 0
        %1898 = vmatprep.subr.bf16.mxu0 0
        %1899 = vmatpush2.bf16.xpose.msra.mxu0 0
        %1900 = vmatprep.subr.bf16.mxu0 0
        %1901 = vmatpush2.bf16.xpose.msra.mxu0 0
        %1902 = vmatprep.mubr.bf16.mxu0 0
        %1903 = vmatmul.mubr.bf16.gmra.mxu0 %v1865
        %v1904 = vpop.f32.mrf.mxu0
        %v1905 = vadd.f32 0.0, %v1904
        %v1906 = vpop.f32.mrf.mxu0
        %v1907 = vpop.f32.mrf.mxu0
        %v1908 = vpop.f32.mrf.mxu0
        %1909 = vdwg.mxu0
        %v1911 = vsel %vm980, %v1799, 0
        %v1914 = vsel %vm980, %v1807, 0
        %1916 = vmatprep.subr.bf16.mxu0 0
        %1917 = vmatpush1.bf16.xpose.msra.mxu0 0
        %1918 = vmatprep.subr.bf16.mxu0 0
        %1919 = vmatpush1.bf16.xpose.msra.mxu0 0
        %1920 = vmatprep.subr.bf16.mxu0 0
        %1921 = vmatpush1.bf16.xpose.msra.mxu0 0
        %1922 = vmatprep.subr.bf16.mxu0 0
        %1923 = vmatpush1.bf16.xpose.msra.mxu0 0
        %1924 = vmatprep.subr.bf16.mxu0 0
        %1925 = vmatpush1.bf16.xpose.msra.mxu0 0
        %1926 = vmatprep.subr.bf16.mxu0 0
        %1927 = vmatpush1.bf16.xpose.msra.mxu0 0
        %1928 = vmatprep.subr.bf16.mxu0 0
        %1929 = vmatpush1.bf16.xpose.msra.mxu0 0
        %1930 = vmatprep.subr.bf16.mxu0 0
        %1931 = vmatpush1.bf16.xpose.msra.mxu0 %v1914
        %1932 = vmatprep.subr.bf16.mxu0 0
        %1933 = vmatpush2.bf16.xpose.msra.mxu0 0
        %1934 = vmatprep.subr.bf16.mxu0 0
        %1935 = vmatpush2.bf16.xpose.msra.mxu0 0
        %1936 = vmatprep.subr.bf16.mxu0 0
        %1937 = vmatpush2.bf16.xpose.msra.mxu0 0
        %1938 = vmatprep.subr.bf16.mxu0 0
        %1939 = vmatpush2.bf16.xpose.msra.mxu0 0
        %1940 = vmatprep.subr.bf16.mxu0 0
        %1941 = vmatpush2.bf16.xpose.msra.mxu0 0
        %1942 = vmatprep.subr.bf16.mxu0 0
        %1943 = vmatpush2.bf16.xpose.msra.mxu0 0
        %1944 = vmatprep.subr.bf16.mxu0 0
        %1945 = vmatpush2.bf16.xpose.msra.mxu0 0
        %1946 = vmatprep.subr.bf16.mxu0 0
        %1947 = vmatpush2.bf16.xpose.msra.mxu0 0
        %1948 = vmatprep.mubr.bf16.mxu0 0
        %1949 = vmatmul.mubr.bf16.gmra.mxu0 %v1911
        %v1950 = vpop.f32.mrf.mxu0
        %v1951 = vadd.f32 0.0, %v1950
        %v1952 = vpop.f32.mrf.mxu0
        %v1953 = vpop.f32.mrf.mxu0
        %v1954 = vpop.f32.mrf.mxu0
        %1955 = vdwg.mxu0
        %v1957 = vsel %vm980, %v1801, 0
        %v1960 = vsel %vm980, %v1809, 0
        %1962 = vmatprep.subr.bf16.mxu0 0
        %1963 = vmatpush1.bf16.xpose.msra.mxu0 0
        %1964 = vmatprep.subr.bf16.mxu0 0
        %1965 = vmatpush1.bf16.xpose.msra.mxu0 0
        %1966 = vmatprep.subr.bf16.mxu0 0
        %1967 = vmatpush1.bf16.xpose.msra.mxu0 0
        %1968 = vmatprep.subr.bf16.mxu0 0
        %1969 = vmatpush1.bf16.xpose.msra.mxu0 0
        %1970 = vmatprep.subr.bf16.mxu0 0
        %1971 = vmatpush1.bf16.xpose.msra.mxu0 0
        %1972 = vmatprep.subr.bf16.mxu0 0
        %1973 = vmatpush1.bf16.xpose.msra.mxu0 0
        %1974 = vmatprep.subr.bf16.mxu0 0
        %1975 = vmatpush1.bf16.xpose.msra.mxu0 0
        %1976 = vmatprep.subr.bf16.mxu0 0
        %1977 = vmatpush1.bf16.xpose.msra.mxu0 %v1960
        %1978 = vmatprep.subr.bf16.mxu0 0
        %1979 = vmatpush2.bf16.xpose.msra.mxu0 0
        %1980 = vmatprep.subr.bf16.mxu0 0
        %1981 = vmatpush2.bf16.xpose.msra.mxu0 0
        %1982 = vmatprep.subr.bf16.mxu0 0
        %1983 = vmatpush2.bf16.xpose.msra.mxu0 0
        %1984 = vmatprep.subr.bf16.mxu0 0
        %1985 = vmatpush2.bf16.xpose.msra.mxu0 0
        %1986 = vmatprep.subr.bf16.mxu0 0
        %1987 = vmatpush2.bf16.xpose.msra.mxu0 0
        %1988 = vmatprep.subr.bf16.mxu0 0
        %1989 = vmatpush2.bf16.xpose.msra.mxu0 0
        %1990 = vmatprep.subr.bf16.mxu0 0
        %1991 = vmatpush2.bf16.xpose.msra.mxu0 0
        %1992 = vmatprep.subr.bf16.mxu0 0
        %1993 = vmatpush2.bf16.xpose.msra.mxu0 0
        %1994 = vmatprep.mubr.bf16.mxu0 0
        %1995 = vmatmul.mubr.bf16.gmra.mxu0 %v1957
        %v1996 = vpop.f32.mrf.mxu0
        %v1997 = vadd.f32 0.0, %v1996
        %v1998 = vpop.f32.mrf.mxu0
        %v1999 = vpop.f32.mrf.mxu0
        %v2000 = vpop.f32.mrf.mxu0
        %2001 = vdwg.mxu0
        %v2002 = vsel %vm713, 1, 0
        %vm2003 = vcmp.eq.s32.totalorder %v2002, 1
        %v2004 = vsel %vm2003, %v1859, -1000000.0
        %v2005 = vsel %vm2003, %v1905, -1000000.0
        %v2006 = vsel %vm2003, %v1951, -1000000.0
        %v2007 = vsel %vm2003, %v1997, -1000000.0
        %v2008 = vsel %vm1171, %v2004, -inf
        %2009 = vmax.xlane.f32.xlu0 %v2008
        %v2010 = vpop.xlane.xlu0 %2009
        %v2011 = vsel %vm1171, %v2005, -inf
        %2012 = vmax.xlane.f32.xlu0 %v2011
        %v2013 = vpop.xlane.xlu0 %2012
        %v2014 = vsel %vm1171, %v2006, -inf
        %2015 = vmax.xlane.f32.xlu0 %v2014
        %v2016 = vpop.xlane.xlu0 %2015
        %v2017 = vsel %vm1171, %v2007, -inf
        %2018 = vmax.xlane.f32.xlu0 %v2017
        %v2019 = vpop.xlane.xlu0 %2018
        %v2020 = vsub.f32 %v2004, %v2010
        %v2021 = vsub.f32 %v2005, %v2013
        %v2022 = vsub.f32 %v2006, %v2016
        %v2023 = vsub.f32 %v2007, %v2019
        %v2024 = vmul.f32 %v2020, 1.442695
        %v2025 = vpow.pop %v2024
        %v2026 = vmul.f32 %v2021, 1.442695
        %v2027 = vpow.pop %v2026
        %v2028 = vmul.f32 %v2022, 1.442695
        %v2029 = vpow.pop %v2028
        %v2030 = vmul.f32 %v2023, 1.442695
        %v2031 = vpow.pop %v2030
        %v2032 = vsel %vm1171, %v2025, 0.0
        %2033 = vadd.xlane.f32.xlu0 %v2032
        %v2034 = vpop.xlane.xlu0 %2033
        %v2035 = vsel %vm1171, %v2027, 0.0
        %2036 = vadd.xlane.f32.xlu0 %v2035
        %v2037 = vpop.xlane.xlu0 %2036
        %v2038 = vsel %vm1171, %v2029, 0.0
        %2039 = vadd.xlane.f32.xlu0 %v2038
        %v2040 = vpop.xlane.xlu0 %2039
        %v2041 = vsel %vm1171, %v2031, 0.0
        %2042 = vadd.xlane.f32.xlu0 %v2041
        %v2043 = vpop.xlane.xlu0 %2042
        %v2044 = vrcp.pop %v2034
        %v2045 = vrcp.pop %v2037
        %v2046 = vrcp.pop %v2040
        %v2047 = vrcp.pop %v2043
        %v2048 = vmul.f32 %v2025, %v2044
        %v2049 = vmul.f32 %v2027, %v2045
        %v2050 = vmul.f32 %v2029, %v2046
        %v2051 = vmul.f32 %v2031, %v2047
        %v2052 = vpack.c.bf16 %v2048, %v2048
        %v2053 = vpack.c.bf16 %v2049, %v2049
        %v2054 = vpack.c.bf16 %v2050, %v2050
        %v2055 = vpack.c.bf16 %v2051, %v2051
        %v2057 = vsel %vm1171, %v2052, 0
        %v2060 = vsel %vm1223, %v1810, 0
        %2062 = vmatprep.subr.bf16.mxu0 0
        %2063 = vmatpush1.bf16.msra.mxu0 0
        %2064 = vmatprep.subr.bf16.mxu0 0
        %2065 = vmatpush1.bf16.msra.mxu0 0
        %2066 = vmatprep.subr.bf16.mxu0 0
        %2067 = vmatpush1.bf16.msra.mxu0 0
        %2068 = vmatprep.subr.bf16.mxu0 0
        %2069 = vmatpush1.bf16.msra.mxu0 0
        %2070 = vmatprep.subr.bf16.mxu0 0
        %2071 = vmatpush1.bf16.msra.mxu0 0
        %2072 = vmatprep.subr.bf16.mxu0 0
        %2073 = vmatpush1.bf16.msra.mxu0 0
        %2074 = vmatprep.subr.bf16.mxu0 0
        %2075 = vmatpush1.bf16.msra.mxu0 0
        %2076 = vmatprep.subr.bf16.mxu0 0
        %2077 = vmatpush1.bf16.msra.mxu0 %v2060
        %2078 = vmatprep.subr.bf16.mxu0 0
        %2079 = vmatpush2.bf16.msra.mxu0 0
        %2080 = vmatprep.subr.bf16.mxu0 0
        %2081 = vmatpush2.bf16.msra.mxu0 0
        %2082 = vmatprep.subr.bf16.mxu0 0
        %2083 = vmatpush2.bf16.msra.mxu0 0
        %2084 = vmatprep.subr.bf16.mxu0 0
        %2085 = vmatpush2.bf16.msra.mxu0 0
        %2086 = vmatprep.subr.bf16.mxu0 0
        %2087 = vmatpush2.bf16.msra.mxu0 0
        %2088 = vmatprep.subr.bf16.mxu0 0
        %2089 = vmatpush2.bf16.msra.mxu0 0
        %2090 = vmatprep.subr.bf16.mxu0 0
        %2091 = vmatpush2.bf16.msra.mxu0 0
        %2092 = vmatprep.subr.bf16.mxu0 0
        %2093 = vmatpush2.bf16.msra.mxu0 0
        %2094 = vmatprep.mubr.bf16.mxu0 0
        %2095 = vmatmul.mubr.bf16.gmra.mxu0 %v2057
        %v2096 = vpop.f32.mrf.mxu0
        %v2097 = vadd.f32 0.0, %v2096
        %v2098 = vpop.f32.mrf.mxu0
        %v2099 = vpop.f32.mrf.mxu0
        %v2100 = vpop.f32.mrf.mxu0
        %2101 = vdwg.mxu0
        %v2103 = vsel %vm1171, %v2053, 0
        %v2106 = vsel %vm1223, %v1813, 0
        %2108 = vmatprep.subr.bf16.mxu0 0
        %2109 = vmatpush1.bf16.msra.mxu0 0
        %2110 = vmatprep.subr.bf16.mxu0 0
        %2111 = vmatpush1.bf16.msra.mxu0 0
        %2112 = vmatprep.subr.bf16.mxu0 0
        %2113 = vmatpush1.bf16.msra.mxu0 0
        %2114 = vmatprep.subr.bf16.mxu0 0
        %2115 = vmatpush1.bf16.msra.mxu0 0
        %2116 = vmatprep.subr.bf16.mxu0 0
        %2117 = vmatpush1.bf16.msra.mxu0 0
        %2118 = vmatprep.subr.bf16.mxu0 0
        %2119 = vmatpush1.bf16.msra.mxu0 0
        %2120 = vmatprep.subr.bf16.mxu0 0
        %2121 = vmatpush1.bf16.msra.mxu0 0
        %2122 = vmatprep.subr.bf16.mxu0 0
        %2123 = vmatpush1.bf16.msra.mxu0 %v2106
        %2124 = vmatprep.subr.bf16.mxu0 0
        %2125 = vmatpush2.bf16.msra.mxu0 0
        %2126 = vmatprep.subr.bf16.mxu0 0
        %2127 = vmatpush2.bf16.msra.mxu0 0
        %2128 = vmatprep.subr.bf16.mxu0 0
        %2129 = vmatpush2.bf16.msra.mxu0 0
        %2130 = vmatprep.subr.bf16.mxu0 0
        %2131 = vmatpush2.bf16.msra.mxu0 0
        %2132 = vmatprep.subr.bf16.mxu0 0
        %2133 = vmatpush2.bf16.msra.mxu0 0
        %2134 = vmatprep.subr.bf16.mxu0 0
        %2135 = vmatpush2.bf16.msra.mxu0 0
        %2136 = vmatprep.subr.bf16.mxu0 0
        %2137 = vmatpush2.bf16.msra.mxu0 0
        %2138 = vmatprep.subr.bf16.mxu0 0
        %2139 = vmatpush2.bf16.msra.mxu0 0
        %2140 = vmatprep.mubr.bf16.mxu0 0
        %2141 = vmatmul.mubr.bf16.gmra.mxu0 %v2103
        %v2142 = vpop.f32.mrf.mxu0
        %v2143 = vadd.f32 0.0, %v2142
        %v2144 = vpop.f32.mrf.mxu0
        %v2145 = vpop.f32.mrf.mxu0
        %v2146 = vpop.f32.mrf.mxu0
        %2147 = vdwg.mxu0
        %v2149 = vsel %vm1171, %v2054, 0
        %v2152 = vsel %vm1223, %v1815, 0
        %2154 = vmatprep.subr.bf16.mxu0 0
        %2155 = vmatpush1.bf16.msra.mxu0 0
        %2156 = vmatprep.subr.bf16.mxu0 0
        %2157 = vmatpush1.bf16.msra.mxu0 0
        %2158 = vmatprep.subr.bf16.mxu0 0
        %2159 = vmatpush1.bf16.msra.mxu0 0
        %2160 = vmatprep.subr.bf16.mxu0 0
        %2161 = vmatpush1.bf16.msra.mxu0 0
        %2162 = vmatprep.subr.bf16.mxu0 0
        %2163 = vmatpush1.bf16.msra.mxu0 0
        %2164 = vmatprep.subr.bf16.mxu0 0
        %2165 = vmatpush1.bf16.msra.mxu0 0
        %2166 = vmatprep.subr.bf16.mxu0 0
        %2167 = vmatpush1.bf16.msra.mxu0 0
        %2168 = vmatprep.subr.bf16.mxu0 0
        %2169 = vmatpush1.bf16.msra.mxu0 %v2152
        %2170 = vmatprep.subr.bf16.mxu0 0
        %2171 = vmatpush2.bf16.msra.mxu0 0
        %2172 = vmatprep.subr.bf16.mxu0 0
        %2173 = vmatpush2.bf16.msra.mxu0 0
        %2174 = vmatprep.subr.bf16.mxu0 0
        %2175 = vmatpush2.bf16.msra.mxu0 0
        %2176 = vmatprep.subr.bf16.mxu0 0
        %2177 = vmatpush2.bf16.msra.mxu0 0
        %2178 = vmatprep.subr.bf16.mxu0 0
        %2179 = vmatpush2.bf16.msra.mxu0 0
        %2180 = vmatprep.subr.bf16.mxu0 0
        %2181 = vmatpush2.bf16.msra.mxu0 0
        %2182 = vmatprep.subr.bf16.mxu0 0
        %2183 = vmatpush2.bf16.msra.mxu0 0
        %2184 = vmatprep.subr.bf16.mxu0 0
        %2185 = vmatpush2.bf16.msra.mxu0 0
        %2186 = vmatprep.mubr.bf16.mxu0 0
        %2187 = vmatmul.mubr.bf16.gmra.mxu0 %v2149
        %v2188 = vpop.f32.mrf.mxu0
        %v2189 = vadd.f32 0.0, %v2188
        %v2190 = vpop.f32.mrf.mxu0
        %v2191 = vpop.f32.mrf.mxu0
        %v2192 = vpop.f32.mrf.mxu0
        %2193 = vdwg.mxu0
        %v2195 = vsel %vm1171, %v2055, 0
        %v2198 = vsel %vm1223, %v1817, 0
        %2200 = vmatprep.subr.bf16.mxu0 0
        %2201 = vmatpush1.bf16.msra.mxu0 0
        %2202 = vmatprep.subr.bf16.mxu0 0
        %2203 = vmatpush1.bf16.msra.mxu0 0
        %2204 = vmatprep.subr.bf16.mxu0 0
        %2205 = vmatpush1.bf16.msra.mxu0 0
        %2206 = vmatprep.subr.bf16.mxu0 0
        %2207 = vmatpush1.bf16.msra.mxu0 0
        %2208 = vmatprep.subr.bf16.mxu0 0
        %2209 = vmatpush1.bf16.msra.mxu0 0
        %2210 = vmatprep.subr.bf16.mxu0 0
        %2211 = vmatpush1.bf16.msra.mxu0 0
        %2212 = vmatprep.subr.bf16.mxu0 0
        %2213 = vmatpush1.bf16.msra.mxu0 0
        %2214 = vmatprep.subr.bf16.mxu0 0
        %2215 = vmatpush1.bf16.msra.mxu0 %v2198
        %2216 = vmatprep.subr.bf16.mxu0 0
        %2217 = vmatpush2.bf16.msra.mxu0 0
        %2218 = vmatprep.subr.bf16.mxu0 0
        %2219 = vmatpush2.bf16.msra.mxu0 0
        %2220 = vmatprep.subr.bf16.mxu0 0
        %2221 = vmatpush2.bf16.msra.mxu0 0
        %2222 = vmatprep.subr.bf16.mxu0 0
        %2223 = vmatpush2.bf16.msra.mxu0 0
        %2224 = vmatprep.subr.bf16.mxu0 0
        %2225 = vmatpush2.bf16.msra.mxu0 0
        %2226 = vmatprep.subr.bf16.mxu0 0
        %2227 = vmatpush2.bf16.msra.mxu0 0
        %2228 = vmatprep.subr.bf16.mxu0 0
        %2229 = vmatpush2.bf16.msra.mxu0 0
        %2230 = vmatprep.subr.bf16.mxu0 0
        %2231 = vmatpush2.bf16.msra.mxu0 0
        %2232 = vmatprep.mubr.bf16.mxu0 0
        %2233 = vmatmul.mubr.bf16.gmra.mxu0 %v2195
        %v2234 = vpop.f32.mrf.mxu0
        %v2235 = vadd.f32 0.0, %v2234
        %v2236 = vpop.f32.mrf.mxu0
        %v2237 = vpop.f32.mrf.mxu0
        %v2238 = vpop.f32.mrf.mxu0
        %2239 = vdwg.mxu0
        %2241 = vrot.lane.b32.xlu0 %v2143, 32
        %v2242 = vpop.permute.xlu0 %2241
        %2245 = vrot.lane.b32.xlu0 %v2189, 64
        %v2246 = vpop.permute.xlu0 %2245
        %2249 = vrot.lane.b32.xlu0 %v2235, 96
        %v2250 = vpop.permute.xlu0 %2249
        %v2252 = vsel %vm980, %v2097, %v2242
        %v2253 = vsel %vm1418, %v2252, %v2246
        %v2254 = vsel %vm1420, %v2253, %v2250
        %v2255 = vpack.c.bf16 %v2254, %v2254
        %v2256 = vld [vmem:[#allocation18] sm:$0xf]
        %v2257 = vld [vmem:[#allocation18 + $0x4] sm:$0xf]
        %v2258 = vld [vmem:[#allocation18 + $0x8] sm:$0xf]
        %v2259 = vld [vmem:[#allocation18 + $0xc] sm:$0xf]
        %v2260 = vld [vmem:[#allocation18 + $0x10] sm:$0xf]
        %v2261 = vld [vmem:[#allocation18 + $0x14] sm:$0xf]
        %v2262 = vld [vmem:[#allocation18 + $0x18] sm:$0xf]
        %v2263 = vld [vmem:[#allocation18 + $0x1c] sm:$0xf]
        %v2264 = vld [vmem:[#allocation18 + $0x20] sm:$0xf]
        %v2265 = vld [vmem:[#allocation18 + $0x24] sm:$0xf]
        %v2266 = vld [vmem:[#allocation18 + $0x28] sm:$0xf]
        %v2267 = vld [vmem:[#allocation18 + $0x2c] sm:$0xf]
        %v2268 = vld [vmem:[#allocation18 + $0x30] sm:$0xf]
        %v2269 = vld [vmem:[#allocation18 + $0x34] sm:$0xf]
        %v2270 = vld [vmem:[#allocation18 + $0x38] sm:$0xf]
        %v2271 = vld [vmem:[#allocation18 + $0x3c] sm:$0xf]
        %v2288 = vunpack.c.l.b16 %v2256
        %v2289 = vunpack.c.l.b16 %v2257
        %v2290 = vunpack.c.l.b16 %v2258
        %v2291 = vunpack.c.l.b16 %v2259
        %v2292 = vunpack.c.l.b16 %v2260
        %v2293 = vunpack.c.l.b16 %v2261
        %v2294 = vunpack.c.l.b16 %v2262
        %v2295 = vunpack.c.l.b16 %v2263
        %v2296 = vunpack.c.l.b16 %v2264
        %v2297 = vunpack.c.l.b16 %v2265
        %v2298 = vunpack.c.l.b16 %v2266
        %v2299 = vunpack.c.l.b16 %v2267
        %v2300 = vunpack.c.l.b16 %v2268
        %v2301 = vunpack.c.l.b16 %v2269
        %v2302 = vunpack.c.l.b16 %v2270
        %v2303 = vunpack.c.l.b16 %v2271
        %v2304 = vpack.c.b16 %v2289, %v2288
        %v2305 = vpack.c.b16 %v2291, %v2290
        %v2306 = vpack.c.b16 %v2293, %v2292
        %v2307 = vpack.c.b16 %v2295, %v2294
        %v2308 = vpack.c.b16 %v2297, %v2296
        %v2309 = vpack.c.b16 %v2299, %v2298
        %v2310 = vpack.c.b16 %v2301, %v2300
        %v2311 = vpack.c.b16 %v2303, %v2302
        %2320 = vmatprep.subr.bf16.mxu0 0
        %2321 = vmatpush1.bf16.msra.mxu0 %v2311
        %2322 = vmatprep.subr.bf16.mxu0 0
        %2323 = vmatpush1.bf16.msra.mxu0 %v2310
        %2324 = vmatprep.subr.bf16.mxu0 0
        %2325 = vmatpush1.bf16.msra.mxu0 %v2309
        %2326 = vmatprep.subr.bf16.mxu0 0
        %2327 = vmatpush1.bf16.msra.mxu0 %v2308
        %2328 = vmatprep.subr.bf16.mxu0 0
        %2329 = vmatpush1.bf16.msra.mxu0 %v2307
        %2330 = vmatprep.subr.bf16.mxu0 0
        %2331 = vmatpush1.bf16.msra.mxu0 %v2306
        %2332 = vmatprep.subr.bf16.mxu0 0
        %2333 = vmatpush1.bf16.msra.mxu0 %v2305
        %2334 = vmatprep.subr.bf16.mxu0 0
        %2335 = vmatpush1.bf16.msra.mxu0 %v2304
        %2336 = vmatprep.subr.bf16.mxu0 0
        %2337 = vmatpush2.bf16.msra.mxu0 0
        %2338 = vmatprep.subr.bf16.mxu0 0
        %2339 = vmatpush2.bf16.msra.mxu0 0
        %2340 = vmatprep.subr.bf16.mxu0 0
        %2341 = vmatpush2.bf16.msra.mxu0 0
        %2342 = vmatprep.subr.bf16.mxu0 0
        %2343 = vmatpush2.bf16.msra.mxu0 0
        %2344 = vmatprep.subr.bf16.mxu0 0
        %2345 = vmatpush2.bf16.msra.mxu0 0
        %2346 = vmatprep.subr.bf16.mxu0 0
        %2347 = vmatpush2.bf16.msra.mxu0 0
        %2348 = vmatprep.subr.bf16.mxu0 0
        %2349 = vmatpush2.bf16.msra.mxu0 0
        %2350 = vmatprep.subr.bf16.mxu0 0
        %2351 = vmatpush2.bf16.msra.mxu0 0
        %2352 = vmatprep.mubr.bf16.mxu0 0
        %2353 = vmatmul.mubr.bf16.gmra.mxu0 %v2255
        %v2354 = vpop.f32.mrf.mxu0
        %v2355 = vadd.f32 0.0, %v2354
        %v2356 = vpop.f32.mrf.mxu0
        %v2357 = vpop.f32.mrf.mxu0
        %v2358 = vpop.f32.mrf.mxu0
        %2359 = vdwg.mxu0
        %v2360 = vadd.f32 %v1551, %v2355
        %v2361 = vld [vmem:[%s10 + $0x1] sm:$0x1]
        %v2362 = vld [vmem:[%s11 + $0x1] sm:$0x1]
        %2363 = vadd.xlane.f32.xlu0 %v2360
        %v2364 = vpop.xlane.xlu0 %2363
        %v2365 = vmul.f32 %v2364, %v1532
        %v2366 = vsub.f32 %v2360, %v2365
        %v2367 = vmul.f32 %v2366, %v2366
        %2368 = vadd.xlane.f32.xlu0 %v2367
        %v2369 = vpop.xlane.xlu0 %2368
        %v2370 = vmul.f32 %v2369, %v1532
        %v2371 = vadd.f32 %v2370, 1e-05
        %v2372 = vrsqrt.pop %v2371
        %v2373 = vmul.f32 %v2366, %v2372
        %v2374 = vlaneseq
        %v2375 = vshrl.u32 %v2374, 7
        %v2376 = vsub.s32 0, %v2375
        %v2377 = vrot.slane %v2361, %v2376
        %v2378 = vmul.f32 %v2373, %v2377
        %v2379 = vlaneseq
        %v2380 = vshrl.u32 %v2379, 7
        %v2381 = vsub.s32 0, %v2380
        %v2382 = vrot.slane %v2362, %v2381
        %v2383 = vadd.f32 %v2378, %v2382
        %v2384 = vpack.c.bf16 %v2383, %v2383
        %v2385 = vld [vmem:[#allocation19] sm:$0xff]
        %v2386 = vld [vmem:[#allocation19 + $0x8] sm:$0xff]
        %v2387 = vld [vmem:[#allocation19 + $0x10] sm:$0xff]
        %v2388 = vld [vmem:[#allocation19 + $0x18] sm:$0xff]
        %v2389 = vld [vmem:[#allocation19 + $0x20] sm:$0xff]
        %v2390 = vld [vmem:[#allocation19 + $0x28] sm:$0xff]
        %v2391 = vld [vmem:[#allocation19 + $0x30] sm:$0xff]
        %v2392 = vld [vmem:[#allocation19 + $0x38] sm:$0xff]
        %v2393 = vld [vmem:[#allocation19 + $0x40] sm:$0xff]
        %v2394 = vld [vmem:[#allocation19 + $0x48] sm:$0xff]
        %v2395 = vld [vmem:[#allocation19 + $0x50] sm:$0xff]
        %v2396 = vld [vmem:[#allocation19 + $0x58] sm:$0xff]
        %v2397 = vld [vmem:[#allocation19 + $0x60] sm:$0xff]
        %v2398 = vld [vmem:[#allocation19 + $0x68] sm:$0xff]
        %v2399 = vld [vmem:[#allocation19 + $0x70] sm:$0xff]
        %v2400 = vld [vmem:[#allocation19 + $0x78] sm:$0xff]
        %v2401 = vld [vmem:[%s13] sm:$0x3]
        %v2403 = vlaneseq
        %v2404 = vshrl.u32 %v2403, 7
        %v2405 = vsub.s32 0, %v2404
        %v2406 = vrot.slane %v2401, %v2405
        %v2407 = vlaneseq
        %v2408 = vshrl.u32 %v2407, 7
        %v2409 = vsub.s32 1, %v2408
        %v2410 = vrot.slane %v2401, %v2409
        %v2429 = vunpack.c.l.b16 %v2385
        %v2430 = vunpack.c.h.b16 %v2385
        %v2431 = vunpack.c.l.b16 %v2386
        %v2432 = vunpack.c.h.b16 %v2386
        %v2433 = vunpack.c.l.b16 %v2387
        %v2434 = vunpack.c.h.b16 %v2387
        %v2435 = vunpack.c.l.b16 %v2388
        %v2436 = vunpack.c.h.b16 %v2388
        %v2437 = vunpack.c.l.b16 %v2389
        %v2438 = vunpack.c.h.b16 %v2389
        %v2439 = vunpack.c.l.b16 %v2390
        %v2440 = vunpack.c.h.b16 %v2390
        %v2441 = vunpack.c.l.b16 %v2391
        %v2442 = vunpack.c.h.b16 %v2391
        %v2443 = vunpack.c.l.b16 %v2392
        %v2444 = vunpack.c.h.b16 %v2392
        %v2445 = vunpack.c.l.b16 %v2393
        %v2446 = vunpack.c.h.b16 %v2393
        %v2447 = vunpack.c.l.b16 %v2394
        %v2448 = vunpack.c.h.b16 %v2394
        %v2449 = vunpack.c.l.b16 %v2395
        %v2450 = vunpack.c.h.b16 %v2395
        %v2451 = vunpack.c.l.b16 %v2396
        %v2452 = vunpack.c.h.b16 %v2396
        %v2453 = vunpack.c.l.b16 %v2397
        %v2454 = vunpack.c.h.b16 %v2397
        %v2455 = vunpack.c.l.b16 %v2398
        %v2456 = vunpack.c.h.b16 %v2398
        %v2457 = vunpack.c.l.b16 %v2399
        %v2458 = vunpack.c.h.b16 %v2399
        %v2459 = vunpack.c.l.b16 %v2400
        %v2460 = vunpack.c.h.b16 %v2400
        %v2461 = vpack.c.b16 %v2431, %v2429
        %v2462 = vpack.c.b16 %v2432, %v2430
        %v2463 = vpack.c.b16 %v2435, %v2433
        %v2464 = vpack.c.b16 %v2436, %v2434
        %v2465 = vpack.c.b16 %v2439, %v2437
        %v2466 = vpack.c.b16 %v2440, %v2438
        %v2467 = vpack.c.b16 %v2443, %v2441
        %v2468 = vpack.c.b16 %v2444, %v2442
        %v2469 = vpack.c.b16 %v2447, %v2445
        %v2470 = vpack.c.b16 %v2448, %v2446
        %v2471 = vpack.c.b16 %v2451, %v2449
        %v2472 = vpack.c.b16 %v2452, %v2450
        %v2473 = vpack.c.b16 %v2455, %v2453
        %v2474 = vpack.c.b16 %v2456, %v2454
        %v2475 = vpack.c.b16 %v2459, %v2457
        %v2476 = vpack.c.b16 %v2460, %v2458
        %2493 = vmatprep.subr.bf16.mxu0 %v2476
        %2494 = vmatpush1.bf16.msra.mxu0 %v2475
        %2495 = vmatprep.subr.bf16.mxu0 %v2474
        %2496 = vmatpush1.bf16.msra.mxu0 %v2473
        %2497 = vmatprep.subr.bf16.mxu0 %v2472
        %2498 = vmatpush1.bf16.msra.mxu0 %v2471
        %2499 = vmatprep.subr.bf16.mxu0 %v2470
        %2500 = vmatpush1.bf16.msra.mxu0 %v2469
        %2501 = vmatprep.subr.bf16.mxu0 %v2468
        %2502 = vmatpush1.bf16.msra.mxu0 %v2467
        %2503 = vmatprep.subr.bf16.mxu0 %v2466
        %2504 = vmatpush1.bf16.msra.mxu0 %v2465
        %2505 = vmatprep.subr.bf16.mxu0 %v2464
        %2506 = vmatpush1.bf16.msra.mxu0 %v2463
        %2507 = vmatprep.subr.bf16.mxu0 %v2462
        %2508 = vmatpush1.bf16.msra.mxu0 %v2461
        %2509 = vmatprep.subr.bf16.mxu0 0
        %2510 = vmatpush2.bf16.msra.mxu0 0
        %2511 = vmatprep.subr.bf16.mxu0 0
        %2512 = vmatpush2.bf16.msra.mxu0 0
        %2513 = vmatprep.subr.bf16.mxu0 0
        %2514 = vmatpush2.bf16.msra.mxu0 0
        %2515 = vmatprep.subr.bf16.mxu0 0
        %2516 = vmatpush2.bf16.msra.mxu0 0
        %2517 = vmatprep.subr.bf16.mxu0 0
        %2518 = vmatpush2.bf16.msra.mxu0 0
        %2519 = vmatprep.subr.bf16.mxu0 0
        %2520 = vmatpush2.bf16.msra.mxu0 0
        %2521 = vmatprep.subr.bf16.mxu0 0
        %2522 = vmatpush2.bf16.msra.mxu0 0
        %2523 = vmatprep.subr.bf16.mxu0 0
        %2524 = vmatpush2.bf16.msra.mxu0 0
        %2525 = vmatprep.mubr.bf16.mxu0 0
        %2526 = vmatmul.mubr.bf16.gmra.mxu0 %v2384
        %v2527 = vpop.f32.mrf.mxu0
        %v2528 = vadd.f32 %v2406, %v2527
        %v2529 = vpop.f32.mrf.mxu0
        %v2530 = vadd.f32 %v2410, %v2529
        %v2531 = vpop.f32.mrf.mxu0
        %v2532 = vpop.f32.mrf.mxu0
        %2533 = vdwg.mxu0
        %v2534 = vmax.f32 %v2528, 0.0
        %v2535 = vmax.f32 %v2530, 0.0
        %v2536 = vpack.c.bf16 %v2534, %v2534
        %v2537 = vpack.c.bf16 %v2535, %v2535
        %v2538 = vld [vmem:[#allocation21] sm:$0xf]
        %v2539 = vld [vmem:[#allocation21 + $0x4] sm:$0xf]
        %v2540 = vld [vmem:[#allocation21 + $0x8] sm:$0xf]
        %v2541 = vld [vmem:[#allocation21 + $0xc] sm:$0xf]
        %v2542 = vld [vmem:[#allocation21 + $0x10] sm:$0xf]
        %v2543 = vld [vmem:[#allocation21 + $0x14] sm:$0xf]
        %v2544 = vld [vmem:[#allocation21 + $0x18] sm:$0xf]
        %v2545 = vld [vmem:[#allocation21 + $0x1c] sm:$0xf]
        %v2546 = vld [vmem:[#allocation21 + $0x20] sm:$0xf]
        %v2547 = vld [vmem:[#allocation21 + $0x24] sm:$0xf]
        %v2548 = vld [vmem:[#allocation21 + $0x28] sm:$0xf]
        %v2549 = vld [vmem:[#allocation21 + $0x2c] sm:$0xf]
        %v2550 = vld [vmem:[#allocation21 + $0x30] sm:$0xf]
        %v2551 = vld [vmem:[#allocation21 + $0x34] sm:$0xf]
        %v2552 = vld [vmem:[#allocation21 + $0x38] sm:$0xf]
        %v2553 = vld [vmem:[#allocation21 + $0x3c] sm:$0xf]
        %v2554 = vld [vmem:[#allocation21 + $0x40] sm:$0xf]
        %v2555 = vld [vmem:[#allocation21 + $0x44] sm:$0xf]
        %v2556 = vld [vmem:[#allocation21 + $0x48] sm:$0xf]
        %v2557 = vld [vmem:[#allocation21 + $0x4c] sm:$0xf]
        %v2558 = vld [vmem:[#allocation21 + $0x50] sm:$0xf]
        %v2559 = vld [vmem:[#allocation21 + $0x54] sm:$0xf]
        %v2560 = vld [vmem:[#allocation21 + $0x58] sm:$0xf]
        %v2561 = vld [vmem:[#allocation21 + $0x5c] sm:$0xf]
        %v2562 = vld [vmem:[#allocation21 + $0x60] sm:$0xf]
        %v2563 = vld [vmem:[#allocation21 + $0x64] sm:$0xf]
        %v2564 = vld [vmem:[#allocation21 + $0x68] sm:$0xf]
        %v2565 = vld [vmem:[#allocation21 + $0x6c] sm:$0xf]
        %v2566 = vld [vmem:[#allocation21 + $0x70] sm:$0xf]
        %v2567 = vld [vmem:[#allocation21 + $0x74] sm:$0xf]
        %v2568 = vld [vmem:[#allocation21 + $0x78] sm:$0xf]
        %v2569 = vld [vmem:[#allocation21 + $0x7c] sm:$0xf]
        %v2570 = vld [vmem:[%s15] sm:$0x1]
        %v2572 = vlaneseq
        %v2573 = vshrl.u32 %v2572, 7
        %v2574 = vsub.s32 0, %v2573
        %v2575 = vrot.slane %v2570, %v2574
        %v2609 = vunpack.c.l.b16 %v2538
        %v2610 = vunpack.c.l.b16 %v2539
        %v2611 = vunpack.c.l.b16 %v2540
        %v2612 = vunpack.c.l.b16 %v2541
        %v2613 = vunpack.c.l.b16 %v2542
        %v2614 = vunpack.c.l.b16 %v2543
        %v2615 = vunpack.c.l.b16 %v2544
        %v2616 = vunpack.c.l.b16 %v2545
        %v2617 = vunpack.c.l.b16 %v2546
        %v2618 = vunpack.c.l.b16 %v2547
        %v2619 = vunpack.c.l.b16 %v2548
        %v2620 = vunpack.c.l.b16 %v2549
        %v2621 = vunpack.c.l.b16 %v2550
        %v2622 = vunpack.c.l.b16 %v2551
        %v2623 = vunpack.c.l.b16 %v2552
        %v2624 = vunpack.c.l.b16 %v2553
        %v2625 = vunpack.c.l.b16 %v2554
        %v2626 = vunpack.c.l.b16 %v2555
        %v2627 = vunpack.c.l.b16 %v2556
        %v2628 = vunpack.c.l.b16 %v2557
        %v2629 = vunpack.c.l.b16 %v2558
        %v2630 = vunpack.c.l.b16 %v2559
        %v2631 = vunpack.c.l.b16 %v2560
        %v2632 = vunpack.c.l.b16 %v2561
        %v2633 = vunpack.c.l.b16 %v2562
        %v2634 = vunpack.c.l.b16 %v2563
        %v2635 = vunpack.c.l.b16 %v2564
        %v2636 = vunpack.c.l.b16 %v2565
        %v2637 = vunpack.c.l.b16 %v2566
        %v2638 = vunpack.c.l.b16 %v2567
        %v2639 = vunpack.c.l.b16 %v2568
        %v2640 = vunpack.c.l.b16 %v2569
        %v2641 = vpack.c.b16 %v2610, %v2609
        %v2642 = vpack.c.b16 %v2612, %v2611
        %v2643 = vpack.c.b16 %v2614, %v2613
        %v2644 = vpack.c.b16 %v2616, %v2615
        %v2645 = vpack.c.b16 %v2618, %v2617
        %v2646 = vpack.c.b16 %v2620, %v2619
        %v2647 = vpack.c.b16 %v2622, %v2621
        %v2648 = vpack.c.b16 %v2624, %v2623
        %v2649 = vpack.c.b16 %v2626, %v2625
        %v2650 = vpack.c.b16 %v2628, %v2627
        %v2651 = vpack.c.b16 %v2630, %v2629
        %v2652 = vpack.c.b16 %v2632, %v2631
        %v2653 = vpack.c.b16 %v2634, %v2633
        %v2654 = vpack.c.b16 %v2636, %v2635
        %v2655 = vpack.c.b16 %v2638, %v2637
        %v2656 = vpack.c.b16 %v2640, %v2639
        %2673 = vmatprep.subr.bf16.mxu0 0
        %2674 = vmatpush1.bf16.msra.mxu0 %v2648
        %2675 = vmatprep.subr.bf16.mxu0 0
        %2676 = vmatpush1.bf16.msra.mxu0 %v2647
        %2677 = vmatprep.subr.bf16.mxu0 0
        %2678 = vmatpush1.bf16.msra.mxu0 %v2646
        %2679 = vmatprep.subr.bf16.mxu0 0
        %2680 = vmatpush1.bf16.msra.mxu0 %v2645
        %2681 = vmatprep.subr.bf16.mxu0 0
        %2682 = vmatpush1.bf16.msra.mxu0 %v2644
        %2683 = vmatprep.subr.bf16.mxu0 0
        %2684 = vmatpush1.bf16.msra.mxu0 %v2643
        %2685 = vmatprep.subr.bf16.mxu0 0
        %2686 = vmatpush1.bf16.msra.mxu0 %v2642
        %2687 = vmatprep.subr.bf16.mxu0 0
        %2688 = vmatpush1.bf16.msra.mxu0 %v2641
        %2689 = vmatprep.subr.bf16.mxu0 0
        %2690 = vmatpush2.bf16.msra.mxu0 %v2656
        %2691 = vmatprep.subr.bf16.mxu0 0
        %2692 = vmatpush2.bf16.msra.mxu0 %v2655
        %2693 = vmatprep.subr.bf16.mxu0 0
        %2694 = vmatpush2.bf16.msra.mxu0 %v2654
        %2695 = vmatprep.subr.bf16.mxu0 0
        %2696 = vmatpush2.bf16.msra.mxu0 %v2653
        %2697 = vmatprep.subr.bf16.mxu0 0
        %2698 = vmatpush2.bf16.msra.mxu0 %v2652
        %2699 = vmatprep.subr.bf16.mxu0 0
        %2700 = vmatpush2.bf16.msra.mxu0 %v2651
        %2701 = vmatprep.subr.bf16.mxu0 0
        %2702 = vmatpush2.bf16.msra.mxu0 %v2650
        %2703 = vmatprep.subr.bf16.mxu0 0
        %2704 = vmatpush2.bf16.msra.mxu0 %v2649
        %2705 = vmatprep.mubr.bf16.mxu0 %v2537
        %2706 = vmatmul.mubr.bf16.gmra.mxu0 %v2536
        %v2707 = vpop.f32.mrf.mxu0
        %v2708 = vadd.f32 %v2575, %v2707
        %v2709 = vpop.f32.mrf.mxu0
        %v2710 = vpop.f32.mrf.mxu0
        %v2711 = vpop.f32.mrf.mxu0
        %2712 = vdwg.mxu0
        %v2713 = vadd.f32 %v2383, %v2708
        %v2714 = vld [vmem:[%s10 + $0x2] sm:$0x1]
        %v2715 = vld [vmem:[%s11 + $0x2] sm:$0x1]
        %2716 = vadd.xlane.f32.xlu0 %v2713
        %v2717 = vpop.xlane.xlu0 %2716
        %v2718 = vmul.f32 %v2717, %v1532
        %v2719 = vsub.f32 %v2713, %v2718
        %v2720 = vmul.f32 %v2719, %v2719
        %2721 = vadd.xlane.f32.xlu0 %v2720
        %v2722 = vpop.xlane.xlu0 %2721
        %v2723 = vmul.f32 %v2722, %v1532
        %v2724 = vadd.f32 %v2723, 1e-05
        %v2725 = vrsqrt.pop %v2724
        %v2726 = vmul.f32 %v2719, %v2725
        %v2727 = vlaneseq
        %v2728 = vshrl.u32 %v2727, 7
        %v2729 = vsub.s32 0, %v2728
        %v2730 = vrot.slane %v2714, %v2729
        %v2731 = vmul.f32 %v2726, %v2730
        %v2732 = vlaneseq
        %v2733 = vshrl.u32 %v2732, 7
        %v2734 = vsub.s32 0, %v2733
        %v2735 = vrot.slane %v2715, %v2734
        %v2736 = vadd.f32 %v2731, %v2735
        %2737 = vst [vmem:[%s701] sm:$0xff] %v2736
        %s2738 = sand.u32 %s382, 1
        %s2739 = scalar_lea.sflag [#allocation6], %s2738
        %s2740 = sand.u32 %s382, 1
        %s2741 = smul.addr %s2740, 8
        %s2742 = scalar_lea.vmem [#allocation22], %s2741
        // Predicated region
        $region125: #{tpu_custom_call.1} parent=79 // pred_check
          %p2743 = pneg %p392
        $region126: #{tpu_custom_call.1} parent=79 // pred_check_branch
          %2745 = sbr.rel (%p2743) target = $region128
        $region127: #{tpu_custom_call.1} parent=79 // pred_region
          %s2747 = ssub.s32 128, 128
          %2748 = vsyncadd %s2739, %s2747
          %s2749 = smul.addr %s44, 128
          %s2750 = scalar_lea.hbm %s16, %s2749
          %s2752 = sshll.u32 %s2742, 4
          %s2753 = int_to_ptr.vmem [resolvable:$true] %s2752
          %2755 = dma.vmem_to_hbm [thread:$0]  %s2753, 128, %s2750, %s2739
        $region128: #{tpu_custom_call.1} parent=79 // pred_fallthru
          _
      $region80: #{tpu_custom_call.1} parent=5 // pred_fallthru
        _
      %p2756 = scmp.le.s32.totalorder 2, %s39
      // Predicated region
      $region129: #{tpu_custom_call.1} parent=5 // pred_check
        %p2757 = pneg %p2756
      $region130: #{tpu_custom_call.1} parent=5 // pred_check_branch
        %2759 = sbr.rel (%p2757) target = $region132
      $region131: #{tpu_custom_call.1} parent=5 // pred_region
        %s2760 = ssub.s32 %s39, 2
        // Predicated region
        $region133: #{tpu_custom_call.1} parent=131 // pred_check
          %p2761 = pneg %p398
        $region134: #{tpu_custom_call.1} parent=131 // pred_check_branch
          %2763 = sbr.rel (%p2761) target = $region136
        $region135: #{tpu_custom_call.1} parent=131 // pred_region
          %s2764 = sand.u32 %s383, 1
          %s2765 = scalar_lea.sflag [#allocation6], %s2764
          %s2766 = sand.u32 %s383, 1
          %s2767 = smul.addr %s2766, 8
          %s2768 = scalar_lea.vmem [#allocation22], %s2767
          %2769 = dma.done %s2765, 128
        $region136: #{tpu_custom_call.1} parent=131 // pred_fallthru
          _
      $region132: #{tpu_custom_call.1} parent=5 // pred_fallthru
        _
    $region6: #{tpu_custom_call.1} parent=1 // loop_footer
      %s43 = sadd.s32 1, %s39
    $region7: #{tpu_custom_call.1} parent=1 // loop_footer_branch
      %38 = sbr.rel target = $region3
    $region8: #{tpu_custom_call.1} parent=1 // loop_exit
      _
    %2770 = vsyncpa [#allocation5], 1
    %s2771 = scalar_lea.sflag [#allocation5], 1
    %2772 = vsyncpa %s2771, 1
    %2773 = vsyncpa [#allocation8], 1
    %s2774 = scalar_lea.sflag [#allocation8], 1
    %2775 = vsyncpa %s2774, 1
    %2776 = vsyncpa [#allocation11], 1
    %2777 = vsyncpa [#allocation14], 1
    %2778 = vsyncpa [#allocation17], 1
    %2779 = vsyncpa [#allocation20], 1
    %2780 = vsyncpa [#allocation6], 1
    %s2781 = scalar_lea.sflag [#allocation6], 1
    %2782 = vsyncpa %s2781, 1

</llo_original>
